<compile_context>
chip_gen: v5e
topology: v5e:2x2
jax: 0.10.0
libtpu: 0.0.40
codegen_flags: <defaults>
</compile_context>

<pallas_src>
import jax
import jax.numpy as jnp
import numpy as np
from jax.experimental import pallas as pl
from jax.experimental.pallas import tpu as pltpu

CP = 128      # lane-dense padded channel width throughout the conv stack
FCW = 128     # fc lane width (fc1 out = 128; fc2/fc3 zero-padded to 128 cols)
C_LAST = 64   # true channel count feeding flatten/fc1


# ----------------------------------------------------------------------------
# Static network plan (shared by kernel, packer, init and reference)
# ----------------------------------------------------------------------------
def make_stages(c_in, l_in):
    stages = []
    stages.append(("res", l_in, [(3, c_in, 32), (3, 32, 32), (3, 32, 32)], (1, c_in, 32)))
    stages.append(("res", l_in, [(3, 32, 64), (3, 64, 64), (3, 64, 64)], (1, 32, 64)))
    stages.append(("pool", l_in))
    l2 = l_in // 2
    stages.append(("res", l2, [(5, 64, 64)] * 3, None))
    stages.append(("res", l2, [(5, 64, 64)] * 3, None))
    stages.append(("pool", l2))
    return stages


def build_plan(stages):
    plan, w_off, bias, idx = [], 0, 0, 0
    for st in stages:
        if st[0] == "pool":
            plan.append(("pool", st[1]))
            continue
        _, length, conv_defs, sc_def = st
        convs = []
        for (k, cin, cout) in conv_defs:
            convs.append(dict(w_off=w_off, k=k, cin=cin, cout=cout, bias=bias, idx=idx))
            w_off += k * CP; bias += 1; idx += 1
        sc = None
        if sc_def is not None:
            k, cin, cout = sc_def
            sc = dict(w_off=w_off, k=k, cin=cin, cout=cout, bias=bias, idx=idx)
            w_off += k * CP; bias += 1; idx += 1
        plan.append(("res", length, convs, sc))
    return plan, w_off, bias          # (plan, conv weight rows, conv bias count)


# ----------------------------------------------------------------------------
# Pallas kernel (single grid point, everything in VMEM)
# ----------------------------------------------------------------------------
def make_kernel(plan, batch, l4, fc_off, fc_bias0):
    fc1_off = fc_off
    fc2_off = fc1_off + l4 * CP
    fc3_off = fc2_off + FCW

    def kernel(x_ref, w_ref, b_ref, o_ref):
        def bias_row(i):
            return b_ref[i:i + 1, :]                               # (1, CP) f32

        def mxu(lhs_bf16, off, rows):
            # bf16 x bf16 -> f32 accumulate on the MXU
            return jnp.dot(lhs_bf16, w_ref[off:off + rows, :],
                           preferred_element_type=jnp.float32)

        def shift_rows(h2, d):
            # out[r] = h2[r + d]; out-of-range rows zero-filled (masked anyway)
            rows, width = h2.shape
            zeros = jnp.zeros((abs(d), width), h2.dtype)
            if d > 0:
                return jnp.concatenate([h2[d:, :], zeros], axis=0)
            return jnp.concatenate([zeros, h2[:rows + d, :]], axis=0)

        def im2col(h2, length, k):
            # h2: (batch*length, CP) f32 -> (batch*length, k*CP) bf16 shifted windows
            if k == 1:
                return h2.astype(jnp.bfloat16)
            rows, pad = h2.shape[0], (k - 1) // 2
            l_idx = jax.lax.broadcasted_iota(jnp.int32, (rows, CP), 0) % length
            taps = []
            for t in range(k):
                d = t - pad
                if d == 0:
                    taps.append(h2)
                else:
                    valid = jnp.logical_and(l_idx + d >= 0, l_idx + d < length)
                    taps.append(jnp.where(valid, shift_rows(h2, d), 0.0))
            return jnp.concatenate(taps, axis=1).astype(jnp.bfloat16)

        def conv(hin, length, c):
            lhs = im2col(hin, length, c["k"])
            return mxu(lhs, c["w_off"], c["k"] * CP) + bias_row(c["bias"])

        h = x_ref[...]                                              # (batch*L0, CP) f32
        for step in plan:
            if step[0] == "pool":
                rows = batch * step[1]
                h = jnp.max(h.reshape(rows // 2, 2, CP), axis=1)
            else:
                _, length, convs, sc = step
                out = h
                for c in convs:
                    out = jnp.maximum(conv(out, length, c), 0.0)
                h = out + (h if sc is None else conv(h, length, sc))

        # flatten + FC head (dropout == identity, eval semantics)
        h3d = h.reshape(batch, l4, CP)
        hf = jnp.concatenate([h3d[:, l, :] for l in range(l4)],
                             axis=1).astype(jnp.bfloat16)          # (B, l4*CP)
        h1 = jnp.maximum(mxu(hf, fc1_off, l4 * CP) + bias_row(fc_bias0), 0.0)
        h2 = jnp.maximum(mxu(h1.astype(jnp.bfloat16), fc2_off, FCW)
                         + bias_row(fc_bias0 + 1), 0.0)
        h3 = jnp.maximum(mxu(h2.astype(jnp.bfloat16), fc3_off, FCW)
                         + bias_row(fc_bias0 + 2), 0.0)
        o_ref[...] = h3                                             # lane-dense (B, 128)

    return kernel


def stacked_resconv1d_forward(x, wslab, bias, plan, n_conv_w_rows, n_conv_bias, n_out):
    b, c_in, l0 = x.shape
    l4 = l0 // 4
    # layout plumbing in the wrapper: (B, C, L) -> (B*L, CP) channel-last, lane-padded
    x2 = jnp.transpose(x, (0, 2, 1)).reshape(b * l0, c_in)
    x2 = jnp.pad(x2, ((0, 0), (0, CP - c_in)))

    # true (unpadded) work so XLA can schedule around this tiny latency-bound call
    flops = 0
    for step in plan:
        if step[0] != "res":
            continue
        _, length, convs, sc = step
        for c in convs + ([sc] if sc is not None else []):
            flops += 2 * b * length * c["k"] * c["cin"] * c["cout"]
    flops += 2 * b * (C_LAST * l4 * FCW + FCW * 64 + 64 * n_out)
    bytes_accessed = int(x2.size) * 4 + int(wslab.size) * 2 + int(bias.size) * 4 + b * FCW * 4

    vmem = pl.BlockSpec(memory_space=pltpu.MemorySpace.VMEM)
    out = pl.pallas_call(
        make_kernel(plan, b, l4, n_conv_w_rows, n_conv_bias),
        out_shape=jax.ShapeDtypeStruct((b, FCW), jnp.float32),
        in_specs=[vmem, vmem, vmem],
        out_specs=vmem,
        cost_estimate=pl.CostEstimate(flops=int(flops), transcendentals=0,
                                      bytes_accessed=int(bytes_accessed)),
    )(x2, wslab, bias)
    return out[:, :n_out]


# ----------------------------------------------------------------------------
# Parameter init, packing, and pure-JAX reference (PyTorch semantics, NCL layout)
# ----------------------------------------------------------------------------
def init_params(key, plan, l0, n_out):
    params = {"convs": []}
    keys = iter(jax.random.split(key, 64))

    def rnd(shape, fan):
        return (1.0 / np.sqrt(fan)) * jax.random.normal(next(keys), shape, jnp.float32)

    for step in plan:
        if step[0] != "res":
            continue
        _, _, convs, sc = step
        for c in convs + ([sc] if sc is not None else []):
            w = rnd((c["cout"], c["cin"], c["k"]), c["cin"] * c["k"])
            bb = 0.02 * jax.random.normal(next(keys), (c["cout"],), jnp.float32)
            params["convs"].append({"w": w, "b": bb})
    l4 = l0 // 4
    params["fc1_w"] = rnd((C_LAST * l4, FCW), C_LAST * l4)
    params["fc1_b"] = 0.02 * jax.random.normal(next(keys), (FCW,), jnp.float32)
    params["fc2_w"] = rnd((FCW, 64), FCW)
    params["fc2_b"] = 0.02 * jax.random.normal(next(keys), (64,), jnp.float32)
    params["fc3_w"] = rnd((64, n_out), 64)
    params["fc3_b"] = 0.02 * jax.random.normal(next(keys), (n_out,), jnp.float32)

    # Weights are defined as bf16-representable values (the kernel feeds bf16 operands to
    # the MXU); the f32 reference uses the same rounded weights, so the parity check only
    # measures activation rounding + accumulation-order differences.
    def bf16_round(a):
        return a.astype(jnp.bfloat16).astype(jnp.float32)
    for c in params["convs"]:
        c["w"] = bf16_round(c["w"])
    for name in ("fc1_w", "fc2_w", "fc3_w"):
        params[name] = bf16_round(params[name])
    return params


def pack_params(params, plan, n_conv_w_rows, n_conv_bias, l0, n_out):
    l4 = l0 // 4
    fc1_off = n_conv_w_rows
    fc2_off = fc1_off + l4 * CP
    fc3_off = fc2_off + FCW
    n_rows = fc3_off + FCW
    wslab = np.zeros((n_rows, FCW), np.float32)
    n_bias_pad = -(-(n_conv_bias + 3) // 8) * 8
    bias = np.zeros((n_bias_pad, CP), np.float32)

    for step in plan:
        if step[0] != "res":
            continue
        _, _, convs, sc = step
        for c in convs + ([sc] if sc is not None else []):
            w = np.asarray(params["convs"][c["idx"]]["w"])       # (cout, cin, k)
            bb = np.asarray(params["convs"][c["idx"]]["b"])
            for t in range(c["k"]):
                r0 = c["w_off"] + t * CP
                wslab[r0:r0 + c["cin"], :c["cout"]] = w[:, :, t].T
            bias[c["bias"], :c["cout"]] = bb

    # fc1: permute PyTorch flatten order (c*l4 + l) -> kernel order (l*CP + c), pad c to CP
    w1 = np.asarray(params["fc1_w"]).reshape(C_LAST, l4, FCW)    # [c, l, :]
    w1p = np.zeros((l4, CP, FCW), np.float32)
    w1p[:, :C_LAST, :] = np.transpose(w1, (1, 0, 2))             # [l, c, :]
    wslab[fc1_off:fc2_off, :] = w1p.reshape(l4 * CP, FCW)
    wslab[fc2_off:fc2_off + FCW, :64] = np.asarray(params["fc2_w"])
    wslab[fc3_off:fc3_off + 64, :n_out] = np.asarray(params["fc3_w"])
    bias[n_conv_bias, :FCW] = np.asarray(params["fc1_b"])
    bias[n_conv_bias + 1, :64] = np.asarray(params["fc2_b"])
    bias[n_conv_bias + 2, :n_out] = np.asarray(params["fc3_b"])
    # weights already bf16-representable -> this cast is lossless
    return jnp.asarray(wslab).astype(jnp.bfloat16), jnp.asarray(bias)


def conv1d_ref(x, w, b, pad):
    # x: (B, Cin, L), w: (Cout, Cin, k), b: (Cout,)  — PyTorch Conv1d semantics
    length = x.shape[2]
    k = w.shape[2]
    xp = jnp.pad(x, ((0, 0), (0, 0), (pad, pad)))
    wins = jnp.stack([xp[:, :, t:t + length] for t in range(k)], axis=-1)   # (B,Cin,L,k)
    return (jnp.einsum("oct,bclt->bol", w, wins,
                       precision=jax.lax.Precision.HIGHEST) + b[None, :, None])


def reference_forward(x, params, plan):
    hp = jax.lax.Precision.HIGHEST
    h = x
    for step in plan:
        if step[0] == "pool":
            bb, cc, ll = h.shape
            h = h.reshape(bb, cc, ll // 2, 2).max(axis=-1)
        else:
            _, _, convs, sc = step
            out = h
            for c in convs:
                pr = params["convs"][c["idx"]]
                out = jax.nn.relu(conv1d_ref(out, pr["w"], pr["b"], (c["k"] - 1) // 2))
            if sc is None:
                short = h
            else:
                pr = params["convs"][sc["idx"]]
                short = conv1d_ref(h, pr["w"], pr["b"], 0)
            h = out + short
    flat = h.reshape(h.shape[0], -1)                  # PyTorch flatten(start_dim=1)
    h1 = jax.nn.relu(jnp.matmul(flat, params["fc1_w"], precision=hp) + params["fc1_b"])
    h2 = jax.nn.relu(jnp.matmul(h1, params["fc2_w"], precision=hp) + params["fc2_b"])
    h3 = jax.nn.relu(jnp.matmul(h2, params["fc3_w"], precision=hp) + params["fc3_b"])
    return h3


if __name__ == "__main__":
    B, C_IN, L_IN, N_OUT = 2, 4, 16, 8       # input_size=16, input_channels=4, output_size=8

    stages = make_stages(C_IN, L_IN)
    plan, n_conv_w_rows, n_conv_bias = build_plan(stages)

    key = jax.random.PRNGKey(0)
    kx, kp = jax.random.split(key)
    x = jax.random.normal(kx, (B, C_IN, L_IN), jnp.float32)
    params = init_params(kp, plan, L_IN, N_OUT)
    wslab, bias = pack_params(params, plan, n_conv_w_rows, n_conv_bias, L_IN, N_OUT)

    out = stacked_resconv1d_forward(x, wslab, bias, plan, n_conv_w_rows, n_conv_bias, N_OUT)
    out = jax.block_until_ready(out)

    ref = reference_forward(x, params, plan)
    # kernel uses bf16 MXU operands with f32 accumulation -> loosened parity tolerance
    np.testing.assert_allclose(np.asarray(out), np.asarray(ref), rtol=5e-2, atol=5e-2)

    print("KERNEL_OK")
</pallas_src>

<mosaic_0001>
module attributes {stable_mosaic.version = 11 : i64} {
  func.func @kernel(%arg0: memref<32x128xf32, #tpu.memory_space<vmem>>, %arg1: memref<7168x128xbf16, #tpu.memory_space<vmem>>, %arg2: memref<24x128xf32, #tpu.memory_space<vmem>>, %arg3: memref<2x128xf32, #tpu.memory_space<vmem>>) attributes {dimension_semantics = [], scalar_prefetch = 0 : i64, scratch_operands = 0 : i64, tpu.core_type = #tpu.core_type<tc>} {
    %c0 = arith.constant 0 : index
    %c0_0 = arith.constant 0 : index
    %0 = vector.load %arg0[%c0, %c0_0] : memref<32x128xf32, #tpu.memory_space<vmem>>, vector<32x128xf32>
    %1 = tpu.iota {dimensions = array<i32: 0>} : vector<32x128xi32>
    %c16_i32 = arith.constant 16 : i32
    %c0_i32 = arith.constant 0 : i32
    %2 = arith.cmpi eq, %c16_i32, %c0_i32 : i32
    %c1_i32 = arith.constant 1 : i32
    %3 = arith.select %2, %c1_i32, %c16_i32 : i32
    %4 = vector.broadcast %3 : i32 to vector<32x128xi32>
    %5 = arith.remsi %1, %4 : vector<32x128xi32>
    %c0_i32_1 = arith.constant 0 : i32
    %6 = vector.broadcast %c0_i32_1 : i32 to vector<32x128xi32>
    %7 = arith.cmpi ne, %5, %6 : vector<32x128xi32>
    %c0_i32_2 = arith.constant 0 : i32
    %8 = vector.broadcast %c0_i32_2 : i32 to vector<32x128xi32>
    %9 = arith.cmpi slt, %5, %8 : vector<32x128xi32>
    %c0_i32_3 = arith.constant 0 : i32
    %10 = arith.cmpi slt, %3, %c0_i32_3 : i32
    %11 = vector.broadcast %10 : i1 to vector<32x128xi1>
    %12 = vector.broadcast %11 : vector<32x128xi1> to vector<32x128xi1>
    %13 = arith.xori %9, %12 : vector<32x128xi1>
    %14 = arith.andi %13, %7 : vector<32x128xi1>
    %15 = vector.broadcast %3 : i32 to vector<32x128xi32>
    %16 = arith.addi %5, %15 : vector<32x128xi32>
    %17 = arith.select %14, %16, %5 : vector<32x128xi1>, vector<32x128xi32>
    %c-1_i32 = arith.constant -1 : i32
    %18 = vector.broadcast %c-1_i32 : i32 to vector<32x128xi32>
    %19 = arith.addi %17, %18 : vector<32x128xi32>
    %c0_i32_4 = arith.constant 0 : i32
    %20 = vector.broadcast %c0_i32_4 : i32 to vector<32x128xi32>
    %21 = arith.cmpi sge, %19, %20 : vector<32x128xi32>
    %c-1_i32_5 = arith.constant -1 : i32
    %22 = vector.broadcast %c-1_i32_5 : i32 to vector<32x128xi32>
    %23 = arith.addi %17, %22 : vector<32x128xi32>
    %c16_i32_6 = arith.constant 16 : i32
    %24 = vector.broadcast %c16_i32_6 : i32 to vector<32x128xi32>
    %25 = arith.cmpi slt, %23, %24 : vector<32x128xi32>
    %26 = arith.andi %21, %25 : vector<32x128xi1>
    %cst = arith.constant 0.000000e+00 : f32
    %27 = vector.broadcast %cst : f32 to vector<1x128xf32>
    %28 = vector.extract_strided_slice %0 {offsets = [0, 0], sizes = [31, 128], strides = [1, 1]} : vector<32x128xf32> to vector<31x128xf32>
    %29 = tpu.concatenate %27, %28 in 0 : vector<1x128xf32>, vector<31x128xf32> -> vector<32x128xf32>
    %cst_7 = arith.constant 0.000000e+00 : f32
    %30 = vector.broadcast %cst_7 : f32 to vector<32x128xf32>
    %31 = arith.select %26, %29, %30 : vector<32x128xi1>, vector<32x128xf32>
    %c1_i32_8 = arith.constant 1 : i32
    %32 = vector.broadcast %c1_i32_8 : i32 to vector<32x128xi32>
    %33 = arith.addi %17, %32 : vector<32x128xi32>
    %c0_i32_9 = arith.constant 0 : i32
    %34 = vector.broadcast %c0_i32_9 : i32 to vector<32x128xi32>
    %35 = arith.cmpi sge, %33, %34 : vector<32x128xi32>
    %c1_i32_10 = arith.constant 1 : i32
    %36 = vector.broadcast %c1_i32_10 : i32 to vector<32x128xi32>
    %37 = arith.addi %17, %36 : vector<32x128xi32>
    %c16_i32_11 = arith.constant 16 : i32
    %38 = vector.broadcast %c16_i32_11 : i32 to vector<32x128xi32>
    %39 = arith.cmpi slt, %37, %38 : vector<32x128xi32>
    %40 = arith.andi %35, %39 : vector<32x128xi1>
    %cst_12 = arith.constant 0.000000e+00 : f32
    %41 = vector.broadcast %cst_12 : f32 to vector<1x128xf32>
    %42 = vector.extract_strided_slice %0 {offsets = [1, 0], sizes = [31, 128], strides = [1, 1]} : vector<32x128xf32> to vector<31x128xf32>
    %43 = tpu.concatenate %42, %41 in 0 : vector<31x128xf32>, vector<1x128xf32> -> vector<32x128xf32>
    %cst_13 = arith.constant 0.000000e+00 : f32
    %44 = vector.broadcast %cst_13 : f32 to vector<32x128xf32>
    %45 = arith.select %40, %43, %44 : vector<32x128xi1>, vector<32x128xf32>
    %46 = tpu.concatenate %31, %0, %45 in 1 : vector<32x128xf32>, vector<32x128xf32>, vector<32x128xf32> -> vector<32x384xf32>
    %47 = arith.truncf %46 : vector<32x384xf32> to vector<32x384xbf16>
    %c0_14 = arith.constant 0 : index
    %c0_15 = arith.constant 0 : index
    %48 = vector.load %arg1[%c0_14, %c0_15] : memref<7168x128xbf16, #tpu.memory_space<vmem>>, vector<384x128xbf16>
    %cst_16 = arith.constant dense<0.000000e+00> : vector<32x128xf32>
    %49 = tpu.matmul %47, %48, %cst_16 {dimension_numbers = #tpu.dot_dimension_numbers<[1], [0], [0], [1], [0, 0, 1, 1], [], []>} : vector<32x384xbf16>, vector<384x128xbf16>, vector<32x128xf32> -> vector<32x128xf32>
    %c0_17 = arith.constant 0 : index
    %c0_18 = arith.constant 0 : index
    %50 = vector.load %arg2[%c0_17, %c0_18] : memref<24x128xf32, #tpu.memory_space<vmem>>, vector<1x128xf32>
    %51 = vector.broadcast %50 : vector<1x128xf32> to vector<32x128xf32>
    %52 = arith.addf %49, %51 : vector<32x128xf32>
    %cst_19 = arith.constant 0.000000e+00 : f32
    %53 = vector.broadcast %cst_19 : f32 to vector<32x128xf32>
    %54 = arith.maximumf %52, %53 : vector<32x128xf32>
    %55 = tpu.iota {dimensions = array<i32: 0>} : vector<32x128xi32>
    %c16_i32_20 = arith.constant 16 : i32
    %c0_i32_21 = arith.constant 0 : i32
    %56 = arith.cmpi eq, %c16_i32_20, %c0_i32_21 : i32
    %c1_i32_22 = arith.constant 1 : i32
    %57 = arith.select %56, %c1_i32_22, %c16_i32_20 : i32
    %58 = vector.broadcast %57 : i32 to vector<32x128xi32>
    %59 = arith.remsi %55, %58 : vector<32x128xi32>
    %c0_i32_23 = arith.constant 0 : i32
    %60 = vector.broadcast %c0_i32_23 : i32 to vector<32x128xi32>
    %61 = arith.cmpi ne, %59, %60 : vector<32x128xi32>
    %c0_i32_24 = arith.constant 0 : i32
    %62 = vector.broadcast %c0_i32_24 : i32 to vector<32x128xi32>
    %63 = arith.cmpi slt, %59, %62 : vector<32x128xi32>
    %c0_i32_25 = arith.constant 0 : i32
    %64 = arith.cmpi slt, %57, %c0_i32_25 : i32
    %65 = vector.broadcast %64 : i1 to vector<32x128xi1>
    %66 = vector.broadcast %65 : vector<32x128xi1> to vector<32x128xi1>
    %67 = arith.xori %63, %66 : vector<32x128xi1>
    %68 = arith.andi %67, %61 : vector<32x128xi1>
    %69 = vector.broadcast %57 : i32 to vector<32x128xi32>
    %70 = arith.addi %59, %69 : vector<32x128xi32>
    %71 = arith.select %68, %70, %59 : vector<32x128xi1>, vector<32x128xi32>
    %c-1_i32_26 = arith.constant -1 : i32
    %72 = vector.broadcast %c-1_i32_26 : i32 to vector<32x128xi32>
    %73 = arith.addi %71, %72 : vector<32x128xi32>
    %c0_i32_27 = arith.constant 0 : i32
    %74 = vector.broadcast %c0_i32_27 : i32 to vector<32x128xi32>
    %75 = arith.cmpi sge, %73, %74 : vector<32x128xi32>
    %c-1_i32_28 = arith.constant -1 : i32
    %76 = vector.broadcast %c-1_i32_28 : i32 to vector<32x128xi32>
    %77 = arith.addi %71, %76 : vector<32x128xi32>
    %c16_i32_29 = arith.constant 16 : i32
    %78 = vector.broadcast %c16_i32_29 : i32 to vector<32x128xi32>
    %79 = arith.cmpi slt, %77, %78 : vector<32x128xi32>
    %80 = arith.andi %75, %79 : vector<32x128xi1>
    %cst_30 = arith.constant 0.000000e+00 : f32
    %81 = vector.broadcast %cst_30 : f32 to vector<1x128xf32>
    %82 = vector.extract_strided_slice %54 {offsets = [0, 0], sizes = [31, 128], strides = [1, 1]} : vector<32x128xf32> to vector<31x128xf32>
    %83 = tpu.concatenate %81, %82 in 0 : vector<1x128xf32>, vector<31x128xf32> -> vector<32x128xf32>
    %cst_31 = arith.constant 0.000000e+00 : f32
    %84 = vector.broadcast %cst_31 : f32 to vector<32x128xf32>
    %85 = arith.select %80, %83, %84 : vector<32x128xi1>, vector<32x128xf32>
    %c1_i32_32 = arith.constant 1 : i32
    %86 = vector.broadcast %c1_i32_32 : i32 to vector<32x128xi32>
    %87 = arith.addi %71, %86 : vector<32x128xi32>
    %c0_i32_33 = arith.constant 0 : i32
    %88 = vector.broadcast %c0_i32_33 : i32 to vector<32x128xi32>
    %89 = arith.cmpi sge, %87, %88 : vector<32x128xi32>
    %c1_i32_34 = arith.constant 1 : i32
    %90 = vector.broadcast %c1_i32_34 : i32 to vector<32x128xi32>
    %91 = arith.addi %71, %90 : vector<32x128xi32>
    %c16_i32_35 = arith.constant 16 : i32
    %92 = vector.broadcast %c16_i32_35 : i32 to vector<32x128xi32>
    %93 = arith.cmpi slt, %91, %92 : vector<32x128xi32>
    %94 = arith.andi %89, %93 : vector<32x128xi1>
    %cst_36 = arith.constant 0.000000e+00 : f32
    %95 = vector.broadcast %cst_36 : f32 to vector<1x128xf32>
    %96 = vector.extract_strided_slice %54 {offsets = [1, 0], sizes = [31, 128], strides = [1, 1]} : vector<32x128xf32> to vector<31x128xf32>
    %97 = tpu.concatenate %96, %95 in 0 : vector<31x128xf32>, vector<1x128xf32> -> vector<32x128xf32>
    %cst_37 = arith.constant 0.000000e+00 : f32
    %98 = vector.broadcast %cst_37 : f32 to vector<32x128xf32>
    %99 = arith.select %94, %97, %98 : vector<32x128xi1>, vector<32x128xf32>
    %100 = tpu.concatenate %85, %54, %99 in 1 : vector<32x128xf32>, vector<32x128xf32>, vector<32x128xf32> -> vector<32x384xf32>
    %101 = arith.truncf %100 : vector<32x384xf32> to vector<32x384xbf16>
    %c384 = arith.constant 384 : index
    %c0_38 = arith.constant 0 : index
    %102 = vector.load %arg1[%c384, %c0_38] : memref<7168x128xbf16, #tpu.memory_space<vmem>>, vector<384x128xbf16>
    %cst_39 = arith.constant dense<0.000000e+00> : vector<32x128xf32>
    %103 = tpu.matmul %101, %102, %cst_39 {dimension_numbers = #tpu.dot_dimension_numbers<[1], [0], [0], [1], [0, 0, 1, 1], [], []>} : vector<32x384xbf16>, vector<384x128xbf16>, vector<32x128xf32> -> vector<32x128xf32>
    %c1 = arith.constant 1 : index
    %c0_40 = arith.constant 0 : index
    %104 = vector.load %arg2[%c1, %c0_40] : memref<24x128xf32, #tpu.memory_space<vmem>>, vector<1x128xf32>
    %105 = vector.broadcast %104 : vector<1x128xf32> to vector<32x128xf32>
    %106 = arith.addf %103, %105 : vector<32x128xf32>
    %cst_41 = arith.constant 0.000000e+00 : f32
    %107 = vector.broadcast %cst_41 : f32 to vector<32x128xf32>
    %108 = arith.maximumf %106, %107 : vector<32x128xf32>
    %109 = tpu.iota {dimensions = array<i32: 0>} : vector<32x128xi32>
    %c16_i32_42 = arith.constant 16 : i32
    %c0_i32_43 = arith.constant 0 : i32
    %110 = arith.cmpi eq, %c16_i32_42, %c0_i32_43 : i32
    %c1_i32_44 = arith.constant 1 : i32
    %111 = arith.select %110, %c1_i32_44, %c16_i32_42 : i32
    %112 = vector.broadcast %111 : i32 to vector<32x128xi32>
    %113 = arith.remsi %109, %112 : vector<32x128xi32>
    %c0_i32_45 = arith.constant 0 : i32
    %114 = vector.broadcast %c0_i32_45 : i32 to vector<32x128xi32>
    %115 = arith.cmpi ne, %113, %114 : vector<32x128xi32>
    %c0_i32_46 = arith.constant 0 : i32
    %116 = vector.broadcast %c0_i32_46 : i32 to vector<32x128xi32>
    %117 = arith.cmpi slt, %113, %116 : vector<32x128xi32>
    %c0_i32_47 = arith.constant 0 : i32
    %118 = arith.cmpi slt, %111, %c0_i32_47 : i32
    %119 = vector.broadcast %118 : i1 to vector<32x128xi1>
    %120 = vector.broadcast %119 : vector<32x128xi1> to vector<32x128xi1>
    %121 = arith.xori %117, %120 : vector<32x128xi1>
    %122 = arith.andi %121, %115 : vector<32x128xi1>
    %123 = vector.broadcast %111 : i32 to vector<32x128xi32>
    %124 = arith.addi %113, %123 : vector<32x128xi32>
    %125 = arith.select %122, %124, %113 : vector<32x128xi1>, vector<32x128xi32>
    %c-1_i32_48 = arith.constant -1 : i32
    %126 = vector.broadcast %c-1_i32_48 : i32 to vector<32x128xi32>
    %127 = arith.addi %125, %126 : vector<32x128xi32>
    %c0_i32_49 = arith.constant 0 : i32
    %128 = vector.broadcast %c0_i32_49 : i32 to vector<32x128xi32>
    %129 = arith.cmpi sge, %127, %128 : vector<32x128xi32>
    %c-1_i32_50 = arith.constant -1 : i32
    %130 = vector.broadcast %c-1_i32_50 : i32 to vector<32x128xi32>
    %131 = arith.addi %125, %130 : vector<32x128xi32>
    %c16_i32_51 = arith.constant 16 : i32
    %132 = vector.broadcast %c16_i32_51 : i32 to vector<32x128xi32>
    %133 = arith.cmpi slt, %131, %132 : vector<32x128xi32>
    %134 = arith.andi %129, %133 : vector<32x128xi1>
    %cst_52 = arith.constant 0.000000e+00 : f32
    %135 = vector.broadcast %cst_52 : f32 to vector<1x128xf32>
    %136 = vector.extract_strided_slice %108 {offsets = [0, 0], sizes = [31, 128], strides = [1, 1]} : vector<32x128xf32> to vector<31x128xf32>
    %137 = tpu.concatenate %135, %136 in 0 : vector<1x128xf32>, vector<31x128xf32> -> vector<32x128xf32>
    %cst_53 = arith.constant 0.000000e+00 : f32
    %138 = vector.broadcast %cst_53 : f32 to vector<32x128xf32>
    %139 = arith.select %134, %137, %138 : vector<32x128xi1>, vector<32x128xf32>
    %c1_i32_54 = arith.constant 1 : i32
    %140 = vector.broadcast %c1_i32_54 : i32 to vector<32x128xi32>
    %141 = arith.addi %125, %140 : vector<32x128xi32>
    %c0_i32_55 = arith.constant 0 : i32
    %142 = vector.broadcast %c0_i32_55 : i32 to vector<32x128xi32>
    %143 = arith.cmpi sge, %141, %142 : vector<32x128xi32>
    %c1_i32_56 = arith.constant 1 : i32
    %144 = vector.broadcast %c1_i32_56 : i32 to vector<32x128xi32>
    %145 = arith.addi %125, %144 : vector<32x128xi32>
    %c16_i32_57 = arith.constant 16 : i32
    %146 = vector.broadcast %c16_i32_57 : i32 to vector<32x128xi32>
    %147 = arith.cmpi slt, %145, %146 : vector<32x128xi32>
    %148 = arith.andi %143, %147 : vector<32x128xi1>
    %cst_58 = arith.constant 0.000000e+00 : f32
    %149 = vector.broadcast %cst_58 : f32 to vector<1x128xf32>
    %150 = vector.extract_strided_slice %108 {offsets = [1, 0], sizes = [31, 128], strides = [1, 1]} : vector<32x128xf32> to vector<31x128xf32>
    %151 = tpu.concatenate %150, %149 in 0 : vector<31x128xf32>, vector<1x128xf32> -> vector<32x128xf32>
    %cst_59 = arith.constant 0.000000e+00 : f32
    %152 = vector.broadcast %cst_59 : f32 to vector<32x128xf32>
    %153 = arith.select %148, %151, %152 : vector<32x128xi1>, vector<32x128xf32>
    %154 = tpu.concatenate %139, %108, %153 in 1 : vector<32x128xf32>, vector<32x128xf32>, vector<32x128xf32> -> vector<32x384xf32>
    %155 = arith.truncf %154 : vector<32x384xf32> to vector<32x384xbf16>
    %c768 = arith.constant 768 : index
    %c0_60 = arith.constant 0 : index
    %156 = vector.load %arg1[%c768, %c0_60] : memref<7168x128xbf16, #tpu.memory_space<vmem>>, vector<384x128xbf16>
    %cst_61 = arith.constant dense<0.000000e+00> : vector<32x128xf32>
    %157 = tpu.matmul %155, %156, %cst_61 {dimension_numbers = #tpu.dot_dimension_numbers<[1], [0], [0], [1], [0, 0, 1, 1], [], []>} : vector<32x384xbf16>, vector<384x128xbf16>, vector<32x128xf32> -> vector<32x128xf32>
    %c2 = arith.constant 2 : index
    %c0_62 = arith.constant 0 : index
    %158 = vector.load %arg2[%c2, %c0_62] : memref<24x128xf32, #tpu.memory_space<vmem>>, vector<1x128xf32>
    %159 = vector.broadcast %158 : vector<1x128xf32> to vector<32x128xf32>
    %160 = arith.addf %157, %159 : vector<32x128xf32>
    %cst_63 = arith.constant 0.000000e+00 : f32
    %161 = vector.broadcast %cst_63 : f32 to vector<32x128xf32>
    %162 = arith.maximumf %160, %161 : vector<32x128xf32>
    %163 = arith.truncf %0 : vector<32x128xf32> to vector<32x128xbf16>
    %c1152 = arith.constant 1152 : index
    %c0_64 = arith.constant 0 : index
    %164 = vector.load %arg1[%c1152, %c0_64] : memref<7168x128xbf16, #tpu.memory_space<vmem>>, vector<128x128xbf16>
    %cst_65 = arith.constant dense<0.000000e+00> : vector<32x128xf32>
    %165 = tpu.matmul %163, %164, %cst_65 {dimension_numbers = #tpu.dot_dimension_numbers<[1], [0], [0], [1], [0, 0, 1, 1], [], []>} : vector<32x128xbf16>, vector<128x128xbf16>, vector<32x128xf32> -> vector<32x128xf32>
    %c3 = arith.constant 3 : index
    %c0_66 = arith.constant 0 : index
    %166 = vector.load %arg2[%c3, %c0_66] : memref<24x128xf32, #tpu.memory_space<vmem>>, vector<1x128xf32>
    %167 = vector.broadcast %166 : vector<1x128xf32> to vector<32x128xf32>
    %168 = arith.addf %165, %167 : vector<32x128xf32>
    %169 = arith.addf %162, %168 : vector<32x128xf32>
    %170 = tpu.iota {dimensions = array<i32: 0>} : vector<32x128xi32>
    %c16_i32_67 = arith.constant 16 : i32
    %c0_i32_68 = arith.constant 0 : i32
    %171 = arith.cmpi eq, %c16_i32_67, %c0_i32_68 : i32
    %c1_i32_69 = arith.constant 1 : i32
    %172 = arith.select %171, %c1_i32_69, %c16_i32_67 : i32
    %173 = vector.broadcast %172 : i32 to vector<32x128xi32>
    %174 = arith.remsi %170, %173 : vector<32x128xi32>
    %c0_i32_70 = arith.constant 0 : i32
    %175 = vector.broadcast %c0_i32_70 : i32 to vector<32x128xi32>
    %176 = arith.cmpi ne, %174, %175 : vector<32x128xi32>
    %c0_i32_71 = arith.constant 0 : i32
    %177 = vector.broadcast %c0_i32_71 : i32 to vector<32x128xi32>
    %178 = arith.cmpi slt, %174, %177 : vector<32x128xi32>
    %c0_i32_72 = arith.constant 0 : i32
    %179 = arith.cmpi slt, %172, %c0_i32_72 : i32
    %180 = vector.broadcast %179 : i1 to vector<32x128xi1>
    %181 = vector.broadcast %180 : vector<32x128xi1> to vector<32x128xi1>
    %182 = arith.xori %178, %181 : vector<32x128xi1>
    %183 = arith.andi %182, %176 : vector<32x128xi1>
    %184 = vector.broadcast %172 : i32 to vector<32x128xi32>
    %185 = arith.addi %174, %184 : vector<32x128xi32>
    %186 = arith.select %183, %185, %174 : vector<32x128xi1>, vector<32x128xi32>
    %c-1_i32_73 = arith.constant -1 : i32
    %187 = vector.broadcast %c-1_i32_73 : i32 to vector<32x128xi32>
    %188 = arith.addi %186, %187 : vector<32x128xi32>
    %c0_i32_74 = arith.constant 0 : i32
    %189 = vector.broadcast %c0_i32_74 : i32 to vector<32x128xi32>
    %190 = arith.cmpi sge, %188, %189 : vector<32x128xi32>
    %c-1_i32_75 = arith.constant -1 : i32
    %191 = vector.broadcast %c-1_i32_75 : i32 to vector<32x128xi32>
    %192 = arith.addi %186, %191 : vector<32x128xi32>
    %c16_i32_76 = arith.constant 16 : i32
    %193 = vector.broadcast %c16_i32_76 : i32 to vector<32x128xi32>
    %194 = arith.cmpi slt, %192, %193 : vector<32x128xi32>
    %195 = arith.andi %190, %194 : vector<32x128xi1>
    %cst_77 = arith.constant 0.000000e+00 : f32
    %196 = vector.broadcast %cst_77 : f32 to vector<1x128xf32>
    %197 = vector.extract_strided_slice %169 {offsets = [0, 0], sizes = [31, 128], strides = [1, 1]} : vector<32x128xf32> to vector<31x128xf32>
    %198 = tpu.concatenate %196, %197 in 0 : vector<1x128xf32>, vector<31x128xf32> -> vector<32x128xf32>
    %cst_78 = arith.constant 0.000000e+00 : f32
    %199 = vector.broadcast %cst_78 : f32 to vector<32x128xf32>
    %200 = arith.select %195, %198, %199 : vector<32x128xi1>, vector<32x128xf32>
    %c1_i32_79 = arith.constant 1 : i32
    %201 = vector.broadcast %c1_i32_79 : i32 to vector<32x128xi32>
    %202 = arith.addi %186, %201 : vector<32x128xi32>
    %c0_i32_80 = arith.constant 0 : i32
    %203 = vector.broadcast %c0_i32_80 : i32 to vector<32x128xi32>
    %204 = arith.cmpi sge, %202, %203 : vector<32x128xi32>
    %c1_i32_81 = arith.constant 1 : i32
    %205 = vector.broadcast %c1_i32_81 : i32 to vector<32x128xi32>
    %206 = arith.addi %186, %205 : vector<32x128xi32>
    %c16_i32_82 = arith.constant 16 : i32
    %207 = vector.broadcast %c16_i32_82 : i32 to vector<32x128xi32>
    %208 = arith.cmpi slt, %206, %207 : vector<32x128xi32>
    %209 = arith.andi %204, %208 : vector<32x128xi1>
    %cst_83 = arith.constant 0.000000e+00 : f32
    %210 = vector.broadcast %cst_83 : f32 to vector<1x128xf32>
    %211 = vector.extract_strided_slice %169 {offsets = [1, 0], sizes = [31, 128], strides = [1, 1]} : vector<32x128xf32> to vector<31x128xf32>
    %212 = tpu.concatenate %211, %210 in 0 : vector<31x128xf32>, vector<1x128xf32> -> vector<32x128xf32>
    %cst_84 = arith.constant 0.000000e+00 : f32
    %213 = vector.broadcast %cst_84 : f32 to vector<32x128xf32>
    %214 = arith.select %209, %212, %213 : vector<32x128xi1>, vector<32x128xf32>
    %215 = tpu.concatenate %200, %169, %214 in 1 : vector<32x128xf32>, vector<32x128xf32>, vector<32x128xf32> -> vector<32x384xf32>
    %216 = arith.truncf %215 : vector<32x384xf32> to vector<32x384xbf16>
    %c1280 = arith.constant 1280 : index
    %c0_85 = arith.constant 0 : index
    %217 = vector.load %arg1[%c1280, %c0_85] : memref<7168x128xbf16, #tpu.memory_space<vmem>>, vector<384x128xbf16>
    %cst_86 = arith.constant dense<0.000000e+00> : vector<32x128xf32>
    %218 = tpu.matmul %216, %217, %cst_86 {dimension_numbers = #tpu.dot_dimension_numbers<[1], [0], [0], [1], [0, 0, 1, 1], [], []>} : vector<32x384xbf16>, vector<384x128xbf16>, vector<32x128xf32> -> vector<32x128xf32>
    %c4 = arith.constant 4 : index
    %c0_87 = arith.constant 0 : index
    %219 = vector.load %arg2[%c4, %c0_87] : memref<24x128xf32, #tpu.memory_space<vmem>>, vector<1x128xf32>
    %220 = vector.broadcast %219 : vector<1x128xf32> to vector<32x128xf32>
    %221 = arith.addf %218, %220 : vector<32x128xf32>
    %cst_88 = arith.constant 0.000000e+00 : f32
    %222 = vector.broadcast %cst_88 : f32 to vector<32x128xf32>
    %223 = arith.maximumf %221, %222 : vector<32x128xf32>
    %224 = tpu.iota {dimensions = array<i32: 0>} : vector<32x128xi32>
    %c16_i32_89 = arith.constant 16 : i32
    %c0_i32_90 = arith.constant 0 : i32
    %225 = arith.cmpi eq, %c16_i32_89, %c0_i32_90 : i32
    %c1_i32_91 = arith.constant 1 : i32
    %226 = arith.select %225, %c1_i32_91, %c16_i32_89 : i32
    %227 = vector.broadcast %226 : i32 to vector<32x128xi32>
    %228 = arith.remsi %224, %227 : vector<32x128xi32>
    %c0_i32_92 = arith.constant 0 : i32
    %229 = vector.broadcast %c0_i32_92 : i32 to vector<32x128xi32>
    %230 = arith.cmpi ne, %228, %229 : vector<32x128xi32>
    %c0_i32_93 = arith.constant 0 : i32
    %231 = vector.broadcast %c0_i32_93 : i32 to vector<32x128xi32>
    %232 = arith.cmpi slt, %228, %231 : vector<32x128xi32>
    %c0_i32_94 = arith.constant 0 : i32
    %233 = arith.cmpi slt, %226, %c0_i32_94 : i32
    %234 = vector.broadcast %233 : i1 to vector<32x128xi1>
    %235 = vector.broadcast %234 : vector<32x128xi1> to vector<32x128xi1>
    %236 = arith.xori %232, %235 : vector<32x128xi1>
    %237 = arith.andi %236, %230 : vector<32x128xi1>
    %238 = vector.broadcast %226 : i32 to vector<32x128xi32>
    %239 = arith.addi %228, %238 : vector<32x128xi32>
    %240 = arith.select %237, %239, %228 : vector<32x128xi1>, vector<32x128xi32>
    %c-1_i32_95 = arith.constant -1 : i32
    %241 = vector.broadcast %c-1_i32_95 : i32 to vector<32x128xi32>
    %242 = arith.addi %240, %241 : vector<32x128xi32>
    %c0_i32_96 = arith.constant 0 : i32
    %243 = vector.broadcast %c0_i32_96 : i32 to vector<32x128xi32>
    %244 = arith.cmpi sge, %242, %243 : vector<32x128xi32>
    %c-1_i32_97 = arith.constant -1 : i32
    %245 = vector.broadcast %c-1_i32_97 : i32 to vector<32x128xi32>
    %246 = arith.addi %240, %245 : vector<32x128xi32>
    %c16_i32_98 = arith.constant 16 : i32
    %247 = vector.broadcast %c16_i32_98 : i32 to vector<32x128xi32>
    %248 = arith.cmpi slt, %246, %247 : vector<32x128xi32>
    %249 = arith.andi %244, %248 : vector<32x128xi1>
    %cst_99 = arith.constant 0.000000e+00 : f32
    %250 = vector.broadcast %cst_99 : f32 to vector<1x128xf32>
    %251 = vector.extract_strided_slice %223 {offsets = [0, 0], sizes = [31, 128], strides = [1, 1]} : vector<32x128xf32> to vector<31x128xf32>
    %252 = tpu.concatenate %250, %251 in 0 : vector<1x128xf32>, vector<31x128xf32> -> vector<32x128xf32>
    %cst_100 = arith.constant 0.000000e+00 : f32
    %253 = vector.broadcast %cst_100 : f32 to vector<32x128xf32>
    %254 = arith.select %249, %252, %253 : vector<32x128xi1>, vector<32x128xf32>
    %c1_i32_101 = arith.constant 1 : i32
    %255 = vector.broadcast %c1_i32_101 : i32 to vector<32x128xi32>
    %256 = arith.addi %240, %255 : vector<32x128xi32>
    %c0_i32_102 = arith.constant 0 : i32
    %257 = vector.broadcast %c0_i32_102 : i32 to vector<32x128xi32>
    %258 = arith.cmpi sge, %256, %257 : vector<32x128xi32>
    %c1_i32_103 = arith.constant 1 : i32
    %259 = vector.broadcast %c1_i32_103 : i32 to vector<32x128xi32>
    %260 = arith.addi %240, %259 : vector<32x128xi32>
    %c16_i32_104 = arith.constant 16 : i32
    %261 = vector.broadcast %c16_i32_104 : i32 to vector<32x128xi32>
    %262 = arith.cmpi slt, %260, %261 : vector<32x128xi32>
    %263 = arith.andi %258, %262 : vector<32x128xi1>
    %cst_105 = arith.constant 0.000000e+00 : f32
    %264 = vector.broadcast %cst_105 : f32 to vector<1x128xf32>
    %265 = vector.extract_strided_slice %223 {offsets = [1, 0], sizes = [31, 128], strides = [1, 1]} : vector<32x128xf32> to vector<31x128xf32>
    %266 = tpu.concatenate %265, %264 in 0 : vector<31x128xf32>, vector<1x128xf32> -> vector<32x128xf32>
    %cst_106 = arith.constant 0.000000e+00 : f32
    %267 = vector.broadcast %cst_106 : f32 to vector<32x128xf32>
    %268 = arith.select %263, %266, %267 : vector<32x128xi1>, vector<32x128xf32>
    %269 = tpu.concatenate %254, %223, %268 in 1 : vector<32x128xf32>, vector<32x128xf32>, vector<32x128xf32> -> vector<32x384xf32>
    %270 = arith.truncf %269 : vector<32x384xf32> to vector<32x384xbf16>
    %c1664 = arith.constant 1664 : index
    %c0_107 = arith.constant 0 : index
    %271 = vector.load %arg1[%c1664, %c0_107] : memref<7168x128xbf16, #tpu.memory_space<vmem>>, vector<384x128xbf16>
    %cst_108 = arith.constant dense<0.000000e+00> : vector<32x128xf32>
    %272 = tpu.matmul %270, %271, %cst_108 {dimension_numbers = #tpu.dot_dimension_numbers<[1], [0], [0], [1], [0, 0, 1, 1], [], []>} : vector<32x384xbf16>, vector<384x128xbf16>, vector<32x128xf32> -> vector<32x128xf32>
    %c5 = arith.constant 5 : index
    %c0_109 = arith.constant 0 : index
    %273 = vector.load %arg2[%c5, %c0_109] : memref<24x128xf32, #tpu.memory_space<vmem>>, vector<1x128xf32>
    %274 = vector.broadcast %273 : vector<1x128xf32> to vector<32x128xf32>
    %275 = arith.addf %272, %274 : vector<32x128xf32>
    %cst_110 = arith.constant 0.000000e+00 : f32
    %276 = vector.broadcast %cst_110 : f32 to vector<32x128xf32>
    %277 = arith.maximumf %275, %276 : vector<32x128xf32>
    %278 = tpu.iota {dimensions = array<i32: 0>} : vector<32x128xi32>
    %c16_i32_111 = arith.constant 16 : i32
    %c0_i32_112 = arith.constant 0 : i32
    %279 = arith.cmpi eq, %c16_i32_111, %c0_i32_112 : i32
    %c1_i32_113 = arith.constant 1 : i32
    %280 = arith.select %279, %c1_i32_113, %c16_i32_111 : i32
    %281 = vector.broadcast %280 : i32 to vector<32x128xi32>
    %282 = arith.remsi %278, %281 : vector<32x128xi32>
    %c0_i32_114 = arith.constant 0 : i32
    %283 = vector.broadcast %c0_i32_114 : i32 to vector<32x128xi32>
    %284 = arith.cmpi ne, %282, %283 : vector<32x128xi32>
    %c0_i32_115 = arith.constant 0 : i32
    %285 = vector.broadcast %c0_i32_115 : i32 to vector<32x128xi32>
    %286 = arith.cmpi slt, %282, %285 : vector<32x128xi32>
    %c0_i32_116 = arith.constant 0 : i32
    %287 = arith.cmpi slt, %280, %c0_i32_116 : i32
    %288 = vector.broadcast %287 : i1 to vector<32x128xi1>
    %289 = vector.broadcast %288 : vector<32x128xi1> to vector<32x128xi1>
    %290 = arith.xori %286, %289 : vector<32x128xi1>
    %291 = arith.andi %290, %284 : vector<32x128xi1>
    %292 = vector.broadcast %280 : i32 to vector<32x128xi32>
    %293 = arith.addi %282, %292 : vector<32x128xi32>
    %294 = arith.select %291, %293, %282 : vector<32x128xi1>, vector<32x128xi32>
    %c-1_i32_117 = arith.constant -1 : i32
    %295 = vector.broadcast %c-1_i32_117 : i32 to vector<32x128xi32>
    %296 = arith.addi %294, %295 : vector<32x128xi32>
    %c0_i32_118 = arith.constant 0 : i32
    %297 = vector.broadcast %c0_i32_118 : i32 to vector<32x128xi32>
    %298 = arith.cmpi sge, %296, %297 : vector<32x128xi32>
    %c-1_i32_119 = arith.constant -1 : i32
    %299 = vector.broadcast %c-1_i32_119 : i32 to vector<32x128xi32>
    %300 = arith.addi %294, %299 : vector<32x128xi32>
    %c16_i32_120 = arith.constant 16 : i32
    %301 = vector.broadcast %c16_i32_120 : i32 to vector<32x128xi32>
    %302 = arith.cmpi slt, %300, %301 : vector<32x128xi32>
    %303 = arith.andi %298, %302 : vector<32x128xi1>
    %cst_121 = arith.constant 0.000000e+00 : f32
    %304 = vector.broadcast %cst_121 : f32 to vector<1x128xf32>
    %305 = vector.extract_strided_slice %277 {offsets = [0, 0], sizes = [31, 128], strides = [1, 1]} : vector<32x128xf32> to vector<31x128xf32>
    %306 = tpu.concatenate %304, %305 in 0 : vector<1x128xf32>, vector<31x128xf32> -> vector<32x128xf32>
    %cst_122 = arith.constant 0.000000e+00 : f32
    %307 = vector.broadcast %cst_122 : f32 to vector<32x128xf32>
    %308 = arith.select %303, %306, %307 : vector<32x128xi1>, vector<32x128xf32>
    %c1_i32_123 = arith.constant 1 : i32
    %309 = vector.broadcast %c1_i32_123 : i32 to vector<32x128xi32>
    %310 = arith.addi %294, %309 : vector<32x128xi32>
    %c0_i32_124 = arith.constant 0 : i32
    %311 = vector.broadcast %c0_i32_124 : i32 to vector<32x128xi32>
    %312 = arith.cmpi sge, %310, %311 : vector<32x128xi32>
    %c1_i32_125 = arith.constant 1 : i32
    %313 = vector.broadcast %c1_i32_125 : i32 to vector<32x128xi32>
    %314 = arith.addi %294, %313 : vector<32x128xi32>
    %c16_i32_126 = arith.constant 16 : i32
    %315 = vector.broadcast %c16_i32_126 : i32 to vector<32x128xi32>
    %316 = arith.cmpi slt, %314, %315 : vector<32x128xi32>
    %317 = arith.andi %312, %316 : vector<32x128xi1>
    %cst_127 = arith.constant 0.000000e+00 : f32
    %318 = vector.broadcast %cst_127 : f32 to vector<1x128xf32>
    %319 = vector.extract_strided_slice %277 {offsets = [1, 0], sizes = [31, 128], strides = [1, 1]} : vector<32x128xf32> to vector<31x128xf32>
    %320 = tpu.concatenate %319, %318 in 0 : vector<31x128xf32>, vector<1x128xf32> -> vector<32x128xf32>
    %cst_128 = arith.constant 0.000000e+00 : f32
    %321 = vector.broadcast %cst_128 : f32 to vector<32x128xf32>
    %322 = arith.select %317, %320, %321 : vector<32x128xi1>, vector<32x128xf32>
    %323 = tpu.concatenate %308, %277, %322 in 1 : vector<32x128xf32>, vector<32x128xf32>, vector<32x128xf32> -> vector<32x384xf32>
    %324 = arith.truncf %323 : vector<32x384xf32> to vector<32x384xbf16>
    %c2048 = arith.constant 2048 : index
    %c0_129 = arith.constant 0 : index
    %325 = vector.load %arg1[%c2048, %c0_129] : memref<7168x128xbf16, #tpu.memory_space<vmem>>, vector<384x128xbf16>
    %cst_130 = arith.constant dense<0.000000e+00> : vector<32x128xf32>
    %326 = tpu.matmul %324, %325, %cst_130 {dimension_numbers = #tpu.dot_dimension_numbers<[1], [0], [0], [1], [0, 0, 1, 1], [], []>} : vector<32x384xbf16>, vector<384x128xbf16>, vector<32x128xf32> -> vector<32x128xf32>
    %c6 = arith.constant 6 : index
    %c0_131 = arith.constant 0 : index
    %327 = vector.load %arg2[%c6, %c0_131] : memref<24x128xf32, #tpu.memory_space<vmem>>, vector<1x128xf32>
    %328 = vector.broadcast %327 : vector<1x128xf32> to vector<32x128xf32>
    %329 = arith.addf %326, %328 : vector<32x128xf32>
    %cst_132 = arith.constant 0.000000e+00 : f32
    %330 = vector.broadcast %cst_132 : f32 to vector<32x128xf32>
    %331 = arith.maximumf %329, %330 : vector<32x128xf32>
    %332 = arith.truncf %169 : vector<32x128xf32> to vector<32x128xbf16>
    %c2432 = arith.constant 2432 : index
    %c0_133 = arith.constant 0 : index
    %333 = vector.load %arg1[%c2432, %c0_133] : memref<7168x128xbf16, #tpu.memory_space<vmem>>, vector<128x128xbf16>
    %cst_134 = arith.constant dense<0.000000e+00> : vector<32x128xf32>
    %334 = tpu.matmul %332, %333, %cst_134 {dimension_numbers = #tpu.dot_dimension_numbers<[1], [0], [0], [1], [0, 0, 1, 1], [], []>} : vector<32x128xbf16>, vector<128x128xbf16>, vector<32x128xf32> -> vector<32x128xf32>
    %c7 = arith.constant 7 : index
    %c0_135 = arith.constant 0 : index
    %335 = vector.load %arg2[%c7, %c0_135] : memref<24x128xf32, #tpu.memory_space<vmem>>, vector<1x128xf32>
    %336 = vector.broadcast %335 : vector<1x128xf32> to vector<32x128xf32>
    %337 = arith.addf %334, %336 : vector<32x128xf32>
    %338 = arith.addf %331, %337 : vector<32x128xf32>
    %339 = vector.shape_cast %338 : vector<32x128xf32> to vector<16x2x128xf32>
    %cst_136 = arith.constant dense<0xFF800000> : vector<16x128xf32>
    %340 = vector.multi_reduction <maximumf>, %339, %cst_136 [1] : vector<16x2x128xf32> to vector<16x128xf32>
    %341 = tpu.iota {dimensions = array<i32: 0>} : vector<16x128xi32>
    %c8_i32 = arith.constant 8 : i32
    %c0_i32_137 = arith.constant 0 : i32
    %342 = arith.cmpi eq, %c8_i32, %c0_i32_137 : i32
    %c1_i32_138 = arith.constant 1 : i32
    %343 = arith.select %342, %c1_i32_138, %c8_i32 : i32
    %344 = vector.broadcast %343 : i32 to vector<16x128xi32>
    %345 = arith.remsi %341, %344 : vector<16x128xi32>
    %c0_i32_139 = arith.constant 0 : i32
    %346 = vector.broadcast %c0_i32_139 : i32 to vector<16x128xi32>
    %347 = arith.cmpi ne, %345, %346 : vector<16x128xi32>
    %c0_i32_140 = arith.constant 0 : i32
    %348 = vector.broadcast %c0_i32_140 : i32 to vector<16x128xi32>
    %349 = arith.cmpi slt, %345, %348 : vector<16x128xi32>
    %c0_i32_141 = arith.constant 0 : i32
    %350 = arith.cmpi slt, %343, %c0_i32_141 : i32
    %351 = vector.broadcast %350 : i1 to vector<16x128xi1>
    %352 = vector.broadcast %351 : vector<16x128xi1> to vector<16x128xi1>
    %353 = arith.xori %349, %352 : vector<16x128xi1>
    %354 = arith.andi %353, %347 : vector<16x128xi1>
    %355 = vector.broadcast %343 : i32 to vector<16x128xi32>
    %356 = arith.addi %345, %355 : vector<16x128xi32>
    %357 = arith.select %354, %356, %345 : vector<16x128xi1>, vector<16x128xi32>
    %c-2_i32 = arith.constant -2 : i32
    %358 = vector.broadcast %c-2_i32 : i32 to vector<16x128xi32>
    %359 = arith.addi %357, %358 : vector<16x128xi32>
    %c0_i32_142 = arith.constant 0 : i32
    %360 = vector.broadcast %c0_i32_142 : i32 to vector<16x128xi32>
    %361 = arith.cmpi sge, %359, %360 : vector<16x128xi32>
    %c-2_i32_143 = arith.constant -2 : i32
    %362 = vector.broadcast %c-2_i32_143 : i32 to vector<16x128xi32>
    %363 = arith.addi %357, %362 : vector<16x128xi32>
    %c8_i32_144 = arith.constant 8 : i32
    %364 = vector.broadcast %c8_i32_144 : i32 to vector<16x128xi32>
    %365 = arith.cmpi slt, %363, %364 : vector<16x128xi32>
    %366 = arith.andi %361, %365 : vector<16x128xi1>
    %cst_145 = arith.constant 0.000000e+00 : f32
    %367 = vector.broadcast %cst_145 : f32 to vector<2x128xf32>
    %368 = vector.extract_strided_slice %340 {offsets = [0, 0], sizes = [14, 128], strides = [1, 1]} : vector<16x128xf32> to vector<14x128xf32>
    %369 = tpu.concatenate %367, %368 in 0 : vector<2x128xf32>, vector<14x128xf32> -> vector<16x128xf32>
    %cst_146 = arith.constant 0.000000e+00 : f32
    %370 = vector.broadcast %cst_146 : f32 to vector<16x128xf32>
    %371 = arith.select %366, %369, %370 : vector<16x128xi1>, vector<16x128xf32>
    %c-1_i32_147 = arith.constant -1 : i32
    %372 = vector.broadcast %c-1_i32_147 : i32 to vector<16x128xi32>
    %373 = arith.addi %357, %372 : vector<16x128xi32>
    %c0_i32_148 = arith.constant 0 : i32
    %374 = vector.broadcast %c0_i32_148 : i32 to vector<16x128xi32>
    %375 = arith.cmpi sge, %373, %374 : vector<16x128xi32>
    %c-1_i32_149 = arith.constant -1 : i32
    %376 = vector.broadcast %c-1_i32_149 : i32 to vector<16x128xi32>
    %377 = arith.addi %357, %376 : vector<16x128xi32>
    %c8_i32_150 = arith.constant 8 : i32
    %378 = vector.broadcast %c8_i32_150 : i32 to vector<16x128xi32>
    %379 = arith.cmpi slt, %377, %378 : vector<16x128xi32>
    %380 = arith.andi %375, %379 : vector<16x128xi1>
    %cst_151 = arith.constant 0.000000e+00 : f32
    %381 = vector.broadcast %cst_151 : f32 to vector<1x128xf32>
    %382 = vector.extract_strided_slice %340 {offsets = [0, 0], sizes = [15, 128], strides = [1, 1]} : vector<16x128xf32> to vector<15x128xf32>
    %383 = tpu.concatenate %381, %382 in 0 : vector<1x128xf32>, vector<15x128xf32> -> vector<16x128xf32>
    %cst_152 = arith.constant 0.000000e+00 : f32
    %384 = vector.broadcast %cst_152 : f32 to vector<16x128xf32>
    %385 = arith.select %380, %383, %384 : vector<16x128xi1>, vector<16x128xf32>
    %c1_i32_153 = arith.constant 1 : i32
    %386 = vector.broadcast %c1_i32_153 : i32 to vector<16x128xi32>
    %387 = arith.addi %357, %386 : vector<16x128xi32>
    %c0_i32_154 = arith.constant 0 : i32
    %388 = vector.broadcast %c0_i32_154 : i32 to vector<16x128xi32>
    %389 = arith.cmpi sge, %387, %388 : vector<16x128xi32>
    %c1_i32_155 = arith.constant 1 : i32
    %390 = vector.broadcast %c1_i32_155 : i32 to vector<16x128xi32>
    %391 = arith.addi %357, %390 : vector<16x128xi32>
    %c8_i32_156 = arith.constant 8 : i32
    %392 = vector.broadcast %c8_i32_156 : i32 to vector<16x128xi32>
    %393 = arith.cmpi slt, %391, %392 : vector<16x128xi32>
    %394 = arith.andi %389, %393 : vector<16x128xi1>
    %cst_157 = arith.constant 0.000000e+00 : f32
    %395 = vector.broadcast %cst_157 : f32 to vector<1x128xf32>
    %396 = vector.extract_strided_slice %340 {offsets = [1, 0], sizes = [15, 128], strides = [1, 1]} : vector<16x128xf32> to vector<15x128xf32>
    %397 = tpu.concatenate %396, %395 in 0 : vector<15x128xf32>, vector<1x128xf32> -> vector<16x128xf32>
    %cst_158 = arith.constant 0.000000e+00 : f32
    %398 = vector.broadcast %cst_158 : f32 to vector<16x128xf32>
    %399 = arith.select %394, %397, %398 : vector<16x128xi1>, vector<16x128xf32>
    %c2_i32 = arith.constant 2 : i32
    %400 = vector.broadcast %c2_i32 : i32 to vector<16x128xi32>
    %401 = arith.addi %357, %400 : vector<16x128xi32>
    %c0_i32_159 = arith.constant 0 : i32
    %402 = vector.broadcast %c0_i32_159 : i32 to vector<16x128xi32>
    %403 = arith.cmpi sge, %401, %402 : vector<16x128xi32>
    %c2_i32_160 = arith.constant 2 : i32
    %404 = vector.broadcast %c2_i32_160 : i32 to vector<16x128xi32>
    %405 = arith.addi %357, %404 : vector<16x128xi32>
    %c8_i32_161 = arith.constant 8 : i32
    %406 = vector.broadcast %c8_i32_161 : i32 to vector<16x128xi32>
    %407 = arith.cmpi slt, %405, %406 : vector<16x128xi32>
    %408 = arith.andi %403, %407 : vector<16x128xi1>
    %cst_162 = arith.constant 0.000000e+00 : f32
    %409 = vector.broadcast %cst_162 : f32 to vector<2x128xf32>
    %410 = vector.extract_strided_slice %340 {offsets = [2, 0], sizes = [14, 128], strides = [1, 1]} : vector<16x128xf32> to vector<14x128xf32>
    %411 = tpu.concatenate %410, %409 in 0 : vector<14x128xf32>, vector<2x128xf32> -> vector<16x128xf32>
    %cst_163 = arith.constant 0.000000e+00 : f32
    %412 = vector.broadcast %cst_163 : f32 to vector<16x128xf32>
    %413 = arith.select %408, %411, %412 : vector<16x128xi1>, vector<16x128xf32>
    %414 = tpu.concatenate %371, %385, %340, %399, %413 in 1 : vector<16x128xf32>, vector<16x128xf32>, vector<16x128xf32>, vector<16x128xf32>, vector<16x128xf32> -> vector<16x640xf32>
    %415 = arith.truncf %414 : vector<16x640xf32> to vector<16x640xbf16>
    %c2560 = arith.constant 2560 : index
    %c0_164 = arith.constant 0 : index
    %416 = vector.load %arg1[%c2560, %c0_164] : memref<7168x128xbf16, #tpu.memory_space<vmem>>, vector<640x128xbf16>
    %cst_165 = arith.constant dense<0.000000e+00> : vector<16x128xf32>
    %417 = tpu.matmul %415, %416, %cst_165 {dimension_numbers = #tpu.dot_dimension_numbers<[1], [0], [0], [1], [0, 0, 1, 1], [], []>} : vector<16x640xbf16>, vector<640x128xbf16>, vector<16x128xf32> -> vector<16x128xf32>
    %c8 = arith.constant 8 : index
    %c0_166 = arith.constant 0 : index
    %418 = vector.load %arg2[%c8, %c0_166] : memref<24x128xf32, #tpu.memory_space<vmem>>, vector<1x128xf32>
    %419 = vector.broadcast %418 : vector<1x128xf32> to vector<16x128xf32>
    %420 = arith.addf %417, %419 : vector<16x128xf32>
    %cst_167 = arith.constant 0.000000e+00 : f32
    %421 = vector.broadcast %cst_167 : f32 to vector<16x128xf32>
    %422 = arith.maximumf %420, %421 : vector<16x128xf32>
    %423 = tpu.iota {dimensions = array<i32: 0>} : vector<16x128xi32>
    %c8_i32_168 = arith.constant 8 : i32
    %c0_i32_169 = arith.constant 0 : i32
    %424 = arith.cmpi eq, %c8_i32_168, %c0_i32_169 : i32
    %c1_i32_170 = arith.constant 1 : i32
    %425 = arith.select %424, %c1_i32_170, %c8_i32_168 : i32
    %426 = vector.broadcast %425 : i32 to vector<16x128xi32>
    %427 = arith.remsi %423, %426 : vector<16x128xi32>
    %c0_i32_171 = arith.constant 0 : i32
    %428 = vector.broadcast %c0_i32_171 : i32 to vector<16x128xi32>
    %429 = arith.cmpi ne, %427, %428 : vector<16x128xi32>
    %c0_i32_172 = arith.constant 0 : i32
    %430 = vector.broadcast %c0_i32_172 : i32 to vector<16x128xi32>
    %431 = arith.cmpi slt, %427, %430 : vector<16x128xi32>
    %c0_i32_173 = arith.constant 0 : i32
    %432 = arith.cmpi slt, %425, %c0_i32_173 : i32
    %433 = vector.broadcast %432 : i1 to vector<16x128xi1>
    %434 = vector.broadcast %433 : vector<16x128xi1> to vector<16x128xi1>
    %435 = arith.xori %431, %434 : vector<16x128xi1>
    %436 = arith.andi %435, %429 : vector<16x128xi1>
    %437 = vector.broadcast %425 : i32 to vector<16x128xi32>
    %438 = arith.addi %427, %437 : vector<16x128xi32>
    %439 = arith.select %436, %438, %427 : vector<16x128xi1>, vector<16x128xi32>
    %c-2_i32_174 = arith.constant -2 : i32
    %440 = vector.broadcast %c-2_i32_174 : i32 to vector<16x128xi32>
    %441 = arith.addi %439, %440 : vector<16x128xi32>
    %c0_i32_175 = arith.constant 0 : i32
    %442 = vector.broadcast %c0_i32_175 : i32 to vector<16x128xi32>
    %443 = arith.cmpi sge, %441, %442 : vector<16x128xi32>
    %c-2_i32_176 = arith.constant -2 : i32
    %444 = vector.broadcast %c-2_i32_176 : i32 to vector<16x128xi32>
    %445 = arith.addi %439, %444 : vector<16x128xi32>
    %c8_i32_177 = arith.constant 8 : i32
    %446 = vector.broadcast %c8_i32_177 : i32 to vector<16x128xi32>
    %447 = arith.cmpi slt, %445, %446 : vector<16x128xi32>
    %448 = arith.andi %443, %447 : vector<16x128xi1>
    %cst_178 = arith.constant 0.000000e+00 : f32
    %449 = vector.broadcast %cst_178 : f32 to vector<2x128xf32>
    %450 = vector.extract_strided_slice %422 {offsets = [0, 0], sizes = [14, 128], strides = [1, 1]} : vector<16x128xf32> to vector<14x128xf32>
    %451 = tpu.concatenate %449, %450 in 0 : vector<2x128xf32>, vector<14x128xf32> -> vector<16x128xf32>
    %cst_179 = arith.constant 0.000000e+00 : f32
    %452 = vector.broadcast %cst_179 : f32 to vector<16x128xf32>
    %453 = arith.select %448, %451, %452 : vector<16x128xi1>, vector<16x128xf32>
    %c-1_i32_180 = arith.constant -1 : i32
    %454 = vector.broadcast %c-1_i32_180 : i32 to vector<16x128xi32>
    %455 = arith.addi %439, %454 : vector<16x128xi32>
    %c0_i32_181 = arith.constant 0 : i32
    %456 = vector.broadcast %c0_i32_181 : i32 to vector<16x128xi32>
    %457 = arith.cmpi sge, %455, %456 : vector<16x128xi32>
    %c-1_i32_182 = arith.constant -1 : i32
    %458 = vector.broadcast %c-1_i32_182 : i32 to vector<16x128xi32>
    %459 = arith.addi %439, %458 : vector<16x128xi32>
    %c8_i32_183 = arith.constant 8 : i32
    %460 = vector.broadcast %c8_i32_183 : i32 to vector<16x128xi32>
    %461 = arith.cmpi slt, %459, %460 : vector<16x128xi32>
    %462 = arith.andi %457, %461 : vector<16x128xi1>
    %cst_184 = arith.constant 0.000000e+00 : f32
    %463 = vector.broadcast %cst_184 : f32 to vector<1x128xf32>
    %464 = vector.extract_strided_slice %422 {offsets = [0, 0], sizes = [15, 128], strides = [1, 1]} : vector<16x128xf32> to vector<15x128xf32>
    %465 = tpu.concatenate %463, %464 in 0 : vector<1x128xf32>, vector<15x128xf32> -> vector<16x128xf32>
    %cst_185 = arith.constant 0.000000e+00 : f32
    %466 = vector.broadcast %cst_185 : f32 to vector<16x128xf32>
    %467 = arith.select %462, %465, %466 : vector<16x128xi1>, vector<16x128xf32>
    %c1_i32_186 = arith.constant 1 : i32
    %468 = vector.broadcast %c1_i32_186 : i32 to vector<16x128xi32>
    %469 = arith.addi %439, %468 : vector<16x128xi32>
    %c0_i32_187 = arith.constant 0 : i32
    %470 = vector.broadcast %c0_i32_187 : i32 to vector<16x128xi32>
    %471 = arith.cmpi sge, %469, %470 : vector<16x128xi32>
    %c1_i32_188 = arith.constant 1 : i32
    %472 = vector.broadcast %c1_i32_188 : i32 to vector<16x128xi32>
    %473 = arith.addi %439, %472 : vector<16x128xi32>
    %c8_i32_189 = arith.constant 8 : i32
    %474 = vector.broadcast %c8_i32_189 : i32 to vector<16x128xi32>
    %475 = arith.cmpi slt, %473, %474 : vector<16x128xi32>
    %476 = arith.andi %471, %475 : vector<16x128xi1>
    %cst_190 = arith.constant 0.000000e+00 : f32
    %477 = vector.broadcast %cst_190 : f32 to vector<1x128xf32>
    %478 = vector.extract_strided_slice %422 {offsets = [1, 0], sizes = [15, 128], strides = [1, 1]} : vector<16x128xf32> to vector<15x128xf32>
    %479 = tpu.concatenate %478, %477 in 0 : vector<15x128xf32>, vector<1x128xf32> -> vector<16x128xf32>
    %cst_191 = arith.constant 0.000000e+00 : f32
    %480 = vector.broadcast %cst_191 : f32 to vector<16x128xf32>
    %481 = arith.select %476, %479, %480 : vector<16x128xi1>, vector<16x128xf32>
    %c2_i32_192 = arith.constant 2 : i32
    %482 = vector.broadcast %c2_i32_192 : i32 to vector<16x128xi32>
    %483 = arith.addi %439, %482 : vector<16x128xi32>
    %c0_i32_193 = arith.constant 0 : i32
    %484 = vector.broadcast %c0_i32_193 : i32 to vector<16x128xi32>
    %485 = arith.cmpi sge, %483, %484 : vector<16x128xi32>
    %c2_i32_194 = arith.constant 2 : i32
    %486 = vector.broadcast %c2_i32_194 : i32 to vector<16x128xi32>
    %487 = arith.addi %439, %486 : vector<16x128xi32>
    %c8_i32_195 = arith.constant 8 : i32
    %488 = vector.broadcast %c8_i32_195 : i32 to vector<16x128xi32>
    %489 = arith.cmpi slt, %487, %488 : vector<16x128xi32>
    %490 = arith.andi %485, %489 : vector<16x128xi1>
    %cst_196 = arith.constant 0.000000e+00 : f32
    %491 = vector.broadcast %cst_196 : f32 to vector<2x128xf32>
    %492 = vector.extract_strided_slice %422 {offsets = [2, 0], sizes = [14, 128], strides = [1, 1]} : vector<16x128xf32> to vector<14x128xf32>
    %493 = tpu.concatenate %492, %491 in 0 : vector<14x128xf32>, vector<2x128xf32> -> vector<16x128xf32>
    %cst_197 = arith.constant 0.000000e+00 : f32
    %494 = vector.broadcast %cst_197 : f32 to vector<16x128xf32>
    %495 = arith.select %490, %493, %494 : vector<16x128xi1>, vector<16x128xf32>
    %496 = tpu.concatenate %453, %467, %422, %481, %495 in 1 : vector<16x128xf32>, vector<16x128xf32>, vector<16x128xf32>, vector<16x128xf32>, vector<16x128xf32> -> vector<16x640xf32>
    %497 = arith.truncf %496 : vector<16x640xf32> to vector<16x640xbf16>
    %c3200 = arith.constant 3200 : index
    %c0_198 = arith.constant 0 : index
    %498 = vector.load %arg1[%c3200, %c0_198] : memref<7168x128xbf16, #tpu.memory_space<vmem>>, vector<640x128xbf16>
    %cst_199 = arith.constant dense<0.000000e+00> : vector<16x128xf32>
    %499 = tpu.matmul %497, %498, %cst_199 {dimension_numbers = #tpu.dot_dimension_numbers<[1], [0], [0], [1], [0, 0, 1, 1], [], []>} : vector<16x640xbf16>, vector<640x128xbf16>, vector<16x128xf32> -> vector<16x128xf32>
    %c9 = arith.constant 9 : index
    %c0_200 = arith.constant 0 : index
    %500 = vector.load %arg2[%c9, %c0_200] : memref<24x128xf32, #tpu.memory_space<vmem>>, vector<1x128xf32>
    %501 = vector.broadcast %500 : vector<1x128xf32> to vector<16x128xf32>
    %502 = arith.addf %499, %501 : vector<16x128xf32>
    %cst_201 = arith.constant 0.000000e+00 : f32
    %503 = vector.broadcast %cst_201 : f32 to vector<16x128xf32>
    %504 = arith.maximumf %502, %503 : vector<16x128xf32>
    %505 = tpu.iota {dimensions = array<i32: 0>} : vector<16x128xi32>
    %c8_i32_202 = arith.constant 8 : i32
    %c0_i32_203 = arith.constant 0 : i32
    %506 = arith.cmpi eq, %c8_i32_202, %c0_i32_203 : i32
    %c1_i32_204 = arith.constant 1 : i32
    %507 = arith.select %506, %c1_i32_204, %c8_i32_202 : i32
    %508 = vector.broadcast %507 : i32 to vector<16x128xi32>
    %509 = arith.remsi %505, %508 : vector<16x128xi32>
    %c0_i32_205 = arith.constant 0 : i32
    %510 = vector.broadcast %c0_i32_205 : i32 to vector<16x128xi32>
    %511 = arith.cmpi ne, %509, %510 : vector<16x128xi32>
    %c0_i32_206 = arith.constant 0 : i32
    %512 = vector.broadcast %c0_i32_206 : i32 to vector<16x128xi32>
    %513 = arith.cmpi slt, %509, %512 : vector<16x128xi32>
    %c0_i32_207 = arith.constant 0 : i32
    %514 = arith.cmpi slt, %507, %c0_i32_207 : i32
    %515 = vector.broadcast %514 : i1 to vector<16x128xi1>
    %516 = vector.broadcast %515 : vector<16x128xi1> to vector<16x128xi1>
    %517 = arith.xori %513, %516 : vector<16x128xi1>
    %518 = arith.andi %517, %511 : vector<16x128xi1>
    %519 = vector.broadcast %507 : i32 to vector<16x128xi32>
    %520 = arith.addi %509, %519 : vector<16x128xi32>
    %521 = arith.select %518, %520, %509 : vector<16x128xi1>, vector<16x128xi32>
    %c-2_i32_208 = arith.constant -2 : i32
    %522 = vector.broadcast %c-2_i32_208 : i32 to vector<16x128xi32>
    %523 = arith.addi %521, %522 : vector<16x128xi32>
    %c0_i32_209 = arith.constant 0 : i32
    %524 = vector.broadcast %c0_i32_209 : i32 to vector<16x128xi32>
    %525 = arith.cmpi sge, %523, %524 : vector<16x128xi32>
    %c-2_i32_210 = arith.constant -2 : i32
    %526 = vector.broadcast %c-2_i32_210 : i32 to vector<16x128xi32>
    %527 = arith.addi %521, %526 : vector<16x128xi32>
    %c8_i32_211 = arith.constant 8 : i32
    %528 = vector.broadcast %c8_i32_211 : i32 to vector<16x128xi32>
    %529 = arith.cmpi slt, %527, %528 : vector<16x128xi32>
    %530 = arith.andi %525, %529 : vector<16x128xi1>
    %cst_212 = arith.constant 0.000000e+00 : f32
    %531 = vector.broadcast %cst_212 : f32 to vector<2x128xf32>
    %532 = vector.extract_strided_slice %504 {offsets = [0, 0], sizes = [14, 128], strides = [1, 1]} : vector<16x128xf32> to vector<14x128xf32>
    %533 = tpu.concatenate %531, %532 in 0 : vector<2x128xf32>, vector<14x128xf32> -> vector<16x128xf32>
    %cst_213 = arith.constant 0.000000e+00 : f32
    %534 = vector.broadcast %cst_213 : f32 to vector<16x128xf32>
    %535 = arith.select %530, %533, %534 : vector<16x128xi1>, vector<16x128xf32>
    %c-1_i32_214 = arith.constant -1 : i32
    %536 = vector.broadcast %c-1_i32_214 : i32 to vector<16x128xi32>
    %537 = arith.addi %521, %536 : vector<16x128xi32>
    %c0_i32_215 = arith.constant 0 : i32
    %538 = vector.broadcast %c0_i32_215 : i32 to vector<16x128xi32>
    %539 = arith.cmpi sge, %537, %538 : vector<16x128xi32>
    %c-1_i32_216 = arith.constant -1 : i32
    %540 = vector.broadcast %c-1_i32_216 : i32 to vector<16x128xi32>
    %541 = arith.addi %521, %540 : vector<16x128xi32>
    %c8_i32_217 = arith.constant 8 : i32
    %542 = vector.broadcast %c8_i32_217 : i32 to vector<16x128xi32>
    %543 = arith.cmpi slt, %541, %542 : vector<16x128xi32>
    %544 = arith.andi %539, %543 : vector<16x128xi1>
    %cst_218 = arith.constant 0.000000e+00 : f32
    %545 = vector.broadcast %cst_218 : f32 to vector<1x128xf32>
    %546 = vector.extract_strided_slice %504 {offsets = [0, 0], sizes = [15, 128], strides = [1, 1]} : vector<16x128xf32> to vector<15x128xf32>
    %547 = tpu.concatenate %545, %546 in 0 : vector<1x128xf32>, vector<15x128xf32> -> vector<16x128xf32>
    %cst_219 = arith.constant 0.000000e+00 : f32
    %548 = vector.broadcast %cst_219 : f32 to vector<16x128xf32>
    %549 = arith.select %544, %547, %548 : vector<16x128xi1>, vector<16x128xf32>
    %c1_i32_220 = arith.constant 1 : i32
    %550 = vector.broadcast %c1_i32_220 : i32 to vector<16x128xi32>
    %551 = arith.addi %521, %550 : vector<16x128xi32>
    %c0_i32_221 = arith.constant 0 : i32
    %552 = vector.broadcast %c0_i32_221 : i32 to vector<16x128xi32>
    %553 = arith.cmpi sge, %551, %552 : vector<16x128xi32>
    %c1_i32_222 = arith.constant 1 : i32
    %554 = vector.broadcast %c1_i32_222 : i32 to vector<16x128xi32>
    %555 = arith.addi %521, %554 : vector<16x128xi32>
    %c8_i32_223 = arith.constant 8 : i32
    %556 = vector.broadcast %c8_i32_223 : i32 to vector<16x128xi32>
    %557 = arith.cmpi slt, %555, %556 : vector<16x128xi32>
    %558 = arith.andi %553, %557 : vector<16x128xi1>
    %cst_224 = arith.constant 0.000000e+00 : f32
    %559 = vector.broadcast %cst_224 : f32 to vector<1x128xf32>
    %560 = vector.extract_strided_slice %504 {offsets = [1, 0], sizes = [15, 128], strides = [1, 1]} : vector<16x128xf32> to vector<15x128xf32>
    %561 = tpu.concatenate %560, %559 in 0 : vector<15x128xf32>, vector<1x128xf32> -> vector<16x128xf32>
    %cst_225 = arith.constant 0.000000e+00 : f32
    %562 = vector.broadcast %cst_225 : f32 to vector<16x128xf32>
    %563 = arith.select %558, %561, %562 : vector<16x128xi1>, vector<16x128xf32>
    %c2_i32_226 = arith.constant 2 : i32
    %564 = vector.broadcast %c2_i32_226 : i32 to vector<16x128xi32>
    %565 = arith.addi %521, %564 : vector<16x128xi32>
    %c0_i32_227 = arith.constant 0 : i32
    %566 = vector.broadcast %c0_i32_227 : i32 to vector<16x128xi32>
    %567 = arith.cmpi sge, %565, %566 : vector<16x128xi32>
    %c2_i32_228 = arith.constant 2 : i32
    %568 = vector.broadcast %c2_i32_228 : i32 to vector<16x128xi32>
    %569 = arith.addi %521, %568 : vector<16x128xi32>
    %c8_i32_229 = arith.constant 8 : i32
    %570 = vector.broadcast %c8_i32_229 : i32 to vector<16x128xi32>
    %571 = arith.cmpi slt, %569, %570 : vector<16x128xi32>
    %572 = arith.andi %567, %571 : vector<16x128xi1>
    %cst_230 = arith.constant 0.000000e+00 : f32
    %573 = vector.broadcast %cst_230 : f32 to vector<2x128xf32>
    %574 = vector.extract_strided_slice %504 {offsets = [2, 0], sizes = [14, 128], strides = [1, 1]} : vector<16x128xf32> to vector<14x128xf32>
    %575 = tpu.concatenate %574, %573 in 0 : vector<14x128xf32>, vector<2x128xf32> -> vector<16x128xf32>
    %cst_231 = arith.constant 0.000000e+00 : f32
    %576 = vector.broadcast %cst_231 : f32 to vector<16x128xf32>
    %577 = arith.select %572, %575, %576 : vector<16x128xi1>, vector<16x128xf32>
    %578 = tpu.concatenate %535, %549, %504, %563, %577 in 1 : vector<16x128xf32>, vector<16x128xf32>, vector<16x128xf32>, vector<16x128xf32>, vector<16x128xf32> -> vector<16x640xf32>
    %579 = arith.truncf %578 : vector<16x640xf32> to vector<16x640xbf16>
    %c3840 = arith.constant 3840 : index
    %c0_232 = arith.constant 0 : index
    %580 = vector.load %arg1[%c3840, %c0_232] : memref<7168x128xbf16, #tpu.memory_space<vmem>>, vector<640x128xbf16>
    %cst_233 = arith.constant dense<0.000000e+00> : vector<16x128xf32>
    %581 = tpu.matmul %579, %580, %cst_233 {dimension_numbers = #tpu.dot_dimension_numbers<[1], [0], [0], [1], [0, 0, 1, 1], [], []>} : vector<16x640xbf16>, vector<640x128xbf16>, vector<16x128xf32> -> vector<16x128xf32>
    %c10 = arith.constant 10 : index
    %c0_234 = arith.constant 0 : index
    %582 = vector.load %arg2[%c10, %c0_234] : memref<24x128xf32, #tpu.memory_space<vmem>>, vector<1x128xf32>
    %583 = vector.broadcast %582 : vector<1x128xf32> to vector<16x128xf32>
    %584 = arith.addf %581, %583 : vector<16x128xf32>
    %cst_235 = arith.constant 0.000000e+00 : f32
    %585 = vector.broadcast %cst_235 : f32 to vector<16x128xf32>
    %586 = arith.maximumf %584, %585 : vector<16x128xf32>
    %587 = arith.addf %586, %340 : vector<16x128xf32>
    %588 = tpu.iota {dimensions = array<i32: 0>} : vector<16x128xi32>
    %c8_i32_236 = arith.constant 8 : i32
    %c0_i32_237 = arith.constant 0 : i32
    %589 = arith.cmpi eq, %c8_i32_236, %c0_i32_237 : i32
    %c1_i32_238 = arith.constant 1 : i32
    %590 = arith.select %589, %c1_i32_238, %c8_i32_236 : i32
    %591 = vector.broadcast %590 : i32 to vector<16x128xi32>
    %592 = arith.remsi %588, %591 : vector<16x128xi32>
    %c0_i32_239 = arith.constant 0 : i32
    %593 = vector.broadcast %c0_i32_239 : i32 to vector<16x128xi32>
    %594 = arith.cmpi ne, %592, %593 : vector<16x128xi32>
    %c0_i32_240 = arith.constant 0 : i32
    %595 = vector.broadcast %c0_i32_240 : i32 to vector<16x128xi32>
    %596 = arith.cmpi slt, %592, %595 : vector<16x128xi32>
    %c0_i32_241 = arith.constant 0 : i32
    %597 = arith.cmpi slt, %590, %c0_i32_241 : i32
    %598 = vector.broadcast %597 : i1 to vector<16x128xi1>
    %599 = vector.broadcast %598 : vector<16x128xi1> to vector<16x128xi1>
    %600 = arith.xori %596, %599 : vector<16x128xi1>
    %601 = arith.andi %600, %594 : vector<16x128xi1>
    %602 = vector.broadcast %590 : i32 to vector<16x128xi32>
    %603 = arith.addi %592, %602 : vector<16x128xi32>
    %604 = arith.select %601, %603, %592 : vector<16x128xi1>, vector<16x128xi32>
    %c-2_i32_242 = arith.constant -2 : i32
    %605 = vector.broadcast %c-2_i32_242 : i32 to vector<16x128xi32>
    %606 = arith.addi %604, %605 : vector<16x128xi32>
    %c0_i32_243 = arith.constant 0 : i32
    %607 = vector.broadcast %c0_i32_243 : i32 to vector<16x128xi32>
    %608 = arith.cmpi sge, %606, %607 : vector<16x128xi32>
    %c-2_i32_244 = arith.constant -2 : i32
    %609 = vector.broadcast %c-2_i32_244 : i32 to vector<16x128xi32>
    %610 = arith.addi %604, %609 : vector<16x128xi32>
    %c8_i32_245 = arith.constant 8 : i32
    %611 = vector.broadcast %c8_i32_245 : i32 to vector<16x128xi32>
    %612 = arith.cmpi slt, %610, %611 : vector<16x128xi32>
    %613 = arith.andi %608, %612 : vector<16x128xi1>
    %cst_246 = arith.constant 0.000000e+00 : f32
    %614 = vector.broadcast %cst_246 : f32 to vector<2x128xf32>
    %615 = vector.extract_strided_slice %587 {offsets = [0, 0], sizes = [14, 128], strides = [1, 1]} : vector<16x128xf32> to vector<14x128xf32>
    %616 = tpu.concatenate %614, %615 in 0 : vector<2x128xf32>, vector<14x128xf32> -> vector<16x128xf32>
    %cst_247 = arith.constant 0.000000e+00 : f32
    %617 = vector.broadcast %cst_247 : f32 to vector<16x128xf32>
    %618 = arith.select %613, %616, %617 : vector<16x128xi1>, vector<16x128xf32>
    %c-1_i32_248 = arith.constant -1 : i32
    %619 = vector.broadcast %c-1_i32_248 : i32 to vector<16x128xi32>
    %620 = arith.addi %604, %619 : vector<16x128xi32>
    %c0_i32_249 = arith.constant 0 : i32
    %621 = vector.broadcast %c0_i32_249 : i32 to vector<16x128xi32>
    %622 = arith.cmpi sge, %620, %621 : vector<16x128xi32>
    %c-1_i32_250 = arith.constant -1 : i32
    %623 = vector.broadcast %c-1_i32_250 : i32 to vector<16x128xi32>
    %624 = arith.addi %604, %623 : vector<16x128xi32>
    %c8_i32_251 = arith.constant 8 : i32
    %625 = vector.broadcast %c8_i32_251 : i32 to vector<16x128xi32>
    %626 = arith.cmpi slt, %624, %625 : vector<16x128xi32>
    %627 = arith.andi %622, %626 : vector<16x128xi1>
    %cst_252 = arith.constant 0.000000e+00 : f32
    %628 = vector.broadcast %cst_252 : f32 to vector<1x128xf32>
    %629 = vector.extract_strided_slice %587 {offsets = [0, 0], sizes = [15, 128], strides = [1, 1]} : vector<16x128xf32> to vector<15x128xf32>
    %630 = tpu.concatenate %628, %629 in 0 : vector<1x128xf32>, vector<15x128xf32> -> vector<16x128xf32>
    %cst_253 = arith.constant 0.000000e+00 : f32
    %631 = vector.broadcast %cst_253 : f32 to vector<16x128xf32>
    %632 = arith.select %627, %630, %631 : vector<16x128xi1>, vector<16x128xf32>
    %c1_i32_254 = arith.constant 1 : i32
    %633 = vector.broadcast %c1_i32_254 : i32 to vector<16x128xi32>
    %634 = arith.addi %604, %633 : vector<16x128xi32>
    %c0_i32_255 = arith.constant 0 : i32
    %635 = vector.broadcast %c0_i32_255 : i32 to vector<16x128xi32>
    %636 = arith.cmpi sge, %634, %635 : vector<16x128xi32>
    %c1_i32_256 = arith.constant 1 : i32
    %637 = vector.broadcast %c1_i32_256 : i32 to vector<16x128xi32>
    %638 = arith.addi %604, %637 : vector<16x128xi32>
    %c8_i32_257 = arith.constant 8 : i32
    %639 = vector.broadcast %c8_i32_257 : i32 to vector<16x128xi32>
    %640 = arith.cmpi slt, %638, %639 : vector<16x128xi32>
    %641 = arith.andi %636, %640 : vector<16x128xi1>
    %cst_258 = arith.constant 0.000000e+00 : f32
    %642 = vector.broadcast %cst_258 : f32 to vector<1x128xf32>
    %643 = vector.extract_strided_slice %587 {offsets = [1, 0], sizes = [15, 128], strides = [1, 1]} : vector<16x128xf32> to vector<15x128xf32>
    %644 = tpu.concatenate %643, %642 in 0 : vector<15x128xf32>, vector<1x128xf32> -> vector<16x128xf32>
    %cst_259 = arith.constant 0.000000e+00 : f32
    %645 = vector.broadcast %cst_259 : f32 to vector<16x128xf32>
    %646 = arith.select %641, %644, %645 : vector<16x128xi1>, vector<16x128xf32>
    %c2_i32_260 = arith.constant 2 : i32
    %647 = vector.broadcast %c2_i32_260 : i32 to vector<16x128xi32>
    %648 = arith.addi %604, %647 : vector<16x128xi32>
    %c0_i32_261 = arith.constant 0 : i32
    %649 = vector.broadcast %c0_i32_261 : i32 to vector<16x128xi32>
    %650 = arith.cmpi sge, %648, %649 : vector<16x128xi32>
    %c2_i32_262 = arith.constant 2 : i32
    %651 = vector.broadcast %c2_i32_262 : i32 to vector<16x128xi32>
    %652 = arith.addi %604, %651 : vector<16x128xi32>
    %c8_i32_263 = arith.constant 8 : i32
    %653 = vector.broadcast %c8_i32_263 : i32 to vector<16x128xi32>
    %654 = arith.cmpi slt, %652, %653 : vector<16x128xi32>
    %655 = arith.andi %650, %654 : vector<16x128xi1>
    %cst_264 = arith.constant 0.000000e+00 : f32
    %656 = vector.broadcast %cst_264 : f32 to vector<2x128xf32>
    %657 = vector.extract_strided_slice %587 {offsets = [2, 0], sizes = [14, 128], strides = [1, 1]} : vector<16x128xf32> to vector<14x128xf32>
    %658 = tpu.concatenate %657, %656 in 0 : vector<14x128xf32>, vector<2x128xf32> -> vector<16x128xf32>
    %cst_265 = arith.constant 0.000000e+00 : f32
    %659 = vector.broadcast %cst_265 : f32 to vector<16x128xf32>
    %660 = arith.select %655, %658, %659 : vector<16x128xi1>, vector<16x128xf32>
    %661 = tpu.concatenate %618, %632, %587, %646, %660 in 1 : vector<16x128xf32>, vector<16x128xf32>, vector<16x128xf32>, vector<16x128xf32>, vector<16x128xf32> -> vector<16x640xf32>
    %662 = arith.truncf %661 : vector<16x640xf32> to vector<16x640xbf16>
    %c4480 = arith.constant 4480 : index
    %c0_266 = arith.constant 0 : index
    %663 = vector.load %arg1[%c4480, %c0_266] : memref<7168x128xbf16, #tpu.memory_space<vmem>>, vector<640x128xbf16>
    %cst_267 = arith.constant dense<0.000000e+00> : vector<16x128xf32>
    %664 = tpu.matmul %662, %663, %cst_267 {dimension_numbers = #tpu.dot_dimension_numbers<[1], [0], [0], [1], [0, 0, 1, 1], [], []>} : vector<16x640xbf16>, vector<640x128xbf16>, vector<16x128xf32> -> vector<16x128xf32>
    %c11 = arith.constant 11 : index
    %c0_268 = arith.constant 0 : index
    %665 = vector.load %arg2[%c11, %c0_268] : memref<24x128xf32, #tpu.memory_space<vmem>>, vector<1x128xf32>
    %666 = vector.broadcast %665 : vector<1x128xf32> to vector<16x128xf32>
    %667 = arith.addf %664, %666 : vector<16x128xf32>
    %cst_269 = arith.constant 0.000000e+00 : f32
    %668 = vector.broadcast %cst_269 : f32 to vector<16x128xf32>
    %669 = arith.maximumf %667, %668 : vector<16x128xf32>
    %670 = tpu.iota {dimensions = array<i32: 0>} : vector<16x128xi32>
    %c8_i32_270 = arith.constant 8 : i32
    %c0_i32_271 = arith.constant 0 : i32
    %671 = arith.cmpi eq, %c8_i32_270, %c0_i32_271 : i32
    %c1_i32_272 = arith.constant 1 : i32
    %672 = arith.select %671, %c1_i32_272, %c8_i32_270 : i32
    %673 = vector.broadcast %672 : i32 to vector<16x128xi32>
    %674 = arith.remsi %670, %673 : vector<16x128xi32>
    %c0_i32_273 = arith.constant 0 : i32
    %675 = vector.broadcast %c0_i32_273 : i32 to vector<16x128xi32>
    %676 = arith.cmpi ne, %674, %675 : vector<16x128xi32>
    %c0_i32_274 = arith.constant 0 : i32
    %677 = vector.broadcast %c0_i32_274 : i32 to vector<16x128xi32>
    %678 = arith.cmpi slt, %674, %677 : vector<16x128xi32>
    %c0_i32_275 = arith.constant 0 : i32
    %679 = arith.cmpi slt, %672, %c0_i32_275 : i32
    %680 = vector.broadcast %679 : i1 to vector<16x128xi1>
    %681 = vector.broadcast %680 : vector<16x128xi1> to vector<16x128xi1>
    %682 = arith.xori %678, %681 : vector<16x128xi1>
    %683 = arith.andi %682, %676 : vector<16x128xi1>
    %684 = vector.broadcast %672 : i32 to vector<16x128xi32>
    %685 = arith.addi %674, %684 : vector<16x128xi32>
    %686 = arith.select %683, %685, %674 : vector<16x128xi1>, vector<16x128xi32>
    %c-2_i32_276 = arith.constant -2 : i32
    %687 = vector.broadcast %c-2_i32_276 : i32 to vector<16x128xi32>
    %688 = arith.addi %686, %687 : vector<16x128xi32>
    %c0_i32_277 = arith.constant 0 : i32
    %689 = vector.broadcast %c0_i32_277 : i32 to vector<16x128xi32>
    %690 = arith.cmpi sge, %688, %689 : vector<16x128xi32>
    %c-2_i32_278 = arith.constant -2 : i32
    %691 = vector.broadcast %c-2_i32_278 : i32 to vector<16x128xi32>
    %692 = arith.addi %686, %691 : vector<16x128xi32>
    %c8_i32_279 = arith.constant 8 : i32
    %693 = vector.broadcast %c8_i32_279 : i32 to vector<16x128xi32>
    %694 = arith.cmpi slt, %692, %693 : vector<16x128xi32>
    %695 = arith.andi %690, %694 : vector<16x128xi1>
    %cst_280 = arith.constant 0.000000e+00 : f32
    %696 = vector.broadcast %cst_280 : f32 to vector<2x128xf32>
    %697 = vector.extract_strided_slice %669 {offsets = [0, 0], sizes = [14, 128], strides = [1, 1]} : vector<16x128xf32> to vector<14x128xf32>
    %698 = tpu.concatenate %696, %697 in 0 : vector<2x128xf32>, vector<14x128xf32> -> vector<16x128xf32>
    %cst_281 = arith.constant 0.000000e+00 : f32
    %699 = vector.broadcast %cst_281 : f32 to vector<16x128xf32>
    %700 = arith.select %695, %698, %699 : vector<16x128xi1>, vector<16x128xf32>
    %c-1_i32_282 = arith.constant -1 : i32
    %701 = vector.broadcast %c-1_i32_282 : i32 to vector<16x128xi32>
    %702 = arith.addi %686, %701 : vector<16x128xi32>
    %c0_i32_283 = arith.constant 0 : i32
    %703 = vector.broadcast %c0_i32_283 : i32 to vector<16x128xi32>
    %704 = arith.cmpi sge, %702, %703 : vector<16x128xi32>
    %c-1_i32_284 = arith.constant -1 : i32
    %705 = vector.broadcast %c-1_i32_284 : i32 to vector<16x128xi32>
    %706 = arith.addi %686, %705 : vector<16x128xi32>
    %c8_i32_285 = arith.constant 8 : i32
    %707 = vector.broadcast %c8_i32_285 : i32 to vector<16x128xi32>
    %708 = arith.cmpi slt, %706, %707 : vector<16x128xi32>
    %709 = arith.andi %704, %708 : vector<16x128xi1>
    %cst_286 = arith.constant 0.000000e+00 : f32
    %710 = vector.broadcast %cst_286 : f32 to vector<1x128xf32>
    %711 = vector.extract_strided_slice %669 {offsets = [0, 0], sizes = [15, 128], strides = [1, 1]} : vector<16x128xf32> to vector<15x128xf32>
    %712 = tpu.concatenate %710, %711 in 0 : vector<1x128xf32>, vector<15x128xf32> -> vector<16x128xf32>
    %cst_287 = arith.constant 0.000000e+00 : f32
    %713 = vector.broadcast %cst_287 : f32 to vector<16x128xf32>
    %714 = arith.select %709, %712, %713 : vector<16x128xi1>, vector<16x128xf32>
    %c1_i32_288 = arith.constant 1 : i32
    %715 = vector.broadcast %c1_i32_288 : i32 to vector<16x128xi32>
    %716 = arith.addi %686, %715 : vector<16x128xi32>
    %c0_i32_289 = arith.constant 0 : i32
    %717 = vector.broadcast %c0_i32_289 : i32 to vector<16x128xi32>
    %718 = arith.cmpi sge, %716, %717 : vector<16x128xi32>
    %c1_i32_290 = arith.constant 1 : i32
    %719 = vector.broadcast %c1_i32_290 : i32 to vector<16x128xi32>
    %720 = arith.addi %686, %719 : vector<16x128xi32>
    %c8_i32_291 = arith.constant 8 : i32
    %721 = vector.broadcast %c8_i32_291 : i32 to vector<16x128xi32>
    %722 = arith.cmpi slt, %720, %721 : vector<16x128xi32>
    %723 = arith.andi %718, %722 : vector<16x128xi1>
    %cst_292 = arith.constant 0.000000e+00 : f32
    %724 = vector.broadcast %cst_292 : f32 to vector<1x128xf32>
    %725 = vector.extract_strided_slice %669 {offsets = [1, 0], sizes = [15, 128], strides = [1, 1]} : vector<16x128xf32> to vector<15x128xf32>
    %726 = tpu.concatenate %725, %724 in 0 : vector<15x128xf32>, vector<1x128xf32> -> vector<16x128xf32>
    %cst_293 = arith.constant 0.000000e+00 : f32
    %727 = vector.broadcast %cst_293 : f32 to vector<16x128xf32>
    %728 = arith.select %723, %726, %727 : vector<16x128xi1>, vector<16x128xf32>
    %c2_i32_294 = arith.constant 2 : i32
    %729 = vector.broadcast %c2_i32_294 : i32 to vector<16x128xi32>
    %730 = arith.addi %686, %729 : vector<16x128xi32>
    %c0_i32_295 = arith.constant 0 : i32
    %731 = vector.broadcast %c0_i32_295 : i32 to vector<16x128xi32>
    %732 = arith.cmpi sge, %730, %731 : vector<16x128xi32>
    %c2_i32_296 = arith.constant 2 : i32
    %733 = vector.broadcast %c2_i32_296 : i32 to vector<16x128xi32>
    %734 = arith.addi %686, %733 : vector<16x128xi32>
    %c8_i32_297 = arith.constant 8 : i32
    %735 = vector.broadcast %c8_i32_297 : i32 to vector<16x128xi32>
    %736 = arith.cmpi slt, %734, %735 : vector<16x128xi32>
    %737 = arith.andi %732, %736 : vector<16x128xi1>
    %cst_298 = arith.constant 0.000000e+00 : f32
    %738 = vector.broadcast %cst_298 : f32 to vector<2x128xf32>
    %739 = vector.extract_strided_slice %669 {offsets = [2, 0], sizes = [14, 128], strides = [1, 1]} : vector<16x128xf32> to vector<14x128xf32>
    %740 = tpu.concatenate %739, %738 in 0 : vector<14x128xf32>, vector<2x128xf32> -> vector<16x128xf32>
    %cst_299 = arith.constant 0.000000e+00 : f32
    %741 = vector.broadcast %cst_299 : f32 to vector<16x128xf32>
    %742 = arith.select %737, %740, %741 : vector<16x128xi1>, vector<16x128xf32>
    %743 = tpu.concatenate %700, %714, %669, %728, %742 in 1 : vector<16x128xf32>, vector<16x128xf32>, vector<16x128xf32>, vector<16x128xf32>, vector<16x128xf32> -> vector<16x640xf32>
    %744 = arith.truncf %743 : vector<16x640xf32> to vector<16x640xbf16>
    %c5120 = arith.constant 5120 : index
    %c0_300 = arith.constant 0 : index
    %745 = vector.load %arg1[%c5120, %c0_300] : memref<7168x128xbf16, #tpu.memory_space<vmem>>, vector<640x128xbf16>
    %cst_301 = arith.constant dense<0.000000e+00> : vector<16x128xf32>
    %746 = tpu.matmul %744, %745, %cst_301 {dimension_numbers = #tpu.dot_dimension_numbers<[1], [0], [0], [1], [0, 0, 1, 1], [], []>} : vector<16x640xbf16>, vector<640x128xbf16>, vector<16x128xf32> -> vector<16x128xf32>
    %c12 = arith.constant 12 : index
    %c0_302 = arith.constant 0 : index
    %747 = vector.load %arg2[%c12, %c0_302] : memref<24x128xf32, #tpu.memory_space<vmem>>, vector<1x128xf32>
    %748 = vector.broadcast %747 : vector<1x128xf32> to vector<16x128xf32>
    %749 = arith.addf %746, %748 : vector<16x128xf32>
    %cst_303 = arith.constant 0.000000e+00 : f32
    %750 = vector.broadcast %cst_303 : f32 to vector<16x128xf32>
    %751 = arith.maximumf %749, %750 : vector<16x128xf32>
    %752 = tpu.iota {dimensions = array<i32: 0>} : vector<16x128xi32>
    %c8_i32_304 = arith.constant 8 : i32
    %c0_i32_305 = arith.constant 0 : i32
    %753 = arith.cmpi eq, %c8_i32_304, %c0_i32_305 : i32
    %c1_i32_306 = arith.constant 1 : i32
    %754 = arith.select %753, %c1_i32_306, %c8_i32_304 : i32
    %755 = vector.broadcast %754 : i32 to vector<16x128xi32>
    %756 = arith.remsi %752, %755 : vector<16x128xi32>
    %c0_i32_307 = arith.constant 0 : i32
    %757 = vector.broadcast %c0_i32_307 : i32 to vector<16x128xi32>
    %758 = arith.cmpi ne, %756, %757 : vector<16x128xi32>
    %c0_i32_308 = arith.constant 0 : i32
    %759 = vector.broadcast %c0_i32_308 : i32 to vector<16x128xi32>
    %760 = arith.cmpi slt, %756, %759 : vector<16x128xi32>
    %c0_i32_309 = arith.constant 0 : i32
    %761 = arith.cmpi slt, %754, %c0_i32_309 : i32
    %762 = vector.broadcast %761 : i1 to vector<16x128xi1>
    %763 = vector.broadcast %762 : vector<16x128xi1> to vector<16x128xi1>
    %764 = arith.xori %760, %763 : vector<16x128xi1>
    %765 = arith.andi %764, %758 : vector<16x128xi1>
    %766 = vector.broadcast %754 : i32 to vector<16x128xi32>
    %767 = arith.addi %756, %766 : vector<16x128xi32>
    %768 = arith.select %765, %767, %756 : vector<16x128xi1>, vector<16x128xi32>
    %c-2_i32_310 = arith.constant -2 : i32
    %769 = vector.broadcast %c-2_i32_310 : i32 to vector<16x128xi32>
    %770 = arith.addi %768, %769 : vector<16x128xi32>
    %c0_i32_311 = arith.constant 0 : i32
    %771 = vector.broadcast %c0_i32_311 : i32 to vector<16x128xi32>
    %772 = arith.cmpi sge, %770, %771 : vector<16x128xi32>
    %c-2_i32_312 = arith.constant -2 : i32
    %773 = vector.broadcast %c-2_i32_312 : i32 to vector<16x128xi32>
    %774 = arith.addi %768, %773 : vector<16x128xi32>
    %c8_i32_313 = arith.constant 8 : i32
    %775 = vector.broadcast %c8_i32_313 : i32 to vector<16x128xi32>
    %776 = arith.cmpi slt, %774, %775 : vector<16x128xi32>
    %777 = arith.andi %772, %776 : vector<16x128xi1>
    %cst_314 = arith.constant 0.000000e+00 : f32
    %778 = vector.broadcast %cst_314 : f32 to vector<2x128xf32>
    %779 = vector.extract_strided_slice %751 {offsets = [0, 0], sizes = [14, 128], strides = [1, 1]} : vector<16x128xf32> to vector<14x128xf32>
    %780 = tpu.concatenate %778, %779 in 0 : vector<2x128xf32>, vector<14x128xf32> -> vector<16x128xf32>
    %cst_315 = arith.constant 0.000000e+00 : f32
    %781 = vector.broadcast %cst_315 : f32 to vector<16x128xf32>
    %782 = arith.select %777, %780, %781 : vector<16x128xi1>, vector<16x128xf32>
    %c-1_i32_316 = arith.constant -1 : i32
    %783 = vector.broadcast %c-1_i32_316 : i32 to vector<16x128xi32>
    %784 = arith.addi %768, %783 : vector<16x128xi32>
    %c0_i32_317 = arith.constant 0 : i32
    %785 = vector.broadcast %c0_i32_317 : i32 to vector<16x128xi32>
    %786 = arith.cmpi sge, %784, %785 : vector<16x128xi32>
    %c-1_i32_318 = arith.constant -1 : i32
    %787 = vector.broadcast %c-1_i32_318 : i32 to vector<16x128xi32>
    %788 = arith.addi %768, %787 : vector<16x128xi32>
    %c8_i32_319 = arith.constant 8 : i32
    %789 = vector.broadcast %c8_i32_319 : i32 to vector<16x128xi32>
    %790 = arith.cmpi slt, %788, %789 : vector<16x128xi32>
    %791 = arith.andi %786, %790 : vector<16x128xi1>
    %cst_320 = arith.constant 0.000000e+00 : f32
    %792 = vector.broadcast %cst_320 : f32 to vector<1x128xf32>
    %793 = vector.extract_strided_slice %751 {offsets = [0, 0], sizes = [15, 128], strides = [1, 1]} : vector<16x128xf32> to vector<15x128xf32>
    %794 = tpu.concatenate %792, %793 in 0 : vector<1x128xf32>, vector<15x128xf32> -> vector<16x128xf32>
    %cst_321 = arith.constant 0.000000e+00 : f32
    %795 = vector.broadcast %cst_321 : f32 to vector<16x128xf32>
    %796 = arith.select %791, %794, %795 : vector<16x128xi1>, vector<16x128xf32>
    %c1_i32_322 = arith.constant 1 : i32
    %797 = vector.broadcast %c1_i32_322 : i32 to vector<16x128xi32>
    %798 = arith.addi %768, %797 : vector<16x128xi32>
    %c0_i32_323 = arith.constant 0 : i32
    %799 = vector.broadcast %c0_i32_323 : i32 to vector<16x128xi32>
    %800 = arith.cmpi sge, %798, %799 : vector<16x128xi32>
    %c1_i32_324 = arith.constant 1 : i32
    %801 = vector.broadcast %c1_i32_324 : i32 to vector<16x128xi32>
    %802 = arith.addi %768, %801 : vector<16x128xi32>
    %c8_i32_325 = arith.constant 8 : i32
    %803 = vector.broadcast %c8_i32_325 : i32 to vector<16x128xi32>
    %804 = arith.cmpi slt, %802, %803 : vector<16x128xi32>
    %805 = arith.andi %800, %804 : vector<16x128xi1>
    %cst_326 = arith.constant 0.000000e+00 : f32
    %806 = vector.broadcast %cst_326 : f32 to vector<1x128xf32>
    %807 = vector.extract_strided_slice %751 {offsets = [1, 0], sizes = [15, 128], strides = [1, 1]} : vector<16x128xf32> to vector<15x128xf32>
    %808 = tpu.concatenate %807, %806 in 0 : vector<15x128xf32>, vector<1x128xf32> -> vector<16x128xf32>
    %cst_327 = arith.constant 0.000000e+00 : f32
    %809 = vector.broadcast %cst_327 : f32 to vector<16x128xf32>
    %810 = arith.select %805, %808, %809 : vector<16x128xi1>, vector<16x128xf32>
    %c2_i32_328 = arith.constant 2 : i32
    %811 = vector.broadcast %c2_i32_328 : i32 to vector<16x128xi32>
    %812 = arith.addi %768, %811 : vector<16x128xi32>
    %c0_i32_329 = arith.constant 0 : i32
    %813 = vector.broadcast %c0_i32_329 : i32 to vector<16x128xi32>
    %814 = arith.cmpi sge, %812, %813 : vector<16x128xi32>
    %c2_i32_330 = arith.constant 2 : i32
    %815 = vector.broadcast %c2_i32_330 : i32 to vector<16x128xi32>
    %816 = arith.addi %768, %815 : vector<16x128xi32>
    %c8_i32_331 = arith.constant 8 : i32
    %817 = vector.broadcast %c8_i32_331 : i32 to vector<16x128xi32>
    %818 = arith.cmpi slt, %816, %817 : vector<16x128xi32>
    %819 = arith.andi %814, %818 : vector<16x128xi1>
    %cst_332 = arith.constant 0.000000e+00 : f32
    %820 = vector.broadcast %cst_332 : f32 to vector<2x128xf32>
    %821 = vector.extract_strided_slice %751 {offsets = [2, 0], sizes = [14, 128], strides = [1, 1]} : vector<16x128xf32> to vector<14x128xf32>
    %822 = tpu.concatenate %821, %820 in 0 : vector<14x128xf32>, vector<2x128xf32> -> vector<16x128xf32>
    %cst_333 = arith.constant 0.000000e+00 : f32
    %823 = vector.broadcast %cst_333 : f32 to vector<16x128xf32>
    %824 = arith.select %819, %822, %823 : vector<16x128xi1>, vector<16x128xf32>
    %825 = tpu.concatenate %782, %796, %751, %810, %824 in 1 : vector<16x128xf32>, vector<16x128xf32>, vector<16x128xf32>, vector<16x128xf32>, vector<16x128xf32> -> vector<16x640xf32>
    %826 = arith.truncf %825 : vector<16x640xf32> to vector<16x640xbf16>
    %c5760 = arith.constant 5760 : index
    %c0_334 = arith.constant 0 : index
    %827 = vector.load %arg1[%c5760, %c0_334] : memref<7168x128xbf16, #tpu.memory_space<vmem>>, vector<640x128xbf16>
    %cst_335 = arith.constant dense<0.000000e+00> : vector<16x128xf32>
    %828 = tpu.matmul %826, %827, %cst_335 {dimension_numbers = #tpu.dot_dimension_numbers<[1], [0], [0], [1], [0, 0, 1, 1], [], []>} : vector<16x640xbf16>, vector<640x128xbf16>, vector<16x128xf32> -> vector<16x128xf32>
    %c13 = arith.constant 13 : index
    %c0_336 = arith.constant 0 : index
    %829 = vector.load %arg2[%c13, %c0_336] : memref<24x128xf32, #tpu.memory_space<vmem>>, vector<1x128xf32>
    %830 = vector.broadcast %829 : vector<1x128xf32> to vector<16x128xf32>
    %831 = arith.addf %828, %830 : vector<16x128xf32>
    %cst_337 = arith.constant 0.000000e+00 : f32
    %832 = vector.broadcast %cst_337 : f32 to vector<16x128xf32>
    %833 = arith.maximumf %831, %832 : vector<16x128xf32>
    %834 = arith.addf %833, %587 : vector<16x128xf32>
    %835 = vector.shape_cast %834 : vector<16x128xf32> to vector<8x2x128xf32>
    %cst_338 = arith.constant dense<0xFF800000> : vector<8x128xf32>
    %836 = vector.multi_reduction <maximumf>, %835, %cst_338 [1] : vector<8x2x128xf32> to vector<8x128xf32>
    %837 = vector.shape_cast %836 : vector<8x128xf32> to vector<2x4x128xf32>
    %838 = vector.extract_strided_slice %837 {offsets = [0, 0, 0], sizes = [2, 1, 128], strides = [1, 1, 1]} : vector<2x4x128xf32> to vector<2x1x128xf32>
    %839 = vector.shape_cast %838 : vector<2x1x128xf32> to vector<2x128xf32>
    %840 = vector.extract_strided_slice %837 {offsets = [0, 1, 0], sizes = [2, 1, 128], strides = [1, 1, 1]} : vector<2x4x128xf32> to vector<2x1x128xf32>
    %841 = vector.shape_cast %840 : vector<2x1x128xf32> to vector<2x128xf32>
    %842 = vector.extract_strided_slice %837 {offsets = [0, 2, 0], sizes = [2, 1, 128], strides = [1, 1, 1]} : vector<2x4x128xf32> to vector<2x1x128xf32>
    %843 = vector.shape_cast %842 : vector<2x1x128xf32> to vector<2x128xf32>
    %844 = vector.extract_strided_slice %837 {offsets = [0, 3, 0], sizes = [2, 1, 128], strides = [1, 1, 1]} : vector<2x4x128xf32> to vector<2x1x128xf32>
    %845 = vector.shape_cast %844 : vector<2x1x128xf32> to vector<2x128xf32>
    %846 = tpu.concatenate %839, %841, %843, %845 in 1 : vector<2x128xf32>, vector<2x128xf32>, vector<2x128xf32>, vector<2x128xf32> -> vector<2x512xf32>
    %847 = arith.truncf %846 : vector<2x512xf32> to vector<2x512xbf16>
    %c6400 = arith.constant 6400 : index
    %c0_339 = arith.constant 0 : index
    %848 = vector.load %arg1[%c6400, %c0_339] : memref<7168x128xbf16, #tpu.memory_space<vmem>>, vector<512x128xbf16>
    %cst_340 = arith.constant dense<0.000000e+00> : vector<2x128xf32>
    %849 = tpu.matmul %847, %848, %cst_340 {dimension_numbers = #tpu.dot_dimension_numbers<[1], [0], [0], [1], [0, 0, 1, 1], [], []>} : vector<2x512xbf16>, vector<512x128xbf16>, vector<2x128xf32> -> vector<2x128xf32>
    %c14 = arith.constant 14 : index
    %c0_341 = arith.constant 0 : index
    %850 = vector.load %arg2[%c14, %c0_341] : memref<24x128xf32, #tpu.memory_space<vmem>>, vector<1x128xf32>
    %851 = vector.broadcast %850 : vector<1x128xf32> to vector<2x128xf32>
    %852 = arith.addf %849, %851 : vector<2x128xf32>
    %cst_342 = arith.constant 0.000000e+00 : f32
    %853 = vector.broadcast %cst_342 : f32 to vector<2x128xf32>
    %854 = arith.maximumf %852, %853 : vector<2x128xf32>
    %855 = arith.truncf %854 : vector<2x128xf32> to vector<2x128xbf16>
    %c6912 = arith.constant 6912 : index
    %c0_343 = arith.constant 0 : index
    %856 = vector.load %arg1[%c6912, %c0_343] : memref<7168x128xbf16, #tpu.memory_space<vmem>>, vector<128x128xbf16>
    %cst_344 = arith.constant dense<0.000000e+00> : vector<2x128xf32>
    %857 = tpu.matmul %855, %856, %cst_344 {dimension_numbers = #tpu.dot_dimension_numbers<[1], [0], [0], [1], [0, 0, 1, 1], [], []>} : vector<2x128xbf16>, vector<128x128xbf16>, vector<2x128xf32> -> vector<2x128xf32>
    %c15 = arith.constant 15 : index
    %c0_345 = arith.constant 0 : index
    %858 = vector.load %arg2[%c15, %c0_345] : memref<24x128xf32, #tpu.memory_space<vmem>>, vector<1x128xf32>
    %859 = vector.broadcast %858 : vector<1x128xf32> to vector<2x128xf32>
    %860 = arith.addf %857, %859 : vector<2x128xf32>
    %cst_346 = arith.constant 0.000000e+00 : f32
    %861 = vector.broadcast %cst_346 : f32 to vector<2x128xf32>
    %862 = arith.maximumf %860, %861 : vector<2x128xf32>
    %863 = arith.truncf %862 : vector<2x128xf32> to vector<2x128xbf16>
    %c7040 = arith.constant 7040 : index
    %c0_347 = arith.constant 0 : index
    %864 = vector.load %arg1[%c7040, %c0_347] : memref<7168x128xbf16, #tpu.memory_space<vmem>>, vector<128x128xbf16>
    %cst_348 = arith.constant dense<0.000000e+00> : vector<2x128xf32>
    %865 = tpu.matmul %863, %864, %cst_348 {dimension_numbers = #tpu.dot_dimension_numbers<[1], [0], [0], [1], [0, 0, 1, 1], [], []>} : vector<2x128xbf16>, vector<128x128xbf16>, vector<2x128xf32> -> vector<2x128xf32>
    %c16 = arith.constant 16 : index
    %c0_349 = arith.constant 0 : index
    %866 = vector.load %arg2[%c16, %c0_349] : memref<24x128xf32, #tpu.memory_space<vmem>>, vector<1x128xf32>
    %867 = vector.broadcast %866 : vector<1x128xf32> to vector<2x128xf32>
    %868 = arith.addf %865, %867 : vector<2x128xf32>
    %cst_350 = arith.constant 0.000000e+00 : f32
    %869 = vector.broadcast %cst_350 : f32 to vector<2x128xf32>
    %870 = arith.maximumf %868, %869 : vector<2x128xf32>
    %c0_351 = arith.constant 0 : index
    %c0_352 = arith.constant 0 : index
    %871 = vector.load %arg3[%c0_351, %c0_352] : memref<2x128xf32, #tpu.memory_space<vmem>>, vector<2x128xf32>
    tpu.vector_store %arg3[%c0_351, %c0_352], %870 {strides = array<i32>} : memref<2x128xf32, #tpu.memory_space<vmem>>, vector<2x128xf32>,
    return
  }
}

</mosaic_0001>

<llo_original>
// kernel: tpu_custom_call.1
$region0: #{tpu_custom_call.1}
  #allocation0 [shape = 'u32[]', space=smem, size = 0x4, offset = 0x4, fixed_abs, tag = 'smem constant byte address 0x4 - core index']
  #allocation1 [shape = 'u32[72,128]{1,0:T(1,128)}', space=vmem, size = 0x9000, scoped, tag = 'internal scratch']
  %s0 = inlined_call_operand.hbm [shape: f32[32,128], index: 0, kind: input, shape index: {}]
  %s1 = inlined_call_operand.hbm [shape: bf16[7168,128], index: 1, kind: input, shape index: {}]
  %s2 = inlined_call_operand.hbm [shape: f32[24,128], index: 2, kind: input, shape index: {}]
  %s3 = inlined_call_operand.hbm [shape: f32[2,128], index: 3, kind: output, shape index: {}]
  %s4 = sld [smem:[#allocation0]]
  $region34: #{tpu_custom_call.1} parent=0
    _
  %s6 = ssub.s32 1, %s4
  %s7 = scalar_select 0, %s6, %s4
  $region1: #{tpu_custom_call.1} parent=0
    #allocation2 [shape = 'u8[16384]{0}', space=vmem, size = 0x4000, scoped, tag = 'input window, operand 0, single buffered']
    #allocation3 [shape = 's32[1]{0}', space=sflag, size = 0x4, scoped, tag = 'scoped memory for tpu_custom_call.1']
    #allocation4 [shape = 's32[1]{0}', space=sflag, size = 0x4, scoped, tag = 'scoped memory for tpu_custom_call.1']
    #allocation5 [shape = 'u8[1835008]{0}', space=vmem, size = 0x1c0000, scoped, tag = 'input window, operand 1, single buffered']
    #allocation6 [shape = 's32[1]{0}', space=sflag, size = 0x4, scoped, tag = 'scoped memory for tpu_custom_call.1']
    #allocation7 [shape = 'u8[12288]{0}', space=vmem, size = 0x3000, scoped, tag = 'input window, operand 2, single buffered']
    #allocation8 [shape = 'u8[1024]{0}', space=vmem, size = 0x400, scoped, tag = 'output window, operand 0, single buffered']
    %8 = vsyncpa [#allocation3], 0
    %9 = vsyncpa [#allocation6], 0
    %10 = vsyncpa [#allocation4], 0
    // Predicated region
    $region2: #{tpu_custom_call.1} parent=1 // pred_check
      _
    $region3: #{tpu_custom_call.1} parent=1 // pred_check_branch
      %12 = sbr.rel (0) target = $region5
    $region4: #{tpu_custom_call.1} parent=1 // pred_region
      %14 = vsyncadd [#allocation3], 0
      %s15 = sshll.u32 %s0, 4
      %s16 = int_to_ptr.hbm [resolvable:$true] %s15
      %s17 = sshll.u32 [#allocation2], 4
      %s18 = int_to_ptr.vmem [resolvable:$true] %s17
      %23 = dma.hbm_to_vmem [thread:$0]  %s16, 512, %s18, [#allocation3], 128, 128, 8
    $region5: #{tpu_custom_call.1} parent=1 // pred_fallthru
      _
    // Predicated region
    $region6: #{tpu_custom_call.1} parent=1 // pred_check
      _
    $region7: #{tpu_custom_call.1} parent=1 // pred_check_branch
      %25 = sbr.rel (0) target = $region9
    $region8: #{tpu_custom_call.1} parent=1 // pred_region
      %27 = vsyncadd [#allocation6], 0
      %s28 = sshll.u32 %s1, 4
      %s29 = int_to_ptr.hbm [resolvable:$true] %s28
      %s30 = sshll.u32 [#allocation5], 4
      %s31 = int_to_ptr.vmem [resolvable:$true] %s30
      %36 = dma.hbm_to_vmem [thread:$0]  %s29, 57344, %s31, [#allocation6], 64, 64, 4
    $region9: #{tpu_custom_call.1} parent=1 // pred_fallthru
      _
    // Predicated region
    $region10: #{tpu_custom_call.1} parent=1 // pred_check
      _
    $region11: #{tpu_custom_call.1} parent=1 // pred_check_branch
      %38 = sbr.rel (0) target = $region13
    $region12: #{tpu_custom_call.1} parent=1 // pred_region
      %40 = vsyncadd [#allocation6], 0
      %s41 = sshll.u32 %s2, 4
      %s42 = int_to_ptr.hbm [resolvable:$true] %s41
      %s43 = sshll.u32 [#allocation7], 4
      %s44 = int_to_ptr.vmem [resolvable:$true] %s43
      %49 = dma.hbm_to_vmem [thread:$0]  %s42, 384, %s44, [#allocation6], 128, 128, 8
    $region13: #{tpu_custom_call.1} parent=1 // pred_fallthru
      _
    // Predicated region
    $region14: #{tpu_custom_call.1} parent=1 // pred_check
      _
    $region15: #{tpu_custom_call.1} parent=1 // pred_check_branch
      %51 = sbr.rel (0) target = $region17
    $region16: #{tpu_custom_call.1} parent=1 // pred_region
      %53 = dma.done [#allocation3], 512
    $region17: #{tpu_custom_call.1} parent=1 // pred_fallthru
      _
    // Predicated region
    $region18: #{tpu_custom_call.1} parent=1 // pred_check
      _
    $region19: #{tpu_custom_call.1} parent=1 // pred_check_branch
      %55 = sbr.rel (0) target = $region21
    $region20: #{tpu_custom_call.1} parent=1 // pred_region
      %57 = dma.done [#allocation6], 57344
    $region21: #{tpu_custom_call.1} parent=1 // pred_fallthru
      _
    // Predicated region
    $region22: #{tpu_custom_call.1} parent=1 // pred_check
      _
    $region23: #{tpu_custom_call.1} parent=1 // pred_check_branch
      %59 = sbr.rel (0) target = $region25
    $region24: #{tpu_custom_call.1} parent=1 // pred_region
      %61 = dma.done [#allocation6], 384
    $region25: #{tpu_custom_call.1} parent=1 // pred_fallthru
      _
    %v62 = vld [vmem:[#allocation2] sm:$0xff]
    %v63 = vld [vmem:[#allocation2 + $0x8] sm:$0xff]
    %v64 = vld [vmem:[#allocation2 + $0x10] sm:$0xff]
    %v65 = vld [vmem:[#allocation2 + $0x18] sm:$0xff]
    %v66 = vlaneseq
    %v67 = vshrl.u32 %v66, 7
    %v68 = vadd.s32 %v67, 8
    %v69 = vadd.s32 %v67, 16
    %v70 = vadd.s32 %v67, 24
    %vm71 = vcmp.lt.s32.totalorder %v67, 0
    %v72 = vsub.s32 0, %v67
    %v73 = vsel %vm71, %v72, %v67
    %v74 = vshrl.u32 %v73, 4
    %v75 = vand.u32 %v73, 15
    %v76 = vsub.s32 0, %v75
    %v77 = vsel %vm71, %v76, %v75
    %vm78 = vcmp.lt.s32.totalorder %v68, 0
    %v79 = vsub.s32 0, %v68
    %v80 = vsel %vm78, %v79, %v68
    %v81 = vshrl.u32 %v80, 4
    %v82 = vand.u32 %v80, 15
    %v83 = vsub.s32 0, %v82
    %v84 = vsel %vm78, %v83, %v82
    %vm85 = vcmp.lt.s32.totalorder %v69, 0
    %v86 = vsub.s32 0, %v69
    %v87 = vsel %vm85, %v86, %v69
    %v88 = vshrl.u32 %v87, 4
    %v89 = vand.u32 %v87, 15
    %v90 = vsub.s32 0, %v89
    %v91 = vsel %vm85, %v90, %v89
    %vm92 = vcmp.lt.s32.totalorder %v70, 0
    %v93 = vsub.s32 0, %v70
    %v94 = vsel %vm92, %v93, %v70
    %v95 = vshrl.u32 %v94, 4
    %v96 = vand.u32 %v94, 15
    %v97 = vsub.s32 0, %v96
    %v98 = vsel %vm92, %v97, %v96
    %vm99 = vcmp.ne.s32.totalorder %v77, 0
    %vm100 = vcmp.ne.s32.totalorder %v84, 0
    %vm101 = vcmp.ne.s32.totalorder %v91, 0
    %vm102 = vcmp.ne.s32.totalorder %v98, 0
    %vm103 = vcmp.lt.s32.totalorder %v77, 0
    %vm104 = vcmp.lt.s32.totalorder %v84, 0
    %vm105 = vcmp.lt.s32.totalorder %v91, 0
    %vm106 = vcmp.lt.s32.totalorder %v98, 0
    %vm107 = vmand %vm103, %vm99
    %vm108 = vmand %vm104, %vm100
    %vm109 = vmand %vm105, %vm101
    %vm110 = vmand %vm106, %vm102
    %v111 = vadd.s32 %v77, 16
    %v112 = vadd.s32 %v84, 16
    %v113 = vadd.s32 %v91, 16
    %v114 = vadd.s32 %v98, 16
    %v115 = vsel %vm107, %v111, %v77
    %v116 = vsel %vm108, %v112, %v84
    %v117 = vsel %vm109, %v113, %v91
    %v118 = vsel %vm110, %v114, %v98
    %v119 = vadd.s32 %v115, 4294967295
    %v120 = vadd.s32 %v116, 4294967295
    %v121 = vadd.s32 %v117, 4294967295
    %v122 = vadd.s32 %v118, 4294967295
    %vm123 = vcmp.ge.s32.totalorder %v119, 0
    %vm124 = vcmp.ge.s32.totalorder %v120, 0
    %vm125 = vcmp.ge.s32.totalorder %v121, 0
    %vm126 = vcmp.ge.s32.totalorder %v122, 0
    %vm127 = vcmp.lt.s32.totalorder %v119, 16
    %vm128 = vcmp.lt.s32.totalorder %v120, 16
    %vm129 = vcmp.lt.s32.totalorder %v121, 16
    %vm130 = vcmp.lt.s32.totalorder %v122, 16
    %vm131 = vmand %vm123, %vm127
    %vm132 = vmand %vm124, %vm128
    %vm133 = vmand %vm125, %vm129
    %vm134 = vmand %vm126, %vm130
    %vm139 = vcmask 1040384
    %v140 = vrot.slane %v62, 7
    %v141 = vrot.slane %v63, 7
    %v142 = vsel %vm139, %v140, %v141
    %v143 = vrot.slane %v64, 7
    %v144 = vsel %vm139, %v141, %v143
    %v145 = vrot.slane %v65, 7
    %v146 = vsel %vm139, %v143, %v145
    %v151 = vsel %vm139, 0.0, %v140
    %v152 = vsel %vm131, %v151, 0.0
    %v153 = vsel %vm132, %v142, 0.0
    %v154 = vsel %vm133, %v144, 0.0
    %v155 = vsel %vm134, %v146, 0.0
    %v156 = vadd.s32 %v115, 1
    %v157 = vadd.s32 %v116, 1
    %v158 = vadd.s32 %v117, 1
    %v159 = vadd.s32 %v118, 1
    %vm160 = vcmp.ge.s32.totalorder %v156, 0
    %vm161 = vcmp.ge.s32.totalorder %v157, 0
    %vm162 = vcmp.ge.s32.totalorder %v158, 0
    %vm163 = vcmp.ge.s32.totalorder %v159, 0
    %vm164 = vcmp.lt.s32.totalorder %v156, 16
    %vm165 = vcmp.lt.s32.totalorder %v157, 16
    %vm166 = vcmp.lt.s32.totalorder %v158, 16
    %vm167 = vcmp.lt.s32.totalorder %v159, 16
    %vm168 = vmand %vm160, %vm164
    %vm169 = vmand %vm161, %vm165
    %vm170 = vmand %vm162, %vm166
    %vm171 = vmand %vm163, %vm167
    %vm172 = vcmask 1046528
    %v173 = vrot.slane %v62, 1
    %v174 = vrot.slane %v63, 1
    %v175 = vsel %vm172, %v173, %v174
    %v176 = vrot.slane %v64, 1
    %v177 = vsel %vm172, %v174, %v176
    %v178 = vrot.slane %v65, 1
    %v179 = vsel %vm172, %v176, %v178
    %v184 = vsel %vm172, %v178, 0.0
    %v185 = vsel %vm168, %v175, 0.0
    %v186 = vsel %vm169, %v177, 0.0
    %v187 = vsel %vm170, %v179, 0.0
    %v188 = vsel %vm171, %v184, 0.0
    %v189 = vpack.c.bf16 %v153, %v152
    %v190 = vpack.c.bf16 %v63, %v62
    %v191 = vpack.c.bf16 %v186, %v185
    %v192 = vpack.c.bf16 %v155, %v154
    %v193 = vpack.c.bf16 %v65, %v64
    %v194 = vpack.c.bf16 %v188, %v187
    %v195 = vld [vmem:[#allocation5] sm:$0xf]
    %v196 = vld [vmem:[#allocation5 + $0x4] sm:$0xf]
    %v197 = vld [vmem:[#allocation5 + $0x8] sm:$0xf]
    %v198 = vld [vmem:[#allocation5 + $0xc] sm:$0xf]
    %v199 = vld [vmem:[#allocation5 + $0x10] sm:$0xf]
    %v200 = vld [vmem:[#allocation5 + $0x14] sm:$0xf]
    %v201 = vld [vmem:[#allocation5 + $0x18] sm:$0xf]
    %v202 = vld [vmem:[#allocation5 + $0x1c] sm:$0xf]
    %v203 = vld [vmem:[#allocation5 + $0x20] sm:$0xf]
    %v204 = vld [vmem:[#allocation5 + $0x24] sm:$0xf]
    %v205 = vld [vmem:[#allocation5 + $0x28] sm:$0xf]
    %v206 = vld [vmem:[#allocation5 + $0x2c] sm:$0xf]
    %v207 = vld [vmem:[#allocation5 + $0x30] sm:$0xf]
    %v208 = vld [vmem:[#allocation5 + $0x34] sm:$0xf]
    %v209 = vld [vmem:[#allocation5 + $0x38] sm:$0xf]
    %v210 = vld [vmem:[#allocation5 + $0x3c] sm:$0xf]
    %v211 = vld [vmem:[#allocation5 + $0x40] sm:$0xf]
    %v212 = vld [vmem:[#allocation5 + $0x44] sm:$0xf]
    %v213 = vld [vmem:[#allocation5 + $0x48] sm:$0xf]
    %v214 = vld [vmem:[#allocation5 + $0x4c] sm:$0xf]
    %v215 = vld [vmem:[#allocation5 + $0x50] sm:$0xf]
    %v216 = vld [vmem:[#allocation5 + $0x54] sm:$0xf]
    %v217 = vld [vmem:[#allocation5 + $0x58] sm:$0xf]
    %v218 = vld [vmem:[#allocation5 + $0x5c] sm:$0xf]
    %v219 = vld [vmem:[#allocation5 + $0x60] sm:$0xf]
    %v220 = vld [vmem:[#allocation5 + $0x64] sm:$0xf]
    %v221 = vld [vmem:[#allocation5 + $0x68] sm:$0xf]
    %v222 = vld [vmem:[#allocation5 + $0x6c] sm:$0xf]
    %v223 = vld [vmem:[#allocation5 + $0x70] sm:$0xf]
    %v224 = vld [vmem:[#allocation5 + $0x74] sm:$0xf]
    %v225 = vld [vmem:[#allocation5 + $0x78] sm:$0xf]
    %v226 = vld [vmem:[#allocation5 + $0x7c] sm:$0xf]
    %v227 = vld [vmem:[#allocation5 + $0x80] sm:$0xf]
    %v228 = vld [vmem:[#allocation5 + $0x84] sm:$0xf]
    %v229 = vld [vmem:[#allocation5 + $0x88] sm:$0xf]
    %v230 = vld [vmem:[#allocation5 + $0x8c] sm:$0xf]
    %v231 = vld [vmem:[#allocation5 + $0x90] sm:$0xf]
    %v232 = vld [vmem:[#allocation5 + $0x94] sm:$0xf]
    %v233 = vld [vmem:[#allocation5 + $0x98] sm:$0xf]
    %v234 = vld [vmem:[#allocation5 + $0x9c] sm:$0xf]
    %v235 = vld [vmem:[#allocation5 + $0xa0] sm:$0xf]
    %v236 = vld [vmem:[#allocation5 + $0xa4] sm:$0xf]
    %v237 = vld [vmem:[#allocation5 + $0xa8] sm:$0xf]
    %v238 = vld [vmem:[#allocation5 + $0xac] sm:$0xf]
    %v239 = vld [vmem:[#allocation5 + $0xb0] sm:$0xf]
    %v240 = vld [vmem:[#allocation5 + $0xb4] sm:$0xf]
    %v241 = vld [vmem:[#allocation5 + $0xb8] sm:$0xf]
    %v242 = vld [vmem:[#allocation5 + $0xbc] sm:$0xf]
    %v243 = vld [vmem:[#allocation7] sm:$0x1]
    %v244 = vperm.slane %v243, 0
    %v293 = vunpack.c.l.b16 %v195
    %v294 = vunpack.c.l.b16 %v196
    %v295 = vunpack.c.l.b16 %v197
    %v296 = vunpack.c.l.b16 %v198
    %v297 = vunpack.c.l.b16 %v199
    %v298 = vunpack.c.l.b16 %v200
    %v299 = vunpack.c.l.b16 %v201
    %v300 = vunpack.c.l.b16 %v202
    %v301 = vunpack.c.l.b16 %v203
    %v302 = vunpack.c.l.b16 %v204
    %v303 = vunpack.c.l.b16 %v205
    %v304 = vunpack.c.l.b16 %v206
    %v305 = vunpack.c.l.b16 %v207
    %v306 = vunpack.c.l.b16 %v208
    %v307 = vunpack.c.l.b16 %v209
    %v308 = vunpack.c.l.b16 %v210
    %v309 = vunpack.c.l.b16 %v211
    %v310 = vunpack.c.l.b16 %v212
    %v311 = vunpack.c.l.b16 %v213
    %v312 = vunpack.c.l.b16 %v214
    %v313 = vunpack.c.l.b16 %v215
    %v314 = vunpack.c.l.b16 %v216
    %v315 = vunpack.c.l.b16 %v217
    %v316 = vunpack.c.l.b16 %v218
    %v317 = vunpack.c.l.b16 %v219
    %v318 = vunpack.c.l.b16 %v220
    %v319 = vunpack.c.l.b16 %v221
    %v320 = vunpack.c.l.b16 %v222
    %v321 = vunpack.c.l.b16 %v223
    %v322 = vunpack.c.l.b16 %v224
    %v323 = vunpack.c.l.b16 %v225
    %v324 = vunpack.c.l.b16 %v226
    %v325 = vunpack.c.l.b16 %v227
    %v326 = vunpack.c.l.b16 %v228
    %v327 = vunpack.c.l.b16 %v229
    %v328 = vunpack.c.l.b16 %v230
    %v329 = vunpack.c.l.b16 %v231
    %v330 = vunpack.c.l.b16 %v232
    %v331 = vunpack.c.l.b16 %v233
    %v332 = vunpack.c.l.b16 %v234
    %v333 = vunpack.c.l.b16 %v235
    %v334 = vunpack.c.l.b16 %v236
    %v335 = vunpack.c.l.b16 %v237
    %v336 = vunpack.c.l.b16 %v238
    %v337 = vunpack.c.l.b16 %v239
    %v338 = vunpack.c.l.b16 %v240
    %v339 = vunpack.c.l.b16 %v241
    %v340 = vunpack.c.l.b16 %v242
    %v341 = vpack.c.b16 %v294, %v293
    %v342 = vpack.c.b16 %v296, %v295
    %v343 = vpack.c.b16 %v298, %v297
    %v344 = vpack.c.b16 %v300, %v299
    %v345 = vpack.c.b16 %v302, %v301
    %v346 = vpack.c.b16 %v304, %v303
    %v347 = vpack.c.b16 %v306, %v305
    %v348 = vpack.c.b16 %v308, %v307
    %v349 = vpack.c.b16 %v310, %v309
    %v350 = vpack.c.b16 %v312, %v311
    %v351 = vpack.c.b16 %v314, %v313
    %v352 = vpack.c.b16 %v316, %v315
    %v353 = vpack.c.b16 %v318, %v317
    %v354 = vpack.c.b16 %v320, %v319
    %v355 = vpack.c.b16 %v322, %v321
    %v356 = vpack.c.b16 %v324, %v323
    %v357 = vpack.c.b16 %v326, %v325
    %v358 = vpack.c.b16 %v328, %v327
    %v359 = vpack.c.b16 %v330, %v329
    %v360 = vpack.c.b16 %v332, %v331
    %v361 = vpack.c.b16 %v334, %v333
    %v362 = vpack.c.b16 %v336, %v335
    %v363 = vpack.c.b16 %v338, %v337
    %v364 = vpack.c.b16 %v340, %v339
    %389 = vmatpush.bf16.msra.mxu0 %v348
    %390 = vmatpush.bf16.msra.mxu0 %v347
    %391 = vmatpush.bf16.msra.mxu0 %v346
    %392 = vmatpush.bf16.msra.mxu0 %v345
    %393 = vmatpush.bf16.msra.mxu0 %v344
    %394 = vmatpush.bf16.msra.mxu0 %v343
    %395 = vmatpush.bf16.msra.mxu0 %v342
    %396 = vmatpush.bf16.msra.mxu0 %v341
    %397 = vmatmul.bf16.gmra.mxu0 %v189
    %v398 = vpop.f32.mrf.mxu0
    %v399 = vadd.f32 %v244, %v398
    %v400 = vpop.f32.mrf.mxu0
    %v401 = vadd.f32 %v244, %v400
    %402 = vmatmul.bf16.gmra.mxu0 %v192
    %v403 = vpop.f32.mrf.mxu0
    %v404 = vadd.f32 %v244, %v403
    %v405 = vpop.f32.mrf.mxu0
    %v406 = vadd.f32 %v244, %v405
    %407 = vdwg.mxu0
    %408 = vmatpush.bf16.msra.mxu0 %v356
    %409 = vmatpush.bf16.msra.mxu0 %v355
    %410 = vmatpush.bf16.msra.mxu0 %v354
    %411 = vmatpush.bf16.msra.mxu0 %v353
    %412 = vmatpush.bf16.msra.mxu0 %v352
    %413 = vmatpush.bf16.msra.mxu0 %v351
    %414 = vmatpush.bf16.msra.mxu0 %v350
    %415 = vmatpush.bf16.msra.mxu0 %v349
    %416 = vmatmul.bf16.gmra.mxu0 %v190
    %v417 = vpop.f32.mrf.mxu0
    %v418 = vadd.f32 %v399, %v417
    %v419 = vpop.f32.mrf.mxu0
    %v420 = vadd.f32 %v401, %v419
    %421 = vmatmul.bf16.gmra.mxu0 %v193
    %v422 = vpop.f32.mrf.mxu0
    %v423 = vadd.f32 %v404, %v422
    %v424 = vpop.f32.mrf.mxu0
    %v425 = vadd.f32 %v406, %v424
    %426 = vdwg.mxu0
    %427 = vmatpush.bf16.msra.mxu0 %v364
    %428 = vmatpush.bf16.msra.mxu0 %v363
    %429 = vmatpush.bf16.msra.mxu0 %v362
    %430 = vmatpush.bf16.msra.mxu0 %v361
    %431 = vmatpush.bf16.msra.mxu0 %v360
    %432 = vmatpush.bf16.msra.mxu0 %v359
    %433 = vmatpush.bf16.msra.mxu0 %v358
    %434 = vmatpush.bf16.msra.mxu0 %v357
    %435 = vmatmul.bf16.gmra.mxu0 %v191
    %v436 = vpop.f32.mrf.mxu0
    %v437 = vadd.f32 %v418, %v436
    %v438 = vpop.f32.mrf.mxu0
    %v439 = vadd.f32 %v420, %v438
    %440 = vmatmul.bf16.gmra.mxu0 %v194
    %v441 = vpop.f32.mrf.mxu0
    %v442 = vadd.f32 %v423, %v441
    %v443 = vpop.f32.mrf.mxu0
    %v444 = vadd.f32 %v425, %v443
    %445 = vdwg.mxu0
    %v446 = vmax.f32 %v437, 0.0
    %v447 = vmax.f32 %v439, 0.0
    %v448 = vmax.f32 %v442, 0.0
    %v449 = vmax.f32 %v444, 0.0
    %v454 = vrot.slane %v446, 7
    %v455 = vrot.slane %v447, 7
    %v456 = vsel %vm139, %v454, %v455
    %v457 = vrot.slane %v448, 7
    %v458 = vsel %vm139, %v455, %v457
    %v459 = vrot.slane %v449, 7
    %v460 = vsel %vm139, %v457, %v459
    %v465 = vsel %vm139, 0.0, %v454
    %v466 = vsel %vm131, %v465, 0.0
    %v467 = vsel %vm132, %v456, 0.0
    %v468 = vsel %vm133, %v458, 0.0
    %v469 = vsel %vm134, %v460, 0.0
    %v470 = vrot.slane %v446, 1
    %v471 = vrot.slane %v447, 1
    %v472 = vsel %vm172, %v470, %v471
    %v473 = vrot.slane %v448, 1
    %v474 = vsel %vm172, %v471, %v473
    %v475 = vrot.slane %v449, 1
    %v476 = vsel %vm172, %v473, %v475
    %v481 = vsel %vm172, %v475, 0.0
    %v482 = vsel %vm168, %v472, 0.0
    %v483 = vsel %vm169, %v474, 0.0
    %v484 = vsel %vm170, %v476, 0.0
    %v485 = vsel %vm171, %v481, 0.0
    %v486 = vpack.c.bf16 %v467, %v466
    %v487 = vpack.c.bf16 %v447, %v446
    %v488 = vpack.c.bf16 %v483, %v482
    %v489 = vpack.c.bf16 %v469, %v468
    %v490 = vpack.c.bf16 %v449, %v448
    %v491 = vpack.c.bf16 %v485, %v484
    %v492 = vld [vmem:[#allocation5 + $0xc0] sm:$0xf]
    %v493 = vld [vmem:[#allocation5 + $0xc4] sm:$0xf]
    %v494 = vld [vmem:[#allocation5 + $0xc8] sm:$0xf]
    %v495 = vld [vmem:[#allocation5 + $0xcc] sm:$0xf]
    %v496 = vld [vmem:[#allocation5 + $0xd0] sm:$0xf]
    %v497 = vld [vmem:[#allocation5 + $0xd4] sm:$0xf]
    %v498 = vld [vmem:[#allocation5 + $0xd8] sm:$0xf]
    %v499 = vld [vmem:[#allocation5 + $0xdc] sm:$0xf]
    %v500 = vld [vmem:[#allocation5 + $0xe0] sm:$0xf]
    %v501 = vld [vmem:[#allocation5 + $0xe4] sm:$0xf]
    %v502 = vld [vmem:[#allocation5 + $0xe8] sm:$0xf]
    %v503 = vld [vmem:[#allocation5 + $0xec] sm:$0xf]
    %v504 = vld [vmem:[#allocation5 + $0xf0] sm:$0xf]
    %v505 = vld [vmem:[#allocation5 + $0xf4] sm:$0xf]
    %v506 = vld [vmem:[#allocation5 + $0xf8] sm:$0xf]
    %v507 = vld [vmem:[#allocation5 + $0xfc] sm:$0xf]
    %v508 = vld [vmem:[#allocation5 + $0x100] sm:$0xf]
    %v509 = vld [vmem:[#allocation5 + $0x104] sm:$0xf]
    %v510 = vld [vmem:[#allocation5 + $0x108] sm:$0xf]
    %v511 = vld [vmem:[#allocation5 + $0x10c] sm:$0xf]
    %v512 = vld [vmem:[#allocation5 + $0x110] sm:$0xf]
    %v513 = vld [vmem:[#allocation5 + $0x114] sm:$0xf]
    %v514 = vld [vmem:[#allocation5 + $0x118] sm:$0xf]
    %v515 = vld [vmem:[#allocation5 + $0x11c] sm:$0xf]
    %v516 = vld [vmem:[#allocation5 + $0x120] sm:$0xf]
    %v517 = vld [vmem:[#allocation5 + $0x124] sm:$0xf]
    %v518 = vld [vmem:[#allocation5 + $0x128] sm:$0xf]
    %v519 = vld [vmem:[#allocation5 + $0x12c] sm:$0xf]
    %v520 = vld [vmem:[#allocation5 + $0x130] sm:$0xf]
    %v521 = vld [vmem:[#allocation5 + $0x134] sm:$0xf]
    %v522 = vld [vmem:[#allocation5 + $0x138] sm:$0xf]
    %v523 = vld [vmem:[#allocation5 + $0x13c] sm:$0xf]
    %v524 = vld [vmem:[#allocation5 + $0x140] sm:$0xf]
    %v525 = vld [vmem:[#allocation5 + $0x144] sm:$0xf]
    %v526 = vld [vmem:[#allocation5 + $0x148] sm:$0xf]
    %v527 = vld [vmem:[#allocation5 + $0x14c] sm:$0xf]
    %v528 = vld [vmem:[#allocation5 + $0x150] sm:$0xf]
    %v529 = vld [vmem:[#allocation5 + $0x154] sm:$0xf]
    %v530 = vld [vmem:[#allocation5 + $0x158] sm:$0xf]
    %v531 = vld [vmem:[#allocation5 + $0x15c] sm:$0xf]
    %v532 = vld [vmem:[#allocation5 + $0x160] sm:$0xf]
    %v533 = vld [vmem:[#allocation5 + $0x164] sm:$0xf]
    %v534 = vld [vmem:[#allocation5 + $0x168] sm:$0xf]
    %v535 = vld [vmem:[#allocation5 + $0x16c] sm:$0xf]
    %v536 = vld [vmem:[#allocation5 + $0x170] sm:$0xf]
    %v537 = vld [vmem:[#allocation5 + $0x174] sm:$0xf]
    %v538 = vld [vmem:[#allocation5 + $0x178] sm:$0xf]
    %v539 = vld [vmem:[#allocation5 + $0x17c] sm:$0xf]
    %v540 = vld [vmem:[#allocation7 + $0x1] sm:$0x1]
    %v541 = vperm.slane %v540, 0
    %v590 = vunpack.c.l.b16 %v492
    %v591 = vunpack.c.l.b16 %v493
    %v592 = vunpack.c.l.b16 %v494
    %v593 = vunpack.c.l.b16 %v495
    %v594 = vunpack.c.l.b16 %v496
    %v595 = vunpack.c.l.b16 %v497
    %v596 = vunpack.c.l.b16 %v498
    %v597 = vunpack.c.l.b16 %v499
    %v598 = vunpack.c.l.b16 %v500
    %v599 = vunpack.c.l.b16 %v501
    %v600 = vunpack.c.l.b16 %v502
    %v601 = vunpack.c.l.b16 %v503
    %v602 = vunpack.c.l.b16 %v504
    %v603 = vunpack.c.l.b16 %v505
    %v604 = vunpack.c.l.b16 %v506
    %v605 = vunpack.c.l.b16 %v507
    %v606 = vunpack.c.l.b16 %v508
    %v607 = vunpack.c.l.b16 %v509
    %v608 = vunpack.c.l.b16 %v510
    %v609 = vunpack.c.l.b16 %v511
    %v610 = vunpack.c.l.b16 %v512
    %v611 = vunpack.c.l.b16 %v513
    %v612 = vunpack.c.l.b16 %v514
    %v613 = vunpack.c.l.b16 %v515
    %v614 = vunpack.c.l.b16 %v516
    %v615 = vunpack.c.l.b16 %v517
    %v616 = vunpack.c.l.b16 %v518
    %v617 = vunpack.c.l.b16 %v519
    %v618 = vunpack.c.l.b16 %v520
    %v619 = vunpack.c.l.b16 %v521
    %v620 = vunpack.c.l.b16 %v522
    %v621 = vunpack.c.l.b16 %v523
    %v622 = vunpack.c.l.b16 %v524
    %v623 = vunpack.c.l.b16 %v525
    %v624 = vunpack.c.l.b16 %v526
    %v625 = vunpack.c.l.b16 %v527
    %v626 = vunpack.c.l.b16 %v528
    %v627 = vunpack.c.l.b16 %v529
    %v628 = vunpack.c.l.b16 %v530
    %v629 = vunpack.c.l.b16 %v531
    %v630 = vunpack.c.l.b16 %v532
    %v631 = vunpack.c.l.b16 %v533
    %v632 = vunpack.c.l.b16 %v534
    %v633 = vunpack.c.l.b16 %v535
    %v634 = vunpack.c.l.b16 %v536
    %v635 = vunpack.c.l.b16 %v537
    %v636 = vunpack.c.l.b16 %v538
    %v637 = vunpack.c.l.b16 %v539
    %v638 = vpack.c.b16 %v591, %v590
    %v639 = vpack.c.b16 %v593, %v592
    %v640 = vpack.c.b16 %v595, %v594
    %v641 = vpack.c.b16 %v597, %v596
    %v642 = vpack.c.b16 %v599, %v598
    %v643 = vpack.c.b16 %v601, %v600
    %v644 = vpack.c.b16 %v603, %v602
    %v645 = vpack.c.b16 %v605, %v604
    %v646 = vpack.c.b16 %v607, %v606
    %v647 = vpack.c.b16 %v609, %v608
    %v648 = vpack.c.b16 %v611, %v610
    %v649 = vpack.c.b16 %v613, %v612
    %v650 = vpack.c.b16 %v615, %v614
    %v651 = vpack.c.b16 %v617, %v616
    %v652 = vpack.c.b16 %v619, %v618
    %v653 = vpack.c.b16 %v621, %v620
    %v654 = vpack.c.b16 %v623, %v622
    %v655 = vpack.c.b16 %v625, %v624
    %v656 = vpack.c.b16 %v627, %v626
    %v657 = vpack.c.b16 %v629, %v628
    %v658 = vpack.c.b16 %v631, %v630
    %v659 = vpack.c.b16 %v633, %v632
    %v660 = vpack.c.b16 %v635, %v634
    %v661 = vpack.c.b16 %v637, %v636
    %686 = vmatpush.bf16.msra.mxu0 %v645
    %687 = vmatpush.bf16.msra.mxu0 %v644
    %688 = vmatpush.bf16.msra.mxu0 %v643
    %689 = vmatpush.bf16.msra.mxu0 %v642
    %690 = vmatpush.bf16.msra.mxu0 %v641
    %691 = vmatpush.bf16.msra.mxu0 %v640
    %692 = vmatpush.bf16.msra.mxu0 %v639
    %693 = vmatpush.bf16.msra.mxu0 %v638
    %694 = vmatmul.bf16.gmra.mxu0 %v486
    %v695 = vpop.f32.mrf.mxu0
    %v696 = vadd.f32 %v541, %v695
    %v697 = vpop.f32.mrf.mxu0
    %v698 = vadd.f32 %v541, %v697
    %699 = vmatmul.bf16.gmra.mxu0 %v489
    %v700 = vpop.f32.mrf.mxu0
    %v701 = vadd.f32 %v541, %v700
    %v702 = vpop.f32.mrf.mxu0
    %v703 = vadd.f32 %v541, %v702
    %704 = vdwg.mxu0
    %705 = vmatpush.bf16.msra.mxu0 %v653
    %706 = vmatpush.bf16.msra.mxu0 %v652
    %707 = vmatpush.bf16.msra.mxu0 %v651
    %708 = vmatpush.bf16.msra.mxu0 %v650
    %709 = vmatpush.bf16.msra.mxu0 %v649
    %710 = vmatpush.bf16.msra.mxu0 %v648
    %711 = vmatpush.bf16.msra.mxu0 %v647
    %712 = vmatpush.bf16.msra.mxu0 %v646
    %713 = vmatmul.bf16.gmra.mxu0 %v487
    %v714 = vpop.f32.mrf.mxu0
    %v715 = vadd.f32 %v696, %v714
    %v716 = vpop.f32.mrf.mxu0
    %v717 = vadd.f32 %v698, %v716
    %718 = vmatmul.bf16.gmra.mxu0 %v490
    %v719 = vpop.f32.mrf.mxu0
    %v720 = vadd.f32 %v701, %v719
    %v721 = vpop.f32.mrf.mxu0
    %v722 = vadd.f32 %v703, %v721
    %723 = vdwg.mxu0
    %724 = vmatpush.bf16.msra.mxu0 %v661
    %725 = vmatpush.bf16.msra.mxu0 %v660
    %726 = vmatpush.bf16.msra.mxu0 %v659
    %727 = vmatpush.bf16.msra.mxu0 %v658
    %728 = vmatpush.bf16.msra.mxu0 %v657
    %729 = vmatpush.bf16.msra.mxu0 %v656
    %730 = vmatpush.bf16.msra.mxu0 %v655
    %731 = vmatpush.bf16.msra.mxu0 %v654
    %732 = vmatmul.bf16.gmra.mxu0 %v488
    %v733 = vpop.f32.mrf.mxu0
    %v734 = vadd.f32 %v715, %v733
    %v735 = vpop.f32.mrf.mxu0
    %v736 = vadd.f32 %v717, %v735
    %737 = vmatmul.bf16.gmra.mxu0 %v491
    %v738 = vpop.f32.mrf.mxu0
    %v739 = vadd.f32 %v720, %v738
    %v740 = vpop.f32.mrf.mxu0
    %v741 = vadd.f32 %v722, %v740
    %742 = vdwg.mxu0
    %v743 = vmax.f32 %v734, 0.0
    %v744 = vmax.f32 %v736, 0.0
    %v745 = vmax.f32 %v739, 0.0
    %v746 = vmax.f32 %v741, 0.0
    %v751 = vrot.slane %v743, 7
    %v752 = vrot.slane %v744, 7
    %v753 = vsel %vm139, %v751, %v752
    %v754 = vrot.slane %v745, 7
    %v755 = vsel %vm139, %v752, %v754
    %v756 = vrot.slane %v746, 7
    %v757 = vsel %vm139, %v754, %v756
    %v762 = vsel %vm139, 0.0, %v751
    %v763 = vsel %vm131, %v762, 0.0
    %v764 = vsel %vm132, %v753, 0.0
    %v765 = vsel %vm133, %v755, 0.0
    %v766 = vsel %vm134, %v757, 0.0
    %v767 = vrot.slane %v743, 1
    %v768 = vrot.slane %v744, 1
    %v769 = vsel %vm172, %v767, %v768
    %v770 = vrot.slane %v745, 1
    %v771 = vsel %vm172, %v768, %v770
    %v772 = vrot.slane %v746, 1
    %v773 = vsel %vm172, %v770, %v772
    %v778 = vsel %vm172, %v772, 0.0
    %v779 = vsel %vm168, %v769, 0.0
    %v780 = vsel %vm169, %v771, 0.0
    %v781 = vsel %vm170, %v773, 0.0
    %v782 = vsel %vm171, %v778, 0.0
    %v783 = vpack.c.bf16 %v764, %v763
    %v784 = vpack.c.bf16 %v744, %v743
    %v785 = vpack.c.bf16 %v780, %v779
    %v786 = vpack.c.bf16 %v766, %v765
    %v787 = vpack.c.bf16 %v746, %v745
    %v788 = vpack.c.bf16 %v782, %v781
    %v789 = vld [vmem:[#allocation5 + $0x180] sm:$0xf]
    %v790 = vld [vmem:[#allocation5 + $0x184] sm:$0xf]
    %v791 = vld [vmem:[#allocation5 + $0x188] sm:$0xf]
    %v792 = vld [vmem:[#allocation5 + $0x18c] sm:$0xf]
    %v793 = vld [vmem:[#allocation5 + $0x190] sm:$0xf]
    %v794 = vld [vmem:[#allocation5 + $0x194] sm:$0xf]
    %v795 = vld [vmem:[#allocation5 + $0x198] sm:$0xf]
    %v796 = vld [vmem:[#allocation5 + $0x19c] sm:$0xf]
    %v797 = vld [vmem:[#allocation5 + $0x1a0] sm:$0xf]
    %v798 = vld [vmem:[#allocation5 + $0x1a4] sm:$0xf]
    %v799 = vld [vmem:[#allocation5 + $0x1a8] sm:$0xf]
    %v800 = vld [vmem:[#allocation5 + $0x1ac] sm:$0xf]
    %v801 = vld [vmem:[#allocation5 + $0x1b0] sm:$0xf]
    %v802 = vld [vmem:[#allocation5 + $0x1b4] sm:$0xf]
    %v803 = vld [vmem:[#allocation5 + $0x1b8] sm:$0xf]
    %v804 = vld [vmem:[#allocation5 + $0x1bc] sm:$0xf]
    %v805 = vld [vmem:[#allocation5 + $0x1c0] sm:$0xf]
    %v806 = vld [vmem:[#allocation5 + $0x1c4] sm:$0xf]
    %v807 = vld [vmem:[#allocation5 + $0x1c8] sm:$0xf]
    %v808 = vld [vmem:[#allocation5 + $0x1cc] sm:$0xf]
    %v809 = vld [vmem:[#allocation5 + $0x1d0] sm:$0xf]
    %v810 = vld [vmem:[#allocation5 + $0x1d4] sm:$0xf]
    %v811 = vld [vmem:[#allocation5 + $0x1d8] sm:$0xf]
    %v812 = vld [vmem:[#allocation5 + $0x1dc] sm:$0xf]
    %v813 = vld [vmem:[#allocation5 + $0x1e0] sm:$0xf]
    %v814 = vld [vmem:[#allocation5 + $0x1e4] sm:$0xf]
    %v815 = vld [vmem:[#allocation5 + $0x1e8] sm:$0xf]
    %v816 = vld [vmem:[#allocation5 + $0x1ec] sm:$0xf]
    %v817 = vld [vmem:[#allocation5 + $0x1f0] sm:$0xf]
    %v818 = vld [vmem:[#allocation5 + $0x1f4] sm:$0xf]
    %v819 = vld [vmem:[#allocation5 + $0x1f8] sm:$0xf]
    %v820 = vld [vmem:[#allocation5 + $0x1fc] sm:$0xf]
    %v821 = vld [vmem:[#allocation5 + $0x200] sm:$0xf]
    %v822 = vld [vmem:[#allocation5 + $0x204] sm:$0xf]
    %v823 = vld [vmem:[#allocation5 + $0x208] sm:$0xf]
    %v824 = vld [vmem:[#allocation5 + $0x20c] sm:$0xf]
    %v825 = vld [vmem:[#allocation5 + $0x210] sm:$0xf]
    %v826 = vld [vmem:[#allocation5 + $0x214] sm:$0xf]
    %v827 = vld [vmem:[#allocation5 + $0x218] sm:$0xf]
    %v828 = vld [vmem:[#allocation5 + $0x21c] sm:$0xf]
    %v829 = vld [vmem:[#allocation5 + $0x220] sm:$0xf]
    %v830 = vld [vmem:[#allocation5 + $0x224] sm:$0xf]
    %v831 = vld [vmem:[#allocation5 + $0x228] sm:$0xf]
    %v832 = vld [vmem:[#allocation5 + $0x22c] sm:$0xf]
    %v833 = vld [vmem:[#allocation5 + $0x230] sm:$0xf]
    %v834 = vld [vmem:[#allocation5 + $0x234] sm:$0xf]
    %v835 = vld [vmem:[#allocation5 + $0x238] sm:$0xf]
    %v836 = vld [vmem:[#allocation5 + $0x23c] sm:$0xf]
    %v837 = vld [vmem:[#allocation7 + $0x2] sm:$0x1]
    %v838 = vperm.slane %v837, 0
    %v887 = vunpack.c.l.b16 %v789
    %v888 = vunpack.c.l.b16 %v790
    %v889 = vunpack.c.l.b16 %v791
    %v890 = vunpack.c.l.b16 %v792
    %v891 = vunpack.c.l.b16 %v793
    %v892 = vunpack.c.l.b16 %v794
    %v893 = vunpack.c.l.b16 %v795
    %v894 = vunpack.c.l.b16 %v796
    %v895 = vunpack.c.l.b16 %v797
    %v896 = vunpack.c.l.b16 %v798
    %v897 = vunpack.c.l.b16 %v799
    %v898 = vunpack.c.l.b16 %v800
    %v899 = vunpack.c.l.b16 %v801
    %v900 = vunpack.c.l.b16 %v802
    %v901 = vunpack.c.l.b16 %v803
    %v902 = vunpack.c.l.b16 %v804
    %v903 = vunpack.c.l.b16 %v805
    %v904 = vunpack.c.l.b16 %v806
    %v905 = vunpack.c.l.b16 %v807
    %v906 = vunpack.c.l.b16 %v808
    %v907 = vunpack.c.l.b16 %v809
    %v908 = vunpack.c.l.b16 %v810
    %v909 = vunpack.c.l.b16 %v811
    %v910 = vunpack.c.l.b16 %v812
    %v911 = vunpack.c.l.b16 %v813
    %v912 = vunpack.c.l.b16 %v814
    %v913 = vunpack.c.l.b16 %v815
    %v914 = vunpack.c.l.b16 %v816
    %v915 = vunpack.c.l.b16 %v817
    %v916 = vunpack.c.l.b16 %v818
    %v917 = vunpack.c.l.b16 %v819
    %v918 = vunpack.c.l.b16 %v820
    %v919 = vunpack.c.l.b16 %v821
    %v920 = vunpack.c.l.b16 %v822
    %v921 = vunpack.c.l.b16 %v823
    %v922 = vunpack.c.l.b16 %v824
    %v923 = vunpack.c.l.b16 %v825
    %v924 = vunpack.c.l.b16 %v826
    %v925 = vunpack.c.l.b16 %v827
    %v926 = vunpack.c.l.b16 %v828
    %v927 = vunpack.c.l.b16 %v829
    %v928 = vunpack.c.l.b16 %v830
    %v929 = vunpack.c.l.b16 %v831
    %v930 = vunpack.c.l.b16 %v832
    %v931 = vunpack.c.l.b16 %v833
    %v932 = vunpack.c.l.b16 %v834
    %v933 = vunpack.c.l.b16 %v835
    %v934 = vunpack.c.l.b16 %v836
    %v935 = vpack.c.b16 %v888, %v887
    %v936 = vpack.c.b16 %v890, %v889
    %v937 = vpack.c.b16 %v892, %v891
    %v938 = vpack.c.b16 %v894, %v893
    %v939 = vpack.c.b16 %v896, %v895
    %v940 = vpack.c.b16 %v898, %v897
    %v941 = vpack.c.b16 %v900, %v899
    %v942 = vpack.c.b16 %v902, %v901
    %v943 = vpack.c.b16 %v904, %v903
    %v944 = vpack.c.b16 %v906, %v905
    %v945 = vpack.c.b16 %v908, %v907
    %v946 = vpack.c.b16 %v910, %v909
    %v947 = vpack.c.b16 %v912, %v911
    %v948 = vpack.c.b16 %v914, %v913
    %v949 = vpack.c.b16 %v916, %v915
    %v950 = vpack.c.b16 %v918, %v917
    %v951 = vpack.c.b16 %v920, %v919
    %v952 = vpack.c.b16 %v922, %v921
    %v953 = vpack.c.b16 %v924, %v923
    %v954 = vpack.c.b16 %v926, %v925
    %v955 = vpack.c.b16 %v928, %v927
    %v956 = vpack.c.b16 %v930, %v929
    %v957 = vpack.c.b16 %v932, %v931
    %v958 = vpack.c.b16 %v934, %v933
    %983 = vmatpush.bf16.msra.mxu0 %v942
    %984 = vmatpush.bf16.msra.mxu0 %v941
    %985 = vmatpush.bf16.msra.mxu0 %v940
    %986 = vmatpush.bf16.msra.mxu0 %v939
    %987 = vmatpush.bf16.msra.mxu0 %v938
    %988 = vmatpush.bf16.msra.mxu0 %v937
    %989 = vmatpush.bf16.msra.mxu0 %v936
    %990 = vmatpush.bf16.msra.mxu0 %v935
    %991 = vmatmul.bf16.gmra.mxu0 %v783
    %v992 = vpop.f32.mrf.mxu0
    %v993 = vadd.f32 %v838, %v992
    %v994 = vpop.f32.mrf.mxu0
    %v995 = vadd.f32 %v838, %v994
    %996 = vmatmul.bf16.gmra.mxu0 %v786
    %v997 = vpop.f32.mrf.mxu0
    %v998 = vadd.f32 %v838, %v997
    %v999 = vpop.f32.mrf.mxu0
    %v1000 = vadd.f32 %v838, %v999
    %1001 = vdwg.mxu0
    %1002 = vmatpush.bf16.msra.mxu0 %v950
    %1003 = vmatpush.bf16.msra.mxu0 %v949
    %1004 = vmatpush.bf16.msra.mxu0 %v948
    %1005 = vmatpush.bf16.msra.mxu0 %v947
    %1006 = vmatpush.bf16.msra.mxu0 %v946
    %1007 = vmatpush.bf16.msra.mxu0 %v945
    %1008 = vmatpush.bf16.msra.mxu0 %v944
    %1009 = vmatpush.bf16.msra.mxu0 %v943
    %1010 = vmatmul.bf16.gmra.mxu0 %v784
    %v1011 = vpop.f32.mrf.mxu0
    %v1012 = vadd.f32 %v993, %v1011
    %v1013 = vpop.f32.mrf.mxu0
    %v1014 = vadd.f32 %v995, %v1013
    %1015 = vmatmul.bf16.gmra.mxu0 %v787
    %v1016 = vpop.f32.mrf.mxu0
    %v1017 = vadd.f32 %v998, %v1016
    %v1018 = vpop.f32.mrf.mxu0
    %v1019 = vadd.f32 %v1000, %v1018
    %1020 = vdwg.mxu0
    %1021 = vmatpush.bf16.msra.mxu0 %v958
    %1022 = vmatpush.bf16.msra.mxu0 %v957
    %1023 = vmatpush.bf16.msra.mxu0 %v956
    %1024 = vmatpush.bf16.msra.mxu0 %v955
    %1025 = vmatpush.bf16.msra.mxu0 %v954
    %1026 = vmatpush.bf16.msra.mxu0 %v953
    %1027 = vmatpush.bf16.msra.mxu0 %v952
    %1028 = vmatpush.bf16.msra.mxu0 %v951
    %1029 = vmatmul.bf16.gmra.mxu0 %v785
    %v1030 = vpop.f32.mrf.mxu0
    %v1031 = vadd.f32 %v1012, %v1030
    %v1032 = vpop.f32.mrf.mxu0
    %v1033 = vadd.f32 %v1014, %v1032
    %1034 = vmatmul.bf16.gmra.mxu0 %v788
    %v1035 = vpop.f32.mrf.mxu0
    %v1036 = vadd.f32 %v1017, %v1035
    %v1037 = vpop.f32.mrf.mxu0
    %v1038 = vadd.f32 %v1019, %v1037
    %1039 = vdwg.mxu0
    %v1040 = vmax.f32 %v1031, 0.0
    %v1041 = vmax.f32 %v1033, 0.0
    %v1042 = vmax.f32 %v1036, 0.0
    %v1043 = vmax.f32 %v1038, 0.0
    %v1044 = vld [vmem:[#allocation5 + $0x240] sm:$0xf]
    %v1045 = vld [vmem:[#allocation5 + $0x244] sm:$0xf]
    %v1046 = vld [vmem:[#allocation5 + $0x248] sm:$0xf]
    %v1047 = vld [vmem:[#allocation5 + $0x24c] sm:$0xf]
    %v1048 = vld [vmem:[#allocation5 + $0x250] sm:$0xf]
    %v1049 = vld [vmem:[#allocation5 + $0x254] sm:$0xf]
    %v1050 = vld [vmem:[#allocation5 + $0x258] sm:$0xf]
    %v1051 = vld [vmem:[#allocation5 + $0x25c] sm:$0xf]
    %v1052 = vld [vmem:[#allocation5 + $0x260] sm:$0xf]
    %v1053 = vld [vmem:[#allocation5 + $0x264] sm:$0xf]
    %v1054 = vld [vmem:[#allocation5 + $0x268] sm:$0xf]
    %v1055 = vld [vmem:[#allocation5 + $0x26c] sm:$0xf]
    %v1056 = vld [vmem:[#allocation5 + $0x270] sm:$0xf]
    %v1057 = vld [vmem:[#allocation5 + $0x274] sm:$0xf]
    %v1058 = vld [vmem:[#allocation5 + $0x278] sm:$0xf]
    %v1059 = vld [vmem:[#allocation5 + $0x27c] sm:$0xf]
    %v1060 = vld [vmem:[#allocation7 + $0x3] sm:$0x1]
    %v1061 = vperm.slane %v1060, 0
    %v1078 = vunpack.c.l.b16 %v1044
    %v1079 = vunpack.c.l.b16 %v1045
    %v1080 = vunpack.c.l.b16 %v1046
    %v1081 = vunpack.c.l.b16 %v1047
    %v1082 = vunpack.c.l.b16 %v1048
    %v1083 = vunpack.c.l.b16 %v1049
    %v1084 = vunpack.c.l.b16 %v1050
    %v1085 = vunpack.c.l.b16 %v1051
    %v1086 = vunpack.c.l.b16 %v1052
    %v1087 = vunpack.c.l.b16 %v1053
    %v1088 = vunpack.c.l.b16 %v1054
    %v1089 = vunpack.c.l.b16 %v1055
    %v1090 = vunpack.c.l.b16 %v1056
    %v1091 = vunpack.c.l.b16 %v1057
    %v1092 = vunpack.c.l.b16 %v1058
    %v1093 = vunpack.c.l.b16 %v1059
    %v1094 = vpack.c.b16 %v1079, %v1078
    %v1095 = vpack.c.b16 %v1081, %v1080
    %v1096 = vpack.c.b16 %v1083, %v1082
    %v1097 = vpack.c.b16 %v1085, %v1084
    %v1098 = vpack.c.b16 %v1087, %v1086
    %v1099 = vpack.c.b16 %v1089, %v1088
    %v1100 = vpack.c.b16 %v1091, %v1090
    %v1101 = vpack.c.b16 %v1093, %v1092
    %1110 = vmatpush.bf16.msra.mxu0 %v1101
    %1111 = vmatpush.bf16.msra.mxu0 %v1100
    %1112 = vmatpush.bf16.msra.mxu0 %v1099
    %1113 = vmatpush.bf16.msra.mxu0 %v1098
    %1114 = vmatpush.bf16.msra.mxu0 %v1097
    %1115 = vmatpush.bf16.msra.mxu0 %v1096
    %1116 = vmatpush.bf16.msra.mxu0 %v1095
    %1117 = vmatpush.bf16.msra.mxu0 %v1094
    %1118 = vmatmul.bf16.gmra.mxu0 %v190
    %v1119 = vpop.f32.mrf.mxu0
    %v1120 = vadd.f32 %v1061, %v1119
    %v1121 = vpop.f32.mrf.mxu0
    %v1122 = vadd.f32 %v1061, %v1121
    %1123 = vmatmul.bf16.gmra.mxu0 %v193
    %v1124 = vpop.f32.mrf.mxu0
    %v1125 = vadd.f32 %v1061, %v1124
    %v1126 = vpop.f32.mrf.mxu0
    %v1127 = vadd.f32 %v1061, %v1126
    %1128 = vdwg.mxu0
    %v1129 = vadd.f32 %v1040, %v1120
    %v1130 = vadd.f32 %v1041, %v1122
    %v1131 = vadd.f32 %v1042, %v1125
    %v1132 = vadd.f32 %v1043, %v1127
    %v1137 = vrot.slane %v1129, 7
    %v1138 = vrot.slane %v1130, 7
    %v1139 = vsel %vm139, %v1137, %v1138
    %v1140 = vrot.slane %v1131, 7
    %v1141 = vsel %vm139, %v1138, %v1140
    %v1142 = vrot.slane %v1132, 7
    %v1143 = vsel %vm139, %v1140, %v1142
    %v1148 = vsel %vm139, 0.0, %v1137
    %v1149 = vsel %vm131, %v1148, 0.0
    %v1150 = vsel %vm132, %v1139, 0.0
    %v1151 = vsel %vm133, %v1141, 0.0
    %v1152 = vsel %vm134, %v1143, 0.0
    %v1153 = vrot.slane %v1129, 1
    %v1154 = vrot.slane %v1130, 1
    %v1155 = vsel %vm172, %v1153, %v1154
    %v1156 = vrot.slane %v1131, 1
    %v1157 = vsel %vm172, %v1154, %v1156
    %v1158 = vrot.slane %v1132, 1
    %v1159 = vsel %vm172, %v1156, %v1158
    %v1164 = vsel %vm172, %v1158, 0.0
    %v1165 = vsel %vm168, %v1155, 0.0
    %v1166 = vsel %vm169, %v1157, 0.0
    %v1167 = vsel %vm170, %v1159, 0.0
    %v1168 = vsel %vm171, %v1164, 0.0
    %v1169 = vpack.c.bf16 %v1150, %v1149
    %v1170 = vpack.c.bf16 %v1130, %v1129
    %v1171 = vpack.c.bf16 %v1166, %v1165
    %v1172 = vpack.c.bf16 %v1152, %v1151
    %v1173 = vpack.c.bf16 %v1132, %v1131
    %v1174 = vpack.c.bf16 %v1168, %v1167
    %v1175 = vld [vmem:[#allocation5 + $0x280] sm:$0xf]
    %v1176 = vld [vmem:[#allocation5 + $0x284] sm:$0xf]
    %v1177 = vld [vmem:[#allocation5 + $0x288] sm:$0xf]
    %v1178 = vld [vmem:[#allocation5 + $0x28c] sm:$0xf]
    %v1179 = vld [vmem:[#allocation5 + $0x290] sm:$0xf]
    %v1180 = vld [vmem:[#allocation5 + $0x294] sm:$0xf]
    %v1181 = vld [vmem:[#allocation5 + $0x298] sm:$0xf]
    %v1182 = vld [vmem:[#allocation5 + $0x29c] sm:$0xf]
    %v1183 = vld [vmem:[#allocation5 + $0x2a0] sm:$0xf]
    %v1184 = vld [vmem:[#allocation5 + $0x2a4] sm:$0xf]
    %v1185 = vld [vmem:[#allocation5 + $0x2a8] sm:$0xf]
    %v1186 = vld [vmem:[#allocation5 + $0x2ac] sm:$0xf]
    %v1187 = vld [vmem:[#allocation5 + $0x2b0] sm:$0xf]
    %v1188 = vld [vmem:[#allocation5 + $0x2b4] sm:$0xf]
    %v1189 = vld [vmem:[#allocation5 + $0x2b8] sm:$0xf]
    %v1190 = vld [vmem:[#allocation5 + $0x2bc] sm:$0xf]
    %v1191 = vld [vmem:[#allocation5 + $0x2c0] sm:$0xf]
    %v1192 = vld [vmem:[#allocation5 + $0x2c4] sm:$0xf]
    %v1193 = vld [vmem:[#allocation5 + $0x2c8] sm:$0xf]
    %v1194 = vld [vmem:[#allocation5 + $0x2cc] sm:$0xf]
    %v1195 = vld [vmem:[#allocation5 + $0x2d0] sm:$0xf]
    %v1196 = vld [vmem:[#allocation5 + $0x2d4] sm:$0xf]
    %v1197 = vld [vmem:[#allocation5 + $0x2d8] sm:$0xf]
    %v1198 = vld [vmem:[#allocation5 + $0x2dc] sm:$0xf]
    %v1199 = vld [vmem:[#allocation5 + $0x2e0] sm:$0xf]
    %v1200 = vld [vmem:[#allocation5 + $0x2e4] sm:$0xf]
    %v1201 = vld [vmem:[#allocation5 + $0x2e8] sm:$0xf]
    %v1202 = vld [vmem:[#allocation5 + $0x2ec] sm:$0xf]
    %v1203 = vld [vmem:[#allocation5 + $0x2f0] sm:$0xf]
    %v1204 = vld [vmem:[#allocation5 + $0x2f4] sm:$0xf]
    %v1205 = vld [vmem:[#allocation5 + $0x2f8] sm:$0xf]
    %v1206 = vld [vmem:[#allocation5 + $0x2fc] sm:$0xf]
    %v1207 = vld [vmem:[#allocation5 + $0x300] sm:$0xf]
    %v1208 = vld [vmem:[#allocation5 + $0x304] sm:$0xf]
    %v1209 = vld [vmem:[#allocation5 + $0x308] sm:$0xf]
    %v1210 = vld [vmem:[#allocation5 + $0x30c] sm:$0xf]
    %v1211 = vld [vmem:[#allocation5 + $0x310] sm:$0xf]
    %v1212 = vld [vmem:[#allocation5 + $0x314] sm:$0xf]
    %v1213 = vld [vmem:[#allocation5 + $0x318] sm:$0xf]
    %v1214 = vld [vmem:[#allocation5 + $0x31c] sm:$0xf]
    %v1215 = vld [vmem:[#allocation5 + $0x320] sm:$0xf]
    %v1216 = vld [vmem:[#allocation5 + $0x324] sm:$0xf]
    %v1217 = vld [vmem:[#allocation5 + $0x328] sm:$0xf]
    %v1218 = vld [vmem:[#allocation5 + $0x32c] sm:$0xf]
    %v1219 = vld [vmem:[#allocation5 + $0x330] sm:$0xf]
    %v1220 = vld [vmem:[#allocation5 + $0x334] sm:$0xf]
    %v1221 = vld [vmem:[#allocation5 + $0x338] sm:$0xf]
    %v1222 = vld [vmem:[#allocation5 + $0x33c] sm:$0xf]
    %v1223 = vld [vmem:[#allocation7 + $0x4] sm:$0x1]
    %v1224 = vperm.slane %v1223, 0
    %v1273 = vunpack.c.l.b16 %v1175
    %v1274 = vunpack.c.l.b16 %v1176
    %v1275 = vunpack.c.l.b16 %v1177
    %v1276 = vunpack.c.l.b16 %v1178
    %v1277 = vunpack.c.l.b16 %v1179
    %v1278 = vunpack.c.l.b16 %v1180
    %v1279 = vunpack.c.l.b16 %v1181
    %v1280 = vunpack.c.l.b16 %v1182
    %v1281 = vunpack.c.l.b16 %v1183
    %v1282 = vunpack.c.l.b16 %v1184
    %v1283 = vunpack.c.l.b16 %v1185
    %v1284 = vunpack.c.l.b16 %v1186
    %v1285 = vunpack.c.l.b16 %v1187
    %v1286 = vunpack.c.l.b16 %v1188
    %v1287 = vunpack.c.l.b16 %v1189
    %v1288 = vunpack.c.l.b16 %v1190
    %v1289 = vunpack.c.l.b16 %v1191
    %v1290 = vunpack.c.l.b16 %v1192
    %v1291 = vunpack.c.l.b16 %v1193
    %v1292 = vunpack.c.l.b16 %v1194
    %v1293 = vunpack.c.l.b16 %v1195
    %v1294 = vunpack.c.l.b16 %v1196
    %v1295 = vunpack.c.l.b16 %v1197
    %v1296 = vunpack.c.l.b16 %v1198
    %v1297 = vunpack.c.l.b16 %v1199
    %v1298 = vunpack.c.l.b16 %v1200
    %v1299 = vunpack.c.l.b16 %v1201
    %v1300 = vunpack.c.l.b16 %v1202
    %v1301 = vunpack.c.l.b16 %v1203
    %v1302 = vunpack.c.l.b16 %v1204
    %v1303 = vunpack.c.l.b16 %v1205
    %v1304 = vunpack.c.l.b16 %v1206
    %v1305 = vunpack.c.l.b16 %v1207
    %v1306 = vunpack.c.l.b16 %v1208
    %v1307 = vunpack.c.l.b16 %v1209
    %v1308 = vunpack.c.l.b16 %v1210
    %v1309 = vunpack.c.l.b16 %v1211
    %v1310 = vunpack.c.l.b16 %v1212
    %v1311 = vunpack.c.l.b16 %v1213
    %v1312 = vunpack.c.l.b16 %v1214
    %v1313 = vunpack.c.l.b16 %v1215
    %v1314 = vunpack.c.l.b16 %v1216
    %v1315 = vunpack.c.l.b16 %v1217
    %v1316 = vunpack.c.l.b16 %v1218
    %v1317 = vunpack.c.l.b16 %v1219
    %v1318 = vunpack.c.l.b16 %v1220
    %v1319 = vunpack.c.l.b16 %v1221
    %v1320 = vunpack.c.l.b16 %v1222
    %v1321 = vpack.c.b16 %v1274, %v1273
    %v1322 = vpack.c.b16 %v1276, %v1275
    %v1323 = vpack.c.b16 %v1278, %v1277
    %v1324 = vpack.c.b16 %v1280, %v1279
    %v1325 = vpack.c.b16 %v1282, %v1281
    %v1326 = vpack.c.b16 %v1284, %v1283
    %v1327 = vpack.c.b16 %v1286, %v1285
    %v1328 = vpack.c.b16 %v1288, %v1287
    %v1329 = vpack.c.b16 %v1290, %v1289
    %v1330 = vpack.c.b16 %v1292, %v1291
    %v1331 = vpack.c.b16 %v1294, %v1293
    %v1332 = vpack.c.b16 %v1296, %v1295
    %v1333 = vpack.c.b16 %v1298, %v1297
    %v1334 = vpack.c.b16 %v1300, %v1299
    %v1335 = vpack.c.b16 %v1302, %v1301
    %v1336 = vpack.c.b16 %v1304, %v1303
    %v1337 = vpack.c.b16 %v1306, %v1305
    %v1338 = vpack.c.b16 %v1308, %v1307
    %v1339 = vpack.c.b16 %v1310, %v1309
    %v1340 = vpack.c.b16 %v1312, %v1311
    %v1341 = vpack.c.b16 %v1314, %v1313
    %v1342 = vpack.c.b16 %v1316, %v1315
    %v1343 = vpack.c.b16 %v1318, %v1317
    %v1344 = vpack.c.b16 %v1320, %v1319
    %1369 = vmatpush.bf16.msra.mxu0 %v1328
    %1370 = vmatpush.bf16.msra.mxu0 %v1327
    %1371 = vmatpush.bf16.msra.mxu0 %v1326
    %1372 = vmatpush.bf16.msra.mxu0 %v1325
    %1373 = vmatpush.bf16.msra.mxu0 %v1324
    %1374 = vmatpush.bf16.msra.mxu0 %v1323
    %1375 = vmatpush.bf16.msra.mxu0 %v1322
    %1376 = vmatpush.bf16.msra.mxu0 %v1321
    %1377 = vmatmul.bf16.gmra.mxu0 %v1169
    %v1378 = vpop.f32.mrf.mxu0
    %v1379 = vadd.f32 %v1224, %v1378
    %v1380 = vpop.f32.mrf.mxu0
    %v1381 = vadd.f32 %v1224, %v1380
    %1382 = vmatmul.bf16.gmra.mxu0 %v1172
    %v1383 = vpop.f32.mrf.mxu0
    %v1384 = vadd.f32 %v1224, %v1383
    %v1385 = vpop.f32.mrf.mxu0
    %v1386 = vadd.f32 %v1224, %v1385
    %1387 = vdwg.mxu0
    %1388 = vmatpush.bf16.msra.mxu0 %v1336
    %1389 = vmatpush.bf16.msra.mxu0 %v1335
    %1390 = vmatpush.bf16.msra.mxu0 %v1334
    %1391 = vmatpush.bf16.msra.mxu0 %v1333
    %1392 = vmatpush.bf16.msra.mxu0 %v1332
    %1393 = vmatpush.bf16.msra.mxu0 %v1331
    %1394 = vmatpush.bf16.msra.mxu0 %v1330
    %1395 = vmatpush.bf16.msra.mxu0 %v1329
    %1396 = vmatmul.bf16.gmra.mxu0 %v1170
    %v1397 = vpop.f32.mrf.mxu0
    %v1398 = vadd.f32 %v1379, %v1397
    %v1399 = vpop.f32.mrf.mxu0
    %v1400 = vadd.f32 %v1381, %v1399
    %1401 = vmatmul.bf16.gmra.mxu0 %v1173
    %v1402 = vpop.f32.mrf.mxu0
    %v1403 = vadd.f32 %v1384, %v1402
    %v1404 = vpop.f32.mrf.mxu0
    %v1405 = vadd.f32 %v1386, %v1404
    %1406 = vdwg.mxu0
    %1407 = vmatpush.bf16.msra.mxu0 %v1344
    %1408 = vmatpush.bf16.msra.mxu0 %v1343
    %1409 = vmatpush.bf16.msra.mxu0 %v1342
    %1410 = vmatpush.bf16.msra.mxu0 %v1341
    %1411 = vmatpush.bf16.msra.mxu0 %v1340
    %1412 = vmatpush.bf16.msra.mxu0 %v1339
    %1413 = vmatpush.bf16.msra.mxu0 %v1338
    %1414 = vmatpush.bf16.msra.mxu0 %v1337
    %1415 = vmatmul.bf16.gmra.mxu0 %v1171
    %v1416 = vpop.f32.mrf.mxu0
    %v1417 = vadd.f32 %v1398, %v1416
    %v1418 = vpop.f32.mrf.mxu0
    %v1419 = vadd.f32 %v1400, %v1418
    %1420 = vmatmul.bf16.gmra.mxu0 %v1174
    %v1421 = vpop.f32.mrf.mxu0
    %v1422 = vadd.f32 %v1403, %v1421
    %v1423 = vpop.f32.mrf.mxu0
    %v1424 = vadd.f32 %v1405, %v1423
    %1425 = vdwg.mxu0
    %v1426 = vmax.f32 %v1417, 0.0
    %v1427 = vmax.f32 %v1419, 0.0
    %v1428 = vmax.f32 %v1422, 0.0
    %v1429 = vmax.f32 %v1424, 0.0
    %v1434 = vrot.slane %v1426, 7
    %v1435 = vrot.slane %v1427, 7
    %v1436 = vsel %vm139, %v1434, %v1435
    %v1437 = vrot.slane %v1428, 7
    %v1438 = vsel %vm139, %v1435, %v1437
    %v1439 = vrot.slane %v1429, 7
    %v1440 = vsel %vm139, %v1437, %v1439
    %v1445 = vsel %vm139, 0.0, %v1434
    %v1446 = vsel %vm131, %v1445, 0.0
    %v1447 = vsel %vm132, %v1436, 0.0
    %v1448 = vsel %vm133, %v1438, 0.0
    %v1449 = vsel %vm134, %v1440, 0.0
    %v1450 = vrot.slane %v1426, 1
    %v1451 = vrot.slane %v1427, 1
    %v1452 = vsel %vm172, %v1450, %v1451
    %v1453 = vrot.slane %v1428, 1
    %v1454 = vsel %vm172, %v1451, %v1453
    %v1455 = vrot.slane %v1429, 1
    %v1456 = vsel %vm172, %v1453, %v1455
    %v1461 = vsel %vm172, %v1455, 0.0
    %v1462 = vsel %vm168, %v1452, 0.0
    %v1463 = vsel %vm169, %v1454, 0.0
    %v1464 = vsel %vm170, %v1456, 0.0
    %v1465 = vsel %vm171, %v1461, 0.0
    %v1466 = vpack.c.bf16 %v1447, %v1446
    %v1467 = vpack.c.bf16 %v1427, %v1426
    %v1468 = vpack.c.bf16 %v1463, %v1462
    %v1469 = vpack.c.bf16 %v1449, %v1448
    %v1470 = vpack.c.bf16 %v1429, %v1428
    %v1471 = vpack.c.bf16 %v1465, %v1464
    %v1472 = vld [vmem:[#allocation5 + $0x340] sm:$0xf]
    %v1473 = vld [vmem:[#allocation5 + $0x344] sm:$0xf]
    %v1474 = vld [vmem:[#allocation5 + $0x348] sm:$0xf]
    %v1475 = vld [vmem:[#allocation5 + $0x34c] sm:$0xf]
    %v1476 = vld [vmem:[#allocation5 + $0x350] sm:$0xf]
    %v1477 = vld [vmem:[#allocation5 + $0x354] sm:$0xf]
    %v1478 = vld [vmem:[#allocation5 + $0x358] sm:$0xf]
    %v1479 = vld [vmem:[#allocation5 + $0x35c] sm:$0xf]
    %v1480 = vld [vmem:[#allocation5 + $0x360] sm:$0xf]
    %v1481 = vld [vmem:[#allocation5 + $0x364] sm:$0xf]
    %v1482 = vld [vmem:[#allocation5 + $0x368] sm:$0xf]
    %v1483 = vld [vmem:[#allocation5 + $0x36c] sm:$0xf]
    %v1484 = vld [vmem:[#allocation5 + $0x370] sm:$0xf]
    %v1485 = vld [vmem:[#allocation5 + $0x374] sm:$0xf]
    %v1486 = vld [vmem:[#allocation5 + $0x378] sm:$0xf]
    %v1487 = vld [vmem:[#allocation5 + $0x37c] sm:$0xf]
    %v1488 = vld [vmem:[#allocation5 + $0x380] sm:$0xf]
    %v1489 = vld [vmem:[#allocation5 + $0x384] sm:$0xf]
    %v1490 = vld [vmem:[#allocation5 + $0x388] sm:$0xf]
    %v1491 = vld [vmem:[#allocation5 + $0x38c] sm:$0xf]
    %v1492 = vld [vmem:[#allocation5 + $0x390] sm:$0xf]
    %v1493 = vld [vmem:[#allocation5 + $0x394] sm:$0xf]
    %v1494 = vld [vmem:[#allocation5 + $0x398] sm:$0xf]
    %v1495 = vld [vmem:[#allocation5 + $0x39c] sm:$0xf]
    %v1496 = vld [vmem:[#allocation5 + $0x3a0] sm:$0xf]
    %v1497 = vld [vmem:[#allocation5 + $0x3a4] sm:$0xf]
    %v1498 = vld [vmem:[#allocation5 + $0x3a8] sm:$0xf]
    %v1499 = vld [vmem:[#allocation5 + $0x3ac] sm:$0xf]
    %v1500 = vld [vmem:[#allocation5 + $0x3b0] sm:$0xf]
    %v1501 = vld [vmem:[#allocation5 + $0x3b4] sm:$0xf]
    %v1502 = vld [vmem:[#allocation5 + $0x3b8] sm:$0xf]
    %v1503 = vld [vmem:[#allocation5 + $0x3bc] sm:$0xf]
    %v1504 = vld [vmem:[#allocation5 + $0x3c0] sm:$0xf]
    %v1505 = vld [vmem:[#allocation5 + $0x3c4] sm:$0xf]
    %v1506 = vld [vmem:[#allocation5 + $0x3c8] sm:$0xf]
    %v1507 = vld [vmem:[#allocation5 + $0x3cc] sm:$0xf]
    %v1508 = vld [vmem:[#allocation5 + $0x3d0] sm:$0xf]
    %v1509 = vld [vmem:[#allocation5 + $0x3d4] sm:$0xf]
    %v1510 = vld [vmem:[#allocation5 + $0x3d8] sm:$0xf]
    %v1511 = vld [vmem:[#allocation5 + $0x3dc] sm:$0xf]
    %v1512 = vld [vmem:[#allocation5 + $0x3e0] sm:$0xf]
    %v1513 = vld [vmem:[#allocation5 + $0x3e4] sm:$0xf]
    %v1514 = vld [vmem:[#allocation5 + $0x3e8] sm:$0xf]
    %v1515 = vld [vmem:[#allocation5 + $0x3ec] sm:$0xf]
    %v1516 = vld [vmem:[#allocation5 + $0x3f0] sm:$0xf]
    %v1517 = vld [vmem:[#allocation5 + $0x3f4] sm:$0xf]
    %v1518 = vld [vmem:[#allocation5 + $0x3f8] sm:$0xf]
    %v1519 = vld [vmem:[#allocation5 + $0x3fc] sm:$0xf]
    %v1520 = vld [vmem:[#allocation7 + $0x5] sm:$0x1]
    %v1521 = vperm.slane %v1520, 0
    %v1570 = vunpack.c.l.b16 %v1472
    %v1571 = vunpack.c.l.b16 %v1473
    %v1572 = vunpack.c.l.b16 %v1474
    %v1573 = vunpack.c.l.b16 %v1475
    %v1574 = vunpack.c.l.b16 %v1476
    %v1575 = vunpack.c.l.b16 %v1477
    %v1576 = vunpack.c.l.b16 %v1478
    %v1577 = vunpack.c.l.b16 %v1479
    %v1578 = vunpack.c.l.b16 %v1480
    %v1579 = vunpack.c.l.b16 %v1481
    %v1580 = vunpack.c.l.b16 %v1482
    %v1581 = vunpack.c.l.b16 %v1483
    %v1582 = vunpack.c.l.b16 %v1484
    %v1583 = vunpack.c.l.b16 %v1485
    %v1584 = vunpack.c.l.b16 %v1486
    %v1585 = vunpack.c.l.b16 %v1487
    %v1586 = vunpack.c.l.b16 %v1488
    %v1587 = vunpack.c.l.b16 %v1489
    %v1588 = vunpack.c.l.b16 %v1490
    %v1589 = vunpack.c.l.b16 %v1491
    %v1590 = vunpack.c.l.b16 %v1492
    %v1591 = vunpack.c.l.b16 %v1493
    %v1592 = vunpack.c.l.b16 %v1494
    %v1593 = vunpack.c.l.b16 %v1495
    %v1594 = vunpack.c.l.b16 %v1496
    %v1595 = vunpack.c.l.b16 %v1497
    %v1596 = vunpack.c.l.b16 %v1498
    %v1597 = vunpack.c.l.b16 %v1499
    %v1598 = vunpack.c.l.b16 %v1500
    %v1599 = vunpack.c.l.b16 %v1501
    %v1600 = vunpack.c.l.b16 %v1502
    %v1601 = vunpack.c.l.b16 %v1503
    %v1602 = vunpack.c.l.b16 %v1504
    %v1603 = vunpack.c.l.b16 %v1505
    %v1604 = vunpack.c.l.b16 %v1506
    %v1605 = vunpack.c.l.b16 %v1507
    %v1606 = vunpack.c.l.b16 %v1508
    %v1607 = vunpack.c.l.b16 %v1509
    %v1608 = vunpack.c.l.b16 %v1510
    %v1609 = vunpack.c.l.b16 %v1511
    %v1610 = vunpack.c.l.b16 %v1512
    %v1611 = vunpack.c.l.b16 %v1513
    %v1612 = vunpack.c.l.b16 %v1514
    %v1613 = vunpack.c.l.b16 %v1515
    %v1614 = vunpack.c.l.b16 %v1516
    %v1615 = vunpack.c.l.b16 %v1517
    %v1616 = vunpack.c.l.b16 %v1518
    %v1617 = vunpack.c.l.b16 %v1519
    %v1618 = vpack.c.b16 %v1571, %v1570
    %v1619 = vpack.c.b16 %v1573, %v1572
    %v1620 = vpack.c.b16 %v1575, %v1574
    %v1621 = vpack.c.b16 %v1577, %v1576
    %v1622 = vpack.c.b16 %v1579, %v1578
    %v1623 = vpack.c.b16 %v1581, %v1580
    %v1624 = vpack.c.b16 %v1583, %v1582
    %v1625 = vpack.c.b16 %v1585, %v1584
    %v1626 = vpack.c.b16 %v1587, %v1586
    %v1627 = vpack.c.b16 %v1589, %v1588
    %v1628 = vpack.c.b16 %v1591, %v1590
    %v1629 = vpack.c.b16 %v1593, %v1592
    %v1630 = vpack.c.b16 %v1595, %v1594
    %v1631 = vpack.c.b16 %v1597, %v1596
    %v1632 = vpack.c.b16 %v1599, %v1598
    %v1633 = vpack.c.b16 %v1601, %v1600
    %v1634 = vpack.c.b16 %v1603, %v1602
    %v1635 = vpack.c.b16 %v1605, %v1604
    %v1636 = vpack.c.b16 %v1607, %v1606
    %v1637 = vpack.c.b16 %v1609, %v1608
    %v1638 = vpack.c.b16 %v1611, %v1610
    %v1639 = vpack.c.b16 %v1613, %v1612
    %v1640 = vpack.c.b16 %v1615, %v1614
    %v1641 = vpack.c.b16 %v1617, %v1616
    %1666 = vmatpush.bf16.msra.mxu0 %v1625
    %1667 = vmatpush.bf16.msra.mxu0 %v1624
    %1668 = vmatpush.bf16.msra.mxu0 %v1623
    %1669 = vmatpush.bf16.msra.mxu0 %v1622
    %1670 = vmatpush.bf16.msra.mxu0 %v1621
    %1671 = vmatpush.bf16.msra.mxu0 %v1620
    %1672 = vmatpush.bf16.msra.mxu0 %v1619
    %1673 = vmatpush.bf16.msra.mxu0 %v1618
    %1674 = vmatmul.bf16.gmra.mxu0 %v1466
    %v1675 = vpop.f32.mrf.mxu0
    %v1676 = vadd.f32 %v1521, %v1675
    %v1677 = vpop.f32.mrf.mxu0
    %v1678 = vadd.f32 %v1521, %v1677
    %1679 = vmatmul.bf16.gmra.mxu0 %v1469
    %v1680 = vpop.f32.mrf.mxu0
    %v1681 = vadd.f32 %v1521, %v1680
    %v1682 = vpop.f32.mrf.mxu0
    %v1683 = vadd.f32 %v1521, %v1682
    %1684 = vdwg.mxu0
    %1685 = vmatpush.bf16.msra.mxu0 %v1633
    %1686 = vmatpush.bf16.msra.mxu0 %v1632
    %1687 = vmatpush.bf16.msra.mxu0 %v1631
    %1688 = vmatpush.bf16.msra.mxu0 %v1630
    %1689 = vmatpush.bf16.msra.mxu0 %v1629
    %1690 = vmatpush.bf16.msra.mxu0 %v1628
    %1691 = vmatpush.bf16.msra.mxu0 %v1627
    %1692 = vmatpush.bf16.msra.mxu0 %v1626
    %1693 = vmatmul.bf16.gmra.mxu0 %v1467
    %v1694 = vpop.f32.mrf.mxu0
    %v1695 = vadd.f32 %v1676, %v1694
    %v1696 = vpop.f32.mrf.mxu0
    %v1697 = vadd.f32 %v1678, %v1696
    %1698 = vmatmul.bf16.gmra.mxu0 %v1470
    %v1699 = vpop.f32.mrf.mxu0
    %v1700 = vadd.f32 %v1681, %v1699
    %v1701 = vpop.f32.mrf.mxu0
    %v1702 = vadd.f32 %v1683, %v1701
    %1703 = vdwg.mxu0
    %1704 = vmatpush.bf16.msra.mxu0 %v1641
    %1705 = vmatpush.bf16.msra.mxu0 %v1640
    %1706 = vmatpush.bf16.msra.mxu0 %v1639
    %1707 = vmatpush.bf16.msra.mxu0 %v1638
    %1708 = vmatpush.bf16.msra.mxu0 %v1637
    %1709 = vmatpush.bf16.msra.mxu0 %v1636
    %1710 = vmatpush.bf16.msra.mxu0 %v1635
    %1711 = vmatpush.bf16.msra.mxu0 %v1634
    %1712 = vmatmul.bf16.gmra.mxu0 %v1468
    %v1713 = vpop.f32.mrf.mxu0
    %v1714 = vadd.f32 %v1695, %v1713
    %v1715 = vpop.f32.mrf.mxu0
    %v1716 = vadd.f32 %v1697, %v1715
    %1717 = vmatmul.bf16.gmra.mxu0 %v1471
    %v1718 = vpop.f32.mrf.mxu0
    %v1719 = vadd.f32 %v1700, %v1718
    %v1720 = vpop.f32.mrf.mxu0
    %v1721 = vadd.f32 %v1702, %v1720
    %1722 = vdwg.mxu0
    %v1723 = vmax.f32 %v1714, 0.0
    %v1724 = vmax.f32 %v1716, 0.0
    %v1725 = vmax.f32 %v1719, 0.0
    %v1726 = vmax.f32 %v1721, 0.0
    %v1731 = vrot.slane %v1723, 7
    %v1732 = vrot.slane %v1724, 7
    %v1733 = vsel %vm139, %v1731, %v1732
    %v1734 = vrot.slane %v1725, 7
    %v1735 = vsel %vm139, %v1732, %v1734
    %v1736 = vrot.slane %v1726, 7
    %v1737 = vsel %vm139, %v1734, %v1736
    %v1742 = vsel %vm139, 0.0, %v1731
    %v1743 = vsel %vm131, %v1742, 0.0
    %v1744 = vsel %vm132, %v1733, 0.0
    %v1745 = vsel %vm133, %v1735, 0.0
    %v1746 = vsel %vm134, %v1737, 0.0
    %v1747 = vrot.slane %v1723, 1
    %v1748 = vrot.slane %v1724, 1
    %v1749 = vsel %vm172, %v1747, %v1748
    %v1750 = vrot.slane %v1725, 1
    %v1751 = vsel %vm172, %v1748, %v1750
    %v1752 = vrot.slane %v1726, 1
    %v1753 = vsel %vm172, %v1750, %v1752
    %v1758 = vsel %vm172, %v1752, 0.0
    %v1759 = vsel %vm168, %v1749, 0.0
    %v1760 = vsel %vm169, %v1751, 0.0
    %v1761 = vsel %vm170, %v1753, 0.0
    %v1762 = vsel %vm171, %v1758, 0.0
    %v1763 = vpack.c.bf16 %v1744, %v1743
    %v1764 = vpack.c.bf16 %v1724, %v1723
    %v1765 = vpack.c.bf16 %v1760, %v1759
    %v1766 = vpack.c.bf16 %v1746, %v1745
    %v1767 = vpack.c.bf16 %v1726, %v1725
    %v1768 = vpack.c.bf16 %v1762, %v1761
    %v1769 = vld [vmem:[#allocation5 + $0x400] sm:$0xf]
    %v1770 = vld [vmem:[#allocation5 + $0x404] sm:$0xf]
    %v1771 = vld [vmem:[#allocation5 + $0x408] sm:$0xf]
    %v1772 = vld [vmem:[#allocation5 + $0x40c] sm:$0xf]
    %v1773 = vld [vmem:[#allocation5 + $0x410] sm:$0xf]
    %v1774 = vld [vmem:[#allocation5 + $0x414] sm:$0xf]
    %v1775 = vld [vmem:[#allocation5 + $0x418] sm:$0xf]
    %v1776 = vld [vmem:[#allocation5 + $0x41c] sm:$0xf]
    %v1777 = vld [vmem:[#allocation5 + $0x420] sm:$0xf]
    %v1778 = vld [vmem:[#allocation5 + $0x424] sm:$0xf]
    %v1779 = vld [vmem:[#allocation5 + $0x428] sm:$0xf]
    %v1780 = vld [vmem:[#allocation5 + $0x42c] sm:$0xf]
    %v1781 = vld [vmem:[#allocation5 + $0x430] sm:$0xf]
    %v1782 = vld [vmem:[#allocation5 + $0x434] sm:$0xf]
    %v1783 = vld [vmem:[#allocation5 + $0x438] sm:$0xf]
    %v1784 = vld [vmem:[#allocation5 + $0x43c] sm:$0xf]
    %v1785 = vld [vmem:[#allocation5 + $0x440] sm:$0xf]
    %v1786 = vld [vmem:[#allocation5 + $0x444] sm:$0xf]
    %v1787 = vld [vmem:[#allocation5 + $0x448] sm:$0xf]
    %v1788 = vld [vmem:[#allocation5 + $0x44c] sm:$0xf]
    %v1789 = vld [vmem:[#allocation5 + $0x450] sm:$0xf]
    %v1790 = vld [vmem:[#allocation5 + $0x454] sm:$0xf]
    %v1791 = vld [vmem:[#allocation5 + $0x458] sm:$0xf]
    %v1792 = vld [vmem:[#allocation5 + $0x45c] sm:$0xf]
    %v1793 = vld [vmem:[#allocation5 + $0x460] sm:$0xf]
    %v1794 = vld [vmem:[#allocation5 + $0x464] sm:$0xf]
    %v1795 = vld [vmem:[#allocation5 + $0x468] sm:$0xf]
    %v1796 = vld [vmem:[#allocation5 + $0x46c] sm:$0xf]
    %v1797 = vld [vmem:[#allocation5 + $0x470] sm:$0xf]
    %v1798 = vld [vmem:[#allocation5 + $0x474] sm:$0xf]
    %v1799 = vld [vmem:[#allocation5 + $0x478] sm:$0xf]
    %v1800 = vld [vmem:[#allocation5 + $0x47c] sm:$0xf]
    %v1801 = vld [vmem:[#allocation5 + $0x480] sm:$0xf]
    %v1802 = vld [vmem:[#allocation5 + $0x484] sm:$0xf]
    %v1803 = vld [vmem:[#allocation5 + $0x488] sm:$0xf]
    %v1804 = vld [vmem:[#allocation5 + $0x48c] sm:$0xf]
    %v1805 = vld [vmem:[#allocation5 + $0x490] sm:$0xf]
    %v1806 = vld [vmem:[#allocation5 + $0x494] sm:$0xf]
    %v1807 = vld [vmem:[#allocation5 + $0x498] sm:$0xf]
    %v1808 = vld [vmem:[#allocation5 + $0x49c] sm:$0xf]
    %v1809 = vld [vmem:[#allocation5 + $0x4a0] sm:$0xf]
    %v1810 = vld [vmem:[#allocation5 + $0x4a4] sm:$0xf]
    %v1811 = vld [vmem:[#allocation5 + $0x4a8] sm:$0xf]
    %v1812 = vld [vmem:[#allocation5 + $0x4ac] sm:$0xf]
    %v1813 = vld [vmem:[#allocation5 + $0x4b0] sm:$0xf]
    %v1814 = vld [vmem:[#allocation5 + $0x4b4] sm:$0xf]
    %v1815 = vld [vmem:[#allocation5 + $0x4b8] sm:$0xf]
    %v1816 = vld [vmem:[#allocation5 + $0x4bc] sm:$0xf]
    %v1817 = vld [vmem:[#allocation7 + $0x6] sm:$0x1]
    %v1818 = vperm.slane %v1817, 0
    %v1867 = vunpack.c.l.b16 %v1769
    %v1868 = vunpack.c.l.b16 %v1770
    %v1869 = vunpack.c.l.b16 %v1771
    %v1870 = vunpack.c.l.b16 %v1772
    %v1871 = vunpack.c.l.b16 %v1773
    %v1872 = vunpack.c.l.b16 %v1774
    %v1873 = vunpack.c.l.b16 %v1775
    %v1874 = vunpack.c.l.b16 %v1776
    %v1875 = vunpack.c.l.b16 %v1777
    %v1876 = vunpack.c.l.b16 %v1778
    %v1877 = vunpack.c.l.b16 %v1779
    %v1878 = vunpack.c.l.b16 %v1780
    %v1879 = vunpack.c.l.b16 %v1781
    %v1880 = vunpack.c.l.b16 %v1782
    %v1881 = vunpack.c.l.b16 %v1783
    %v1882 = vunpack.c.l.b16 %v1784
    %v1883 = vunpack.c.l.b16 %v1785
    %v1884 = vunpack.c.l.b16 %v1786
    %v1885 = vunpack.c.l.b16 %v1787
    %v1886 = vunpack.c.l.b16 %v1788
    %v1887 = vunpack.c.l.b16 %v1789
    %v1888 = vunpack.c.l.b16 %v1790
    %v1889 = vunpack.c.l.b16 %v1791
    %v1890 = vunpack.c.l.b16 %v1792
    %v1891 = vunpack.c.l.b16 %v1793
    %v1892 = vunpack.c.l.b16 %v1794
    %v1893 = vunpack.c.l.b16 %v1795
    %v1894 = vunpack.c.l.b16 %v1796
    %v1895 = vunpack.c.l.b16 %v1797
    %v1896 = vunpack.c.l.b16 %v1798
    %v1897 = vunpack.c.l.b16 %v1799
    %v1898 = vunpack.c.l.b16 %v1800
    %v1899 = vunpack.c.l.b16 %v1801
    %v1900 = vunpack.c.l.b16 %v1802
    %v1901 = vunpack.c.l.b16 %v1803
    %v1902 = vunpack.c.l.b16 %v1804
    %v1903 = vunpack.c.l.b16 %v1805
    %v1904 = vunpack.c.l.b16 %v1806
    %v1905 = vunpack.c.l.b16 %v1807
    %v1906 = vunpack.c.l.b16 %v1808
    %v1907 = vunpack.c.l.b16 %v1809
    %v1908 = vunpack.c.l.b16 %v1810
    %v1909 = vunpack.c.l.b16 %v1811
    %v1910 = vunpack.c.l.b16 %v1812
    %v1911 = vunpack.c.l.b16 %v1813
    %v1912 = vunpack.c.l.b16 %v1814
    %v1913 = vunpack.c.l.b16 %v1815
    %v1914 = vunpack.c.l.b16 %v1816
    %v1915 = vpack.c.b16 %v1868, %v1867
    %v1916 = vpack.c.b16 %v1870, %v1869
    %v1917 = vpack.c.b16 %v1872, %v1871
    %v1918 = vpack.c.b16 %v1874, %v1873
    %v1919 = vpack.c.b16 %v1876, %v1875
    %v1920 = vpack.c.b16 %v1878, %v1877
    %v1921 = vpack.c.b16 %v1880, %v1879
    %v1922 = vpack.c.b16 %v1882, %v1881
    %v1923 = vpack.c.b16 %v1884, %v1883
    %v1924 = vpack.c.b16 %v1886, %v1885
    %v1925 = vpack.c.b16 %v1888, %v1887
    %v1926 = vpack.c.b16 %v1890, %v1889
    %v1927 = vpack.c.b16 %v1892, %v1891
    %v1928 = vpack.c.b16 %v1894, %v1893
    %v1929 = vpack.c.b16 %v1896, %v1895
    %v1930 = vpack.c.b16 %v1898, %v1897
    %v1931 = vpack.c.b16 %v1900, %v1899
    %v1932 = vpack.c.b16 %v1902, %v1901
    %v1933 = vpack.c.b16 %v1904, %v1903
    %v1934 = vpack.c.b16 %v1906, %v1905
    %v1935 = vpack.c.b16 %v1908, %v1907
    %v1936 = vpack.c.b16 %v1910, %v1909
    %v1937 = vpack.c.b16 %v1912, %v1911
    %v1938 = vpack.c.b16 %v1914, %v1913
    %1963 = vmatpush.bf16.msra.mxu0 %v1922
    %1964 = vmatpush.bf16.msra.mxu0 %v1921
    %1965 = vmatpush.bf16.msra.mxu0 %v1920
    %1966 = vmatpush.bf16.msra.mxu0 %v1919
    %1967 = vmatpush.bf16.msra.mxu0 %v1918
    %1968 = vmatpush.bf16.msra.mxu0 %v1917
    %1969 = vmatpush.bf16.msra.mxu0 %v1916
    %1970 = vmatpush.bf16.msra.mxu0 %v1915
    %1971 = vmatmul.bf16.gmra.mxu0 %v1763
    %v1972 = vpop.f32.mrf.mxu0
    %v1973 = vadd.f32 %v1818, %v1972
    %v1974 = vpop.f32.mrf.mxu0
    %v1975 = vadd.f32 %v1818, %v1974
    %1976 = vmatmul.bf16.gmra.mxu0 %v1766
    %v1977 = vpop.f32.mrf.mxu0
    %v1978 = vadd.f32 %v1818, %v1977
    %v1979 = vpop.f32.mrf.mxu0
    %v1980 = vadd.f32 %v1818, %v1979
    %1981 = vdwg.mxu0
    %1982 = vmatpush.bf16.msra.mxu0 %v1930
    %1983 = vmatpush.bf16.msra.mxu0 %v1929
    %1984 = vmatpush.bf16.msra.mxu0 %v1928
    %1985 = vmatpush.bf16.msra.mxu0 %v1927
    %1986 = vmatpush.bf16.msra.mxu0 %v1926
    %1987 = vmatpush.bf16.msra.mxu0 %v1925
    %1988 = vmatpush.bf16.msra.mxu0 %v1924
    %1989 = vmatpush.bf16.msra.mxu0 %v1923
    %1990 = vmatmul.bf16.gmra.mxu0 %v1764
    %v1991 = vpop.f32.mrf.mxu0
    %v1992 = vadd.f32 %v1973, %v1991
    %v1993 = vpop.f32.mrf.mxu0
    %v1994 = vadd.f32 %v1975, %v1993
    %1995 = vmatmul.bf16.gmra.mxu0 %v1767
    %v1996 = vpop.f32.mrf.mxu0
    %v1997 = vadd.f32 %v1978, %v1996
    %v1998 = vpop.f32.mrf.mxu0
    %v1999 = vadd.f32 %v1980, %v1998
    %2000 = vdwg.mxu0
    %2001 = vmatpush.bf16.msra.mxu0 %v1938
    %2002 = vmatpush.bf16.msra.mxu0 %v1937
    %2003 = vmatpush.bf16.msra.mxu0 %v1936
    %2004 = vmatpush.bf16.msra.mxu0 %v1935
    %2005 = vmatpush.bf16.msra.mxu0 %v1934
    %2006 = vmatpush.bf16.msra.mxu0 %v1933
    %2007 = vmatpush.bf16.msra.mxu0 %v1932
    %2008 = vmatpush.bf16.msra.mxu0 %v1931
    %2009 = vmatmul.bf16.gmra.mxu0 %v1765
    %v2010 = vpop.f32.mrf.mxu0
    %v2011 = vadd.f32 %v1992, %v2010
    %v2012 = vpop.f32.mrf.mxu0
    %v2013 = vadd.f32 %v1994, %v2012
    %2014 = vmatmul.bf16.gmra.mxu0 %v1768
    %v2015 = vpop.f32.mrf.mxu0
    %v2016 = vadd.f32 %v1997, %v2015
    %v2017 = vpop.f32.mrf.mxu0
    %v2018 = vadd.f32 %v1999, %v2017
    %2019 = vdwg.mxu0
    %v2020 = vmax.f32 %v2011, 0.0
    %v2021 = vmax.f32 %v2013, 0.0
    %v2022 = vmax.f32 %v2016, 0.0
    %v2023 = vmax.f32 %v2018, 0.0
    %v2024 = vld [vmem:[#allocation5 + $0x4c0] sm:$0xf]
    %v2025 = vld [vmem:[#allocation5 + $0x4c4] sm:$0xf]
    %v2026 = vld [vmem:[#allocation5 + $0x4c8] sm:$0xf]
    %v2027 = vld [vmem:[#allocation5 + $0x4cc] sm:$0xf]
    %v2028 = vld [vmem:[#allocation5 + $0x4d0] sm:$0xf]
    %v2029 = vld [vmem:[#allocation5 + $0x4d4] sm:$0xf]
    %v2030 = vld [vmem:[#allocation5 + $0x4d8] sm:$0xf]
    %v2031 = vld [vmem:[#allocation5 + $0x4dc] sm:$0xf]
    %v2032 = vld [vmem:[#allocation5 + $0x4e0] sm:$0xf]
    %v2033 = vld [vmem:[#allocation5 + $0x4e4] sm:$0xf]
    %v2034 = vld [vmem:[#allocation5 + $0x4e8] sm:$0xf]
    %v2035 = vld [vmem:[#allocation5 + $0x4ec] sm:$0xf]
    %v2036 = vld [vmem:[#allocation5 + $0x4f0] sm:$0xf]
    %v2037 = vld [vmem:[#allocation5 + $0x4f4] sm:$0xf]
    %v2038 = vld [vmem:[#allocation5 + $0x4f8] sm:$0xf]
    %v2039 = vld [vmem:[#allocation5 + $0x4fc] sm:$0xf]
    %v2040 = vld [vmem:[#allocation7 + $0x7] sm:$0x1]
    %v2041 = vperm.slane %v2040, 0
    %v2058 = vunpack.c.l.b16 %v2024
    %v2059 = vunpack.c.l.b16 %v2025
    %v2060 = vunpack.c.l.b16 %v2026
    %v2061 = vunpack.c.l.b16 %v2027
    %v2062 = vunpack.c.l.b16 %v2028
    %v2063 = vunpack.c.l.b16 %v2029
    %v2064 = vunpack.c.l.b16 %v2030
    %v2065 = vunpack.c.l.b16 %v2031
    %v2066 = vunpack.c.l.b16 %v2032
    %v2067 = vunpack.c.l.b16 %v2033
    %v2068 = vunpack.c.l.b16 %v2034
    %v2069 = vunpack.c.l.b16 %v2035
    %v2070 = vunpack.c.l.b16 %v2036
    %v2071 = vunpack.c.l.b16 %v2037
    %v2072 = vunpack.c.l.b16 %v2038
    %v2073 = vunpack.c.l.b16 %v2039
    %v2074 = vpack.c.b16 %v2059, %v2058
    %v2075 = vpack.c.b16 %v2061, %v2060
    %v2076 = vpack.c.b16 %v2063, %v2062
    %v2077 = vpack.c.b16 %v2065, %v2064
    %v2078 = vpack.c.b16 %v2067, %v2066
    %v2079 = vpack.c.b16 %v2069, %v2068
    %v2080 = vpack.c.b16 %v2071, %v2070
    %v2081 = vpack.c.b16 %v2073, %v2072
    %2090 = vmatpush.bf16.msra.mxu0 %v2081
    %2091 = vmatpush.bf16.msra.mxu0 %v2080
    %2092 = vmatpush.bf16.msra.mxu0 %v2079
    %2093 = vmatpush.bf16.msra.mxu0 %v2078
    %2094 = vmatpush.bf16.msra.mxu0 %v2077
    %2095 = vmatpush.bf16.msra.mxu0 %v2076
    %2096 = vmatpush.bf16.msra.mxu0 %v2075
    %2097 = vmatpush.bf16.msra.mxu0 %v2074
    %2098 = vmatmul.bf16.gmra.mxu0 %v1170
    %v2099 = vpop.f32.mrf.mxu0
    %v2100 = vadd.f32 %v2041, %v2099
    %v2101 = vpop.f32.mrf.mxu0
    %v2102 = vadd.f32 %v2041, %v2101
    %2103 = vmatmul.bf16.gmra.mxu0 %v1173
    %v2104 = vpop.f32.mrf.mxu0
    %v2105 = vadd.f32 %v2041, %v2104
    %v2106 = vpop.f32.mrf.mxu0
    %v2107 = vadd.f32 %v2041, %v2106
    %2108 = vdwg.mxu0
    %v2109 = vadd.f32 %v2020, %v2100
    %v2110 = vadd.f32 %v2021, %v2102
    %v2111 = vadd.f32 %v2022, %v2105
    %v2112 = vadd.f32 %v2023, %v2107
    %v2117 = vrot.slane %v2109, 2
    %v2118 = vrot.slane %v2109, 4
    %v2119 = vrot.slane %v2109, 6
    %v2120 = vrot.slane %v2110, 2
    %v2121 = vrot.slane %v2110, 4
    %v2122 = vrot.slane %v2110, 6
    %v2123 = vrot.slane %v2111, 2
    %v2124 = vrot.slane %v2111, 4
    %v2125 = vrot.slane %v2111, 6
    %v2126 = vrot.slane %v2112, 2
    %v2127 = vrot.slane %v2112, 4
    %v2128 = vrot.slane %v2112, 6
    %vm2141 = vcmask 1041408
    %v2142 = vsel %vm2141, %v2109, -inf
    %v2143 = vrot.slane %v2142, 4
    %v2144 = vmax.f32 %v2142, %v2143
    %v2145 = vrot.slane %v2144, 2
    %v2146 = vmax.f32 %v2144, %v2145
    %v2147 = vrot.slane %v2146, 1
    %v2148 = vmax.f32 %v2146, %v2147
    %v2149 = vsel %vm2141, %v2117, -inf
    %v2150 = vrot.slane %v2149, 4
    %v2151 = vmax.f32 %v2149, %v2150
    %v2152 = vrot.slane %v2151, 2
    %v2153 = vmax.f32 %v2151, %v2152
    %v2154 = vrot.slane %v2153, 1
    %v2155 = vmax.f32 %v2153, %v2154
    %v2156 = vsel %vm2141, %v2118, -inf
    %v2157 = vrot.slane %v2156, 4
    %v2158 = vmax.f32 %v2156, %v2157
    %v2159 = vrot.slane %v2158, 2
    %v2160 = vmax.f32 %v2158, %v2159
    %v2161 = vrot.slane %v2160, 1
    %v2162 = vmax.f32 %v2160, %v2161
    %v2163 = vsel %vm2141, %v2119, -inf
    %v2164 = vrot.slane %v2163, 4
    %v2165 = vmax.f32 %v2163, %v2164
    %v2166 = vrot.slane %v2165, 2
    %v2167 = vmax.f32 %v2165, %v2166
    %v2168 = vrot.slane %v2167, 1
    %v2169 = vmax.f32 %v2167, %v2168
    %v2170 = vsel %vm2141, %v2110, -inf
    %v2171 = vrot.slane %v2170, 4
    %v2172 = vmax.f32 %v2170, %v2171
    %v2173 = vrot.slane %v2172, 2
    %v2174 = vmax.f32 %v2172, %v2173
    %v2175 = vrot.slane %v2174, 1
    %v2176 = vmax.f32 %v2174, %v2175
    %v2177 = vsel %vm2141, %v2120, -inf
    %v2178 = vrot.slane %v2177, 4
    %v2179 = vmax.f32 %v2177, %v2178
    %v2180 = vrot.slane %v2179, 2
    %v2181 = vmax.f32 %v2179, %v2180
    %v2182 = vrot.slane %v2181, 1
    %v2183 = vmax.f32 %v2181, %v2182
    %v2184 = vsel %vm2141, %v2121, -inf
    %v2185 = vrot.slane %v2184, 4
    %v2186 = vmax.f32 %v2184, %v2185
    %v2187 = vrot.slane %v2186, 2
    %v2188 = vmax.f32 %v2186, %v2187
    %v2189 = vrot.slane %v2188, 1
    %v2190 = vmax.f32 %v2188, %v2189
    %v2191 = vsel %vm2141, %v2122, -inf
    %v2192 = vrot.slane %v2191, 4
    %v2193 = vmax.f32 %v2191, %v2192
    %v2194 = vrot.slane %v2193, 2
    %v2195 = vmax.f32 %v2193, %v2194
    %v2196 = vrot.slane %v2195, 1
    %v2197 = vmax.f32 %v2195, %v2196
    %v2198 = vsel %vm2141, %v2111, -inf
    %v2199 = vrot.slane %v2198, 4
    %v2200 = vmax.f32 %v2198, %v2199
    %v2201 = vrot.slane %v2200, 2
    %v2202 = vmax.f32 %v2200, %v2201
    %v2203 = vrot.slane %v2202, 1
    %v2204 = vmax.f32 %v2202, %v2203
    %v2205 = vsel %vm2141, %v2123, -inf
    %v2206 = vrot.slane %v2205, 4
    %v2207 = vmax.f32 %v2205, %v2206
    %v2208 = vrot.slane %v2207, 2
    %v2209 = vmax.f32 %v2207, %v2208
    %v2210 = vrot.slane %v2209, 1
    %v2211 = vmax.f32 %v2209, %v2210
    %v2212 = vsel %vm2141, %v2124, -inf
    %v2213 = vrot.slane %v2212, 4
    %v2214 = vmax.f32 %v2212, %v2213
    %v2215 = vrot.slane %v2214, 2
    %v2216 = vmax.f32 %v2214, %v2215
    %v2217 = vrot.slane %v2216, 1
    %v2218 = vmax.f32 %v2216, %v2217
    %v2219 = vsel %vm2141, %v2125, -inf
    %v2220 = vrot.slane %v2219, 4
    %v2221 = vmax.f32 %v2219, %v2220
    %v2222 = vrot.slane %v2221, 2
    %v2223 = vmax.f32 %v2221, %v2222
    %v2224 = vrot.slane %v2223, 1
    %v2225 = vmax.f32 %v2223, %v2224
    %v2226 = vsel %vm2141, %v2112, -inf
    %v2227 = vrot.slane %v2226, 4
    %v2228 = vmax.f32 %v2226, %v2227
    %v2229 = vrot.slane %v2228, 2
    %v2230 = vmax.f32 %v2228, %v2229
    %v2231 = vrot.slane %v2230, 1
    %v2232 = vmax.f32 %v2230, %v2231
    %v2233 = vsel %vm2141, %v2126, -inf
    %v2234 = vrot.slane %v2233, 4
    %v2235 = vmax.f32 %v2233, %v2234
    %v2236 = vrot.slane %v2235, 2
    %v2237 = vmax.f32 %v2235, %v2236
    %v2238 = vrot.slane %v2237, 1
    %v2239 = vmax.f32 %v2237, %v2238
    %v2240 = vsel %vm2141, %v2127, -inf
    %v2241 = vrot.slane %v2240, 4
    %v2242 = vmax.f32 %v2240, %v2241
    %v2243 = vrot.slane %v2242, 2
    %v2244 = vmax.f32 %v2242, %v2243
    %v2245 = vrot.slane %v2244, 1
    %v2246 = vmax.f32 %v2244, %v2245
    %v2247 = vsel %vm2141, %v2128, -inf
    %v2248 = vrot.slane %v2247, 4
    %v2249 = vmax.f32 %v2247, %v2248
    %v2250 = vrot.slane %v2249, 2
    %v2251 = vmax.f32 %v2249, %v2250
    %v2252 = vrot.slane %v2251, 1
    %v2253 = vmax.f32 %v2251, %v2252
    %vm2254 = vcmp.lt.s32.totalorder %v67, 0
    %v2255 = vsub.s32 0, %v67
    %v2256 = vsel %vm2254, %v2255, %v67
    %v2257 = vshrl.u32 %v2256, 3
    %v2258 = vand.u32 %v2256, 7
    %v2259 = vsub.s32 0, %v2258
    %v2260 = vsel %vm2254, %v2259, %v2258
    %vm2261 = vcmp.lt.s32.totalorder %v68, 0
    %v2262 = vsub.s32 0, %v68
    %v2263 = vsel %vm2261, %v2262, %v68
    %v2264 = vshrl.u32 %v2263, 3
    %v2265 = vand.u32 %v2263, 7
    %v2266 = vsub.s32 0, %v2265
    %v2267 = vsel %vm2261, %v2266, %v2265
    %vm2268 = vcmp.ne.s32.totalorder %v2260, 0
    %vm2269 = vcmp.ne.s32.totalorder %v2267, 0
    %vm2270 = vcmp.lt.s32.totalorder %v2260, 0
    %vm2271 = vcmp.lt.s32.totalorder %v2267, 0
    %vm2272 = vmand %vm2270, %vm2268
    %vm2273 = vmand %vm2271, %vm2269
    %v2274 = vadd.s32 %v2260, 8
    %v2275 = vadd.s32 %v2267, 8
    %v2276 = vsel %vm2272, %v2274, %v2260
    %v2277 = vsel %vm2273, %v2275, %v2267
    %v2278 = vadd.s32 %v2276, 4294967294
    %v2279 = vadd.s32 %v2277, 4294967294
    %vm2280 = vcmp.ge.s32.totalorder %v2278, 0
    %vm2281 = vcmp.ge.s32.totalorder %v2279, 0
    %vm2282 = vcmp.lt.s32.totalorder %v2278, 8
    %vm2283 = vcmp.lt.s32.totalorder %v2279, 8
    %vm2284 = vmand %vm2280, %vm2282
    %vm2285 = vmand %vm2281, %vm2283
    %vm2300 = vcmask 1043459
    %v2301 = vsel %vm2300, %v2155, %v2148
    %vm2302 = vcmask 1044484
    %v2303 = vsel %vm2302, %v2162, %v2301
    %vm2304 = vcmask 1045509
    %v2305 = vsel %vm2304, %v2169, %v2303
    %vm2306 = vcmask 1046534
    %v2307 = vsel %vm2306, %v2176, %v2305
    %vm2308 = vcmask 1047559
    %v2309 = vsel %vm2308, %v2183, %v2307
    %vm2310 = vcmask 1041409
    %v2311 = vsel %vm2310, %v2197, %v2190
    %vm2312 = vcmask 1042434
    %v2313 = vsel %vm2312, %v2204, %v2311
    %v2314 = vsel %vm2300, %v2211, %v2313
    %v2315 = vsel %vm2302, %v2218, %v2314
    %v2316 = vsel %vm2304, %v2225, %v2315
    %v2317 = vsel %vm2306, %v2232, %v2316
    %v2318 = vsel %vm2308, %v2239, %v2317
    %v2321 = vsel %vm2141, 0.0, %v2309
    %v2322 = vsel %vm2284, %v2321, 0.0
    %v2323 = vsel %vm2285, %v2318, 0.0
    %v2324 = vadd.s32 %v2276, 4294967295
    %v2325 = vadd.s32 %v2277, 4294967295
    %vm2326 = vcmp.ge.s32.totalorder %v2324, 0
    %vm2327 = vcmp.ge.s32.totalorder %v2325, 0
    %vm2328 = vcmp.lt.s32.totalorder %v2324, 8
    %vm2329 = vcmp.lt.s32.totalorder %v2325, 8
    %vm2330 = vmand %vm2326, %vm2328
    %vm2331 = vmand %vm2327, %vm2329
    %v2333 = vsel %vm2312, %v2155, %v2148
    %v2334 = vsel %vm2300, %v2162, %v2333
    %v2335 = vsel %vm2302, %v2169, %v2334
    %v2336 = vsel %vm2304, %v2176, %v2335
    %v2337 = vsel %vm2306, %v2183, %v2336
    %v2338 = vsel %vm2308, %v2190, %v2337
    %v2339 = vsel %vm2310, %v2204, %v2197
    %v2340 = vsel %vm2312, %v2211, %v2339
    %v2341 = vsel %vm2300, %v2218, %v2340
    %v2342 = vsel %vm2302, %v2225, %v2341
    %v2343 = vsel %vm2304, %v2232, %v2342
    %v2344 = vsel %vm2306, %v2239, %v2343
    %v2345 = vsel %vm2308, %v2246, %v2344
    %v2348 = vsel %vm139, 0.0, %v2338
    %v2349 = vsel %vm2330, %v2348, 0.0
    %v2350 = vsel %vm2331, %v2345, 0.0
    %v2351 = vadd.s32 %v2276, 1
    %v2352 = vadd.s32 %v2277, 1
    %vm2353 = vcmp.ge.s32.totalorder %v2351, 0
    %vm2354 = vcmp.ge.s32.totalorder %v2352, 0
    %vm2355 = vcmp.lt.s32.totalorder %v2351, 8
    %vm2356 = vcmp.lt.s32.totalorder %v2352, 8
    %vm2357 = vmand %vm2353, %vm2355
    %vm2358 = vmand %vm2354, %vm2356
    %v2360 = vsel %vm2310, %v2162, %v2155
    %v2361 = vsel %vm2312, %v2169, %v2360
    %v2362 = vsel %vm2300, %v2176, %v2361
    %v2363 = vsel %vm2302, %v2183, %v2362
    %v2364 = vsel %vm2304, %v2190, %v2363
    %v2365 = vsel %vm2306, %v2197, %v2364
    %v2366 = vsel %vm2308, %v2204, %v2365
    %v2367 = vsel %vm2310, %v2218, %v2211
    %v2368 = vsel %vm2312, %v2225, %v2367
    %v2369 = vsel %vm2300, %v2232, %v2368
    %v2370 = vsel %vm2302, %v2239, %v2369
    %v2371 = vsel %vm2304, %v2246, %v2370
    %v2372 = vsel %vm2306, %v2253, %v2371
    %v2375 = vsel %vm172, %v2372, 0.0
    %v2376 = vsel %vm2357, %v2366, 0.0
    %v2377 = vsel %vm2358, %v2375, 0.0
    %v2378 = vadd.s32 %v2276, 2
    %v2379 = vadd.s32 %v2277, 2
    %vm2380 = vcmp.ge.s32.totalorder %v2378, 0
    %vm2381 = vcmp.ge.s32.totalorder %v2379, 0
    %vm2382 = vcmp.lt.s32.totalorder %v2378, 8
    %vm2383 = vcmp.lt.s32.totalorder %v2379, 8
    %vm2384 = vmand %vm2380, %vm2382
    %vm2385 = vmand %vm2381, %vm2383
    %v2386 = vsel %vm2310, %v2169, %v2162
    %v2387 = vsel %vm2312, %v2176, %v2386
    %v2388 = vsel %vm2300, %v2183, %v2387
    %v2389 = vsel %vm2302, %v2190, %v2388
    %v2390 = vsel %vm2304, %v2197, %v2389
    %v2391 = vsel %vm2306, %v2204, %v2390
    %v2392 = vsel %vm2308, %v2211, %v2391
    %v2393 = vsel %vm2310, %v2225, %v2218
    %v2394 = vsel %vm2312, %v2232, %v2393
    %v2395 = vsel %vm2300, %v2239, %v2394
    %v2396 = vsel %vm2302, %v2246, %v2395
    %v2397 = vsel %vm2304, %v2253, %v2396
    %vm2400 = vcmask 1045504
    %v2401 = vsel %vm2400, %v2397, 0.0
    %v2402 = vsel %vm2384, %v2392, 0.0
    %v2403 = vsel %vm2385, %v2401, 0.0
    %v2404 = vsel %vm2310, %v2155, %v2148
    %v2405 = vsel %vm2312, %v2162, %v2404
    %v2406 = vsel %vm2300, %v2169, %v2405
    %v2407 = vsel %vm2302, %v2176, %v2406
    %v2408 = vsel %vm2304, %v2183, %v2407
    %v2409 = vsel %vm2306, %v2190, %v2408
    %v2410 = vsel %vm2308, %v2197, %v2409
    %v2411 = vsel %vm2310, %v2211, %v2204
    %v2412 = vsel %vm2312, %v2218, %v2411
    %v2413 = vsel %vm2300, %v2225, %v2412
    %v2414 = vsel %vm2302, %v2232, %v2413
    %v2415 = vsel %vm2304, %v2239, %v2414
    %v2416 = vsel %vm2306, %v2246, %v2415
    %v2417 = vsel %vm2308, %v2253, %v2416
    %v2420 = vpack.c.bf16 %v2323, %v2322
    %v2421 = vpack.c.bf16 %v2350, %v2349
    %v2422 = vpack.c.bf16 %v2417, %v2410
    %v2423 = vpack.c.bf16 %v2377, %v2376
    %v2424 = vpack.c.bf16 %v2403, %v2402
    %v2425 = vld [vmem:[#allocation5 + $0x500] sm:$0xf]
    %v2426 = vld [vmem:[#allocation5 + $0x504] sm:$0xf]
    %v2427 = vld [vmem:[#allocation5 + $0x508] sm:$0xf]
    %v2428 = vld [vmem:[#allocation5 + $0x50c] sm:$0xf]
    %v2429 = vld [vmem:[#allocation5 + $0x510] sm:$0xf]
    %v2430 = vld [vmem:[#allocation5 + $0x514] sm:$0xf]
    %v2431 = vld [vmem:[#allocation5 + $0x518] sm:$0xf]
    %v2432 = vld [vmem:[#allocation5 + $0x51c] sm:$0xf]
    %v2433 = vld [vmem:[#allocation5 + $0x520] sm:$0xf]
    %v2434 = vld [vmem:[#allocation5 + $0x524] sm:$0xf]
    %v2435 = vld [vmem:[#allocation5 + $0x528] sm:$0xf]
    %v2436 = vld [vmem:[#allocation5 + $0x52c] sm:$0xf]
    %v2437 = vld [vmem:[#allocation5 + $0x530] sm:$0xf]
    %v2438 = vld [vmem:[#allocation5 + $0x534] sm:$0xf]
    %v2439 = vld [vmem:[#allocation5 + $0x538] sm:$0xf]
    %v2440 = vld [vmem:[#allocation5 + $0x53c] sm:$0xf]
    %v2441 = vld [vmem:[#allocation5 + $0x540] sm:$0xf]
    %v2442 = vld [vmem:[#allocation5 + $0x544] sm:$0xf]
    %v2443 = vld [vmem:[#allocation5 + $0x548] sm:$0xf]
    %v2444 = vld [vmem:[#allocation5 + $0x54c] sm:$0xf]
    %v2445 = vld [vmem:[#allocation5 + $0x550] sm:$0xf]
    %v2446 = vld [vmem:[#allocation5 + $0x554] sm:$0xf]
    %v2447 = vld [vmem:[#allocation5 + $0x558] sm:$0xf]
    %v2448 = vld [vmem:[#allocation5 + $0x55c] sm:$0xf]
    %v2449 = vld [vmem:[#allocation5 + $0x560] sm:$0xf]
    %v2450 = vld [vmem:[#allocation5 + $0x564] sm:$0xf]
    %v2451 = vld [vmem:[#allocation5 + $0x568] sm:$0xf]
    %v2452 = vld [vmem:[#allocation5 + $0x56c] sm:$0xf]
    %v2453 = vld [vmem:[#allocation5 + $0x570] sm:$0xf]
    %v2454 = vld [vmem:[#allocation5 + $0x574] sm:$0xf]
    %v2455 = vld [vmem:[#allocation5 + $0x578] sm:$0xf]
    %v2456 = vld [vmem:[#allocation5 + $0x57c] sm:$0xf]
    %v2457 = vld [vmem:[#allocation5 + $0x580] sm:$0xf]
    %v2458 = vld [vmem:[#allocation5 + $0x584] sm:$0xf]
    %v2459 = vld [vmem:[#allocation5 + $0x588] sm:$0xf]
    %v2460 = vld [vmem:[#allocation5 + $0x58c] sm:$0xf]
    %v2461 = vld [vmem:[#allocation5 + $0x590] sm:$0xf]
    %v2462 = vld [vmem:[#allocation5 + $0x594] sm:$0xf]
    %v2463 = vld [vmem:[#allocation5 + $0x598] sm:$0xf]
    %v2464 = vld [vmem:[#allocation5 + $0x59c] sm:$0xf]
    %v2465 = vld [vmem:[#allocation5 + $0x5a0] sm:$0xf]
    %v2466 = vld [vmem:[#allocation5 + $0x5a4] sm:$0xf]
    %v2467 = vld [vmem:[#allocation5 + $0x5a8] sm:$0xf]
    %v2468 = vld [vmem:[#allocation5 + $0x5ac] sm:$0xf]
    %v2469 = vld [vmem:[#allocation5 + $0x5b0] sm:$0xf]
    %v2470 = vld [vmem:[#allocation5 + $0x5b4] sm:$0xf]
    %v2471 = vld [vmem:[#allocation5 + $0x5b8] sm:$0xf]
    %v2472 = vld [vmem:[#allocation5 + $0x5bc] sm:$0xf]
    %v2473 = vld [vmem:[#allocation5 + $0x5c0] sm:$0xf]
    %v2474 = vld [vmem:[#allocation5 + $0x5c4] sm:$0xf]
    %v2475 = vld [vmem:[#allocation5 + $0x5c8] sm:$0xf]
    %v2476 = vld [vmem:[#allocation5 + $0x5cc] sm:$0xf]
    %v2477 = vld [vmem:[#allocation5 + $0x5d0] sm:$0xf]
    %v2478 = vld [vmem:[#allocation5 + $0x5d4] sm:$0xf]
    %v2479 = vld [vmem:[#allocation5 + $0x5d8] sm:$0xf]
    %v2480 = vld [vmem:[#allocation5 + $0x5dc] sm:$0xf]
    %v2481 = vld [vmem:[#allocation5 + $0x5e0] sm:$0xf]
    %v2482 = vld [vmem:[#allocation5 + $0x5e4] sm:$0xf]
    %v2483 = vld [vmem:[#allocation5 + $0x5e8] sm:$0xf]
    %v2484 = vld [vmem:[#allocation5 + $0x5ec] sm:$0xf]
    %v2485 = vld [vmem:[#allocation5 + $0x5f0] sm:$0xf]
    %v2486 = vld [vmem:[#allocation5 + $0x5f4] sm:$0xf]
    %v2487 = vld [vmem:[#allocation5 + $0x5f8] sm:$0xf]
    %v2488 = vld [vmem:[#allocation5 + $0x5fc] sm:$0xf]
    %v2489 = vld [vmem:[#allocation5 + $0x600] sm:$0xf]
    %v2490 = vld [vmem:[#allocation5 + $0x604] sm:$0xf]
    %v2491 = vld [vmem:[#allocation5 + $0x608] sm:$0xf]
    %v2492 = vld [vmem:[#allocation5 + $0x60c] sm:$0xf]
    %v2493 = vld [vmem:[#allocation5 + $0x610] sm:$0xf]
    %v2494 = vld [vmem:[#allocation5 + $0x614] sm:$0xf]
    %v2495 = vld [vmem:[#allocation5 + $0x618] sm:$0xf]
    %v2496 = vld [vmem:[#allocation5 + $0x61c] sm:$0xf]
    %v2497 = vld [vmem:[#allocation5 + $0x620] sm:$0xf]
    %v2498 = vld [vmem:[#allocation5 + $0x624] sm:$0xf]
    %v2499 = vld [vmem:[#allocation5 + $0x628] sm:$0xf]
    %v2500 = vld [vmem:[#allocation5 + $0x62c] sm:$0xf]
    %v2501 = vld [vmem:[#allocation5 + $0x630] sm:$0xf]
    %v2502 = vld [vmem:[#allocation5 + $0x634] sm:$0xf]
    %v2503 = vld [vmem:[#allocation5 + $0x638] sm:$0xf]
    %v2504 = vld [vmem:[#allocation5 + $0x63c] sm:$0xf]
    %v2505 = vld [vmem:[#allocation7 + $0x8] sm:$0x1]
    %v2506 = vperm.slane %v2505, 0
    %v2587 = vunpack.c.l.b16 %v2425
    %v2588 = vunpack.c.l.b16 %v2426
    %v2589 = vunpack.c.l.b16 %v2427
    %v2590 = vunpack.c.l.b16 %v2428
    %v2591 = vunpack.c.l.b16 %v2429
    %v2592 = vunpack.c.l.b16 %v2430
    %v2593 = vunpack.c.l.b16 %v2431
    %v2594 = vunpack.c.l.b16 %v2432
    %v2595 = vunpack.c.l.b16 %v2433
    %v2596 = vunpack.c.l.b16 %v2434
    %v2597 = vunpack.c.l.b16 %v2435
    %v2598 = vunpack.c.l.b16 %v2436
    %v2599 = vunpack.c.l.b16 %v2437
    %v2600 = vunpack.c.l.b16 %v2438
    %v2601 = vunpack.c.l.b16 %v2439
    %v2602 = vunpack.c.l.b16 %v2440
    %v2603 = vunpack.c.l.b16 %v2441
    %v2604 = vunpack.c.l.b16 %v2442
    %v2605 = vunpack.c.l.b16 %v2443
    %v2606 = vunpack.c.l.b16 %v2444
    %v2607 = vunpack.c.l.b16 %v2445
    %v2608 = vunpack.c.l.b16 %v2446
    %v2609 = vunpack.c.l.b16 %v2447
    %v2610 = vunpack.c.l.b16 %v2448
    %v2611 = vunpack.c.l.b16 %v2449
    %v2612 = vunpack.c.l.b16 %v2450
    %v2613 = vunpack.c.l.b16 %v2451
    %v2614 = vunpack.c.l.b16 %v2452
    %v2615 = vunpack.c.l.b16 %v2453
    %v2616 = vunpack.c.l.b16 %v2454
    %v2617 = vunpack.c.l.b16 %v2455
    %v2618 = vunpack.c.l.b16 %v2456
    %v2619 = vunpack.c.l.b16 %v2457
    %v2620 = vunpack.c.l.b16 %v2458
    %v2621 = vunpack.c.l.b16 %v2459
    %v2622 = vunpack.c.l.b16 %v2460
    %v2623 = vunpack.c.l.b16 %v2461
    %v2624 = vunpack.c.l.b16 %v2462
    %v2625 = vunpack.c.l.b16 %v2463
    %v2626 = vunpack.c.l.b16 %v2464
    %v2627 = vunpack.c.l.b16 %v2465
    %v2628 = vunpack.c.l.b16 %v2466
    %v2629 = vunpack.c.l.b16 %v2467
    %v2630 = vunpack.c.l.b16 %v2468
    %v2631 = vunpack.c.l.b16 %v2469
    %v2632 = vunpack.c.l.b16 %v2470
    %v2633 = vunpack.c.l.b16 %v2471
    %v2634 = vunpack.c.l.b16 %v2472
    %v2635 = vunpack.c.l.b16 %v2473
    %v2636 = vunpack.c.l.b16 %v2474
    %v2637 = vunpack.c.l.b16 %v2475
    %v2638 = vunpack.c.l.b16 %v2476
    %v2639 = vunpack.c.l.b16 %v2477
    %v2640 = vunpack.c.l.b16 %v2478
    %v2641 = vunpack.c.l.b16 %v2479
    %v2642 = vunpack.c.l.b16 %v2480
    %v2643 = vunpack.c.l.b16 %v2481
    %v2644 = vunpack.c.l.b16 %v2482
    %v2645 = vunpack.c.l.b16 %v2483
    %v2646 = vunpack.c.l.b16 %v2484
    %v2647 = vunpack.c.l.b16 %v2485
    %v2648 = vunpack.c.l.b16 %v2486
    %v2649 = vunpack.c.l.b16 %v2487
    %v2650 = vunpack.c.l.b16 %v2488
    %v2651 = vunpack.c.l.b16 %v2489
    %v2652 = vunpack.c.l.b16 %v2490
    %v2653 = vunpack.c.l.b16 %v2491
    %v2654 = vunpack.c.l.b16 %v2492
    %v2655 = vunpack.c.l.b16 %v2493
    %v2656 = vunpack.c.l.b16 %v2494
    %v2657 = vunpack.c.l.b16 %v2495
    %v2658 = vunpack.c.l.b16 %v2496
    %v2659 = vunpack.c.l.b16 %v2497
    %v2660 = vunpack.c.l.b16 %v2498
    %v2661 = vunpack.c.l.b16 %v2499
    %v2662 = vunpack.c.l.b16 %v2500
    %v2663 = vunpack.c.l.b16 %v2501
    %v2664 = vunpack.c.l.b16 %v2502
    %v2665 = vunpack.c.l.b16 %v2503
    %v2666 = vunpack.c.l.b16 %v2504
    %v2667 = vpack.c.b16 %v2588, %v2587
    %v2668 = vpack.c.b16 %v2590, %v2589
    %v2669 = vpack.c.b16 %v2592, %v2591
    %v2670 = vpack.c.b16 %v2594, %v2593
    %v2671 = vpack.c.b16 %v2596, %v2595
    %v2672 = vpack.c.b16 %v2598, %v2597
    %v2673 = vpack.c.b16 %v2600, %v2599
    %v2674 = vpack.c.b16 %v2602, %v2601
    %v2675 = vpack.c.b16 %v2604, %v2603
    %v2676 = vpack.c.b16 %v2606, %v2605
    %v2677 = vpack.c.b16 %v2608, %v2607
    %v2678 = vpack.c.b16 %v2610, %v2609
    %v2679 = vpack.c.b16 %v2612, %v2611
    %v2680 = vpack.c.b16 %v2614, %v2613
    %v2681 = vpack.c.b16 %v2616, %v2615
    %v2682 = vpack.c.b16 %v2618, %v2617
    %v2683 = vpack.c.b16 %v2620, %v2619
    %v2684 = vpack.c.b16 %v2622, %v2621
    %v2685 = vpack.c.b16 %v2624, %v2623
    %v2686 = vpack.c.b16 %v2626, %v2625
    %v2687 = vpack.c.b16 %v2628, %v2627
    %v2688 = vpack.c.b16 %v2630, %v2629
    %v2689 = vpack.c.b16 %v2632, %v2631
    %v2690 = vpack.c.b16 %v2634, %v2633
    %v2691 = vpack.c.b16 %v2636, %v2635
    %v2692 = vpack.c.b16 %v2638, %v2637
    %v2693 = vpack.c.b16 %v2640, %v2639
    %v2694 = vpack.c.b16 %v2642, %v2641
    %v2695 = vpack.c.b16 %v2644, %v2643
    %v2696 = vpack.c.b16 %v2646, %v2645
    %v2697 = vpack.c.b16 %v2648, %v2647
    %v2698 = vpack.c.b16 %v2650, %v2649
    %v2699 = vpack.c.b16 %v2652, %v2651
    %v2700 = vpack.c.b16 %v2654, %v2653
    %v2701 = vpack.c.b16 %v2656, %v2655
    %v2702 = vpack.c.b16 %v2658, %v2657
    %v2703 = vpack.c.b16 %v2660, %v2659
    %v2704 = vpack.c.b16 %v2662, %v2661
    %v2705 = vpack.c.b16 %v2664, %v2663
    %v2706 = vpack.c.b16 %v2666, %v2665
    %2747 = vmatpush.bf16.msra.mxu0 %v2674
    %2748 = vmatpush.bf16.msra.mxu0 %v2673
    %2749 = vmatpush.bf16.msra.mxu0 %v2672
    %2750 = vmatpush.bf16.msra.mxu0 %v2671
    %2751 = vmatpush.bf16.msra.mxu0 %v2670
    %2752 = vmatpush.bf16.msra.mxu0 %v2669
    %2753 = vmatpush.bf16.msra.mxu0 %v2668
    %2754 = vmatpush.bf16.msra.mxu0 %v2667
    %2755 = vmatmul.bf16.gmra.mxu0 %v2420
    %v2756 = vpop.f32.mrf.mxu0
    %v2757 = vadd.f32 %v2506, %v2756
    %v2758 = vpop.f32.mrf.mxu0
    %v2759 = vadd.f32 %v2506, %v2758
    %2760 = vdwg.mxu0
    %2761 = vmatpush.bf16.msra.mxu0 %v2682
    %2762 = vmatpush.bf16.msra.mxu0 %v2681
    %2763 = vmatpush.bf16.msra.mxu0 %v2680
    %2764 = vmatpush.bf16.msra.mxu0 %v2679
    %2765 = vmatpush.bf16.msra.mxu0 %v2678
    %2766 = vmatpush.bf16.msra.mxu0 %v2677
    %2767 = vmatpush.bf16.msra.mxu0 %v2676
    %2768 = vmatpush.bf16.msra.mxu0 %v2675
    %2769 = vmatmul.bf16.gmra.mxu0 %v2421
    %v2770 = vpop.f32.mrf.mxu0
    %v2771 = vadd.f32 %v2757, %v2770
    %v2772 = vpop.f32.mrf.mxu0
    %v2773 = vadd.f32 %v2759, %v2772
    %2774 = vdwg.mxu0
    %2775 = vmatpush.bf16.msra.mxu0 %v2690
    %2776 = vmatpush.bf16.msra.mxu0 %v2689
    %2777 = vmatpush.bf16.msra.mxu0 %v2688
    %2778 = vmatpush.bf16.msra.mxu0 %v2687
    %2779 = vmatpush.bf16.msra.mxu0 %v2686
    %2780 = vmatpush.bf16.msra.mxu0 %v2685
    %2781 = vmatpush.bf16.msra.mxu0 %v2684
    %2782 = vmatpush.bf16.msra.mxu0 %v2683
    %2783 = vmatmul.bf16.gmra.mxu0 %v2422
    %v2784 = vpop.f32.mrf.mxu0
    %v2785 = vadd.f32 %v2771, %v2784
    %v2786 = vpop.f32.mrf.mxu0
    %v2787 = vadd.f32 %v2773, %v2786
    %2788 = vdwg.mxu0
    %2789 = vmatpush.bf16.msra.mxu0 %v2698
    %2790 = vmatpush.bf16.msra.mxu0 %v2697
    %2791 = vmatpush.bf16.msra.mxu0 %v2696
    %2792 = vmatpush.bf16.msra.mxu0 %v2695
    %2793 = vmatpush.bf16.msra.mxu0 %v2694
    %2794 = vmatpush.bf16.msra.mxu0 %v2693
    %2795 = vmatpush.bf16.msra.mxu0 %v2692
    %2796 = vmatpush.bf16.msra.mxu0 %v2691
    %2797 = vmatmul.bf16.gmra.mxu0 %v2423
    %v2798 = vpop.f32.mrf.mxu0
    %v2799 = vadd.f32 %v2785, %v2798
    %v2800 = vpop.f32.mrf.mxu0
    %v2801 = vadd.f32 %v2787, %v2800
    %2802 = vdwg.mxu0
    %2803 = vmatpush.bf16.msra.mxu0 %v2706
    %2804 = vmatpush.bf16.msra.mxu0 %v2705
    %2805 = vmatpush.bf16.msra.mxu0 %v2704
    %2806 = vmatpush.bf16.msra.mxu0 %v2703
    %2807 = vmatpush.bf16.msra.mxu0 %v2702
    %2808 = vmatpush.bf16.msra.mxu0 %v2701
    %2809 = vmatpush.bf16.msra.mxu0 %v2700
    %2810 = vmatpush.bf16.msra.mxu0 %v2699
    %2811 = vmatmul.bf16.gmra.mxu0 %v2424
    %v2812 = vpop.f32.mrf.mxu0
    %v2813 = vadd.f32 %v2799, %v2812
    %v2814 = vpop.f32.mrf.mxu0
    %v2815 = vadd.f32 %v2801, %v2814
    %2816 = vdwg.mxu0
    %v2817 = vmax.f32 %v2813, 0.0
    %v2818 = vmax.f32 %v2815, 0.0
    %v2821 = vrot.slane %v2817, 6
    %v2822 = vrot.slane %v2818, 6
    %v2823 = vsel %vm2141, %v2821, %v2822
    %v2826 = vsel %vm2141, 0.0, %v2821
    %v2827 = vsel %vm2284, %v2826, 0.0
    %v2828 = vsel %vm2285, %v2823, 0.0
    %v2829 = vrot.slane %v2817, 7
    %v2830 = vrot.slane %v2818, 7
    %v2831 = vsel %vm139, %v2829, %v2830
    %v2834 = vsel %vm139, 0.0, %v2829
    %v2835 = vsel %vm2330, %v2834, 0.0
    %v2836 = vsel %vm2331, %v2831, 0.0
    %v2837 = vrot.slane %v2817, 1
    %v2838 = vrot.slane %v2818, 1
    %v2839 = vsel %vm172, %v2837, %v2838
    %v2842 = vsel %vm172, %v2838, 0.0
    %v2843 = vsel %vm2357, %v2839, 0.0
    %v2844 = vsel %vm2358, %v2842, 0.0
    %v2845 = vrot.slane %v2817, 2
    %v2846 = vrot.slane %v2818, 2
    %v2847 = vsel %vm2400, %v2845, %v2846
    %v2850 = vsel %vm2400, %v2846, 0.0
    %v2851 = vsel %vm2384, %v2847, 0.0
    %v2852 = vsel %vm2385, %v2850, 0.0
    %v2853 = vpack.c.bf16 %v2828, %v2827
    %v2854 = vpack.c.bf16 %v2836, %v2835
    %v2855 = vpack.c.bf16 %v2818, %v2817
    %v2856 = vpack.c.bf16 %v2844, %v2843
    %v2857 = vpack.c.bf16 %v2852, %v2851
    %v2858 = vld [vmem:[#allocation5 + $0x640] sm:$0xf]
    %v2859 = vld [vmem:[#allocation5 + $0x644] sm:$0xf]
    %v2860 = vld [vmem:[#allocation5 + $0x648] sm:$0xf]
    %v2861 = vld [vmem:[#allocation5 + $0x64c] sm:$0xf]
    %v2862 = vld [vmem:[#allocation5 + $0x650] sm:$0xf]
    %v2863 = vld [vmem:[#allocation5 + $0x654] sm:$0xf]
    %v2864 = vld [vmem:[#allocation5 + $0x658] sm:$0xf]
    %v2865 = vld [vmem:[#allocation5 + $0x65c] sm:$0xf]
    %v2866 = vld [vmem:[#allocation5 + $0x660] sm:$0xf]
    %v2867 = vld [vmem:[#allocation5 + $0x664] sm:$0xf]
    %v2868 = vld [vmem:[#allocation5 + $0x668] sm:$0xf]
    %v2869 = vld [vmem:[#allocation5 + $0x66c] sm:$0xf]
    %v2870 = vld [vmem:[#allocation5 + $0x670] sm:$0xf]
    %v2871 = vld [vmem:[#allocation5 + $0x674] sm:$0xf]
    %v2872 = vld [vmem:[#allocation5 + $0x678] sm:$0xf]
    %v2873 = vld [vmem:[#allocation5 + $0x67c] sm:$0xf]
    %v2874 = vld [vmem:[#allocation5 + $0x680] sm:$0xf]
    %v2875 = vld [vmem:[#allocation5 + $0x684] sm:$0xf]
    %v2876 = vld [vmem:[#allocation5 + $0x688] sm:$0xf]
    %v2877 = vld [vmem:[#allocation5 + $0x68c] sm:$0xf]
    %v2878 = vld [vmem:[#allocation5 + $0x690] sm:$0xf]
    %v2879 = vld [vmem:[#allocation5 + $0x694] sm:$0xf]
    %v2880 = vld [vmem:[#allocation5 + $0x698] sm:$0xf]
    %v2881 = vld [vmem:[#allocation5 + $0x69c] sm:$0xf]
    %v2882 = vld [vmem:[#allocation5 + $0x6a0] sm:$0xf]
    %v2883 = vld [vmem:[#allocation5 + $0x6a4] sm:$0xf]
    %v2884 = vld [vmem:[#allocation5 + $0x6a8] sm:$0xf]
    %v2885 = vld [vmem:[#allocation5 + $0x6ac] sm:$0xf]
    %v2886 = vld [vmem:[#allocation5 + $0x6b0] sm:$0xf]
    %v2887 = vld [vmem:[#allocation5 + $0x6b4] sm:$0xf]
    %v2888 = vld [vmem:[#allocation5 + $0x6b8] sm:$0xf]
    %v2889 = vld [vmem:[#allocation5 + $0x6bc] sm:$0xf]
    %v2890 = vld [vmem:[#allocation5 + $0x6c0] sm:$0xf]
    %v2891 = vld [vmem:[#allocation5 + $0x6c4] sm:$0xf]
    %v2892 = vld [vmem:[#allocation5 + $0x6c8] sm:$0xf]
    %v2893 = vld [vmem:[#allocation5 + $0x6cc] sm:$0xf]
    %v2894 = vld [vmem:[#allocation5 + $0x6d0] sm:$0xf]
    %v2895 = vld [vmem:[#allocation5 + $0x6d4] sm:$0xf]
    %v2896 = vld [vmem:[#allocation5 + $0x6d8] sm:$0xf]
    %v2897 = vld [vmem:[#allocation5 + $0x6dc] sm:$0xf]
    %v2898 = vld [vmem:[#allocation5 + $0x6e0] sm:$0xf]
    %v2899 = vld [vmem:[#allocation5 + $0x6e4] sm:$0xf]
    %v2900 = vld [vmem:[#allocation5 + $0x6e8] sm:$0xf]
    %v2901 = vld [vmem:[#allocation5 + $0x6ec] sm:$0xf]
    %v2902 = vld [vmem:[#allocation5 + $0x6f0] sm:$0xf]
    %v2903 = vld [vmem:[#allocation5 + $0x6f4] sm:$0xf]
    %v2904 = vld [vmem:[#allocation5 + $0x6f8] sm:$0xf]
    %v2905 = vld [vmem:[#allocation5 + $0x6fc] sm:$0xf]
    %v2906 = vld [vmem:[#allocation5 + $0x700] sm:$0xf]
    %v2907 = vld [vmem:[#allocation5 + $0x704] sm:$0xf]
    %v2908 = vld [vmem:[#allocation5 + $0x708] sm:$0xf]
    %v2909 = vld [vmem:[#allocation5 + $0x70c] sm:$0xf]
    %v2910 = vld [vmem:[#allocation5 + $0x710] sm:$0xf]
    %v2911 = vld [vmem:[#allocation5 + $0x714] sm:$0xf]
    %v2912 = vld [vmem:[#allocation5 + $0x718] sm:$0xf]
    %v2913 = vld [vmem:[#allocation5 + $0x71c] sm:$0xf]
    %v2914 = vld [vmem:[#allocation5 + $0x720] sm:$0xf]
    %v2915 = vld [vmem:[#allocation5 + $0x724] sm:$0xf]
    %v2916 = vld [vmem:[#allocation5 + $0x728] sm:$0xf]
    %v2917 = vld [vmem:[#allocation5 + $0x72c] sm:$0xf]
    %v2918 = vld [vmem:[#allocation5 + $0x730] sm:$0xf]
    %v2919 = vld [vmem:[#allocation5 + $0x734] sm:$0xf]
    %v2920 = vld [vmem:[#allocation5 + $0x738] sm:$0xf]
    %v2921 = vld [vmem:[#allocation5 + $0x73c] sm:$0xf]
    %v2922 = vld [vmem:[#allocation5 + $0x740] sm:$0xf]
    %v2923 = vld [vmem:[#allocation5 + $0x744] sm:$0xf]
    %v2924 = vld [vmem:[#allocation5 + $0x748] sm:$0xf]
    %v2925 = vld [vmem:[#allocation5 + $0x74c] sm:$0xf]
    %v2926 = vld [vmem:[#allocation5 + $0x750] sm:$0xf]
    %v2927 = vld [vmem:[#allocation5 + $0x754] sm:$0xf]
    %v2928 = vld [vmem:[#allocation5 + $0x758] sm:$0xf]
    %v2929 = vld [vmem:[#allocation5 + $0x75c] sm:$0xf]
    %v2930 = vld [vmem:[#allocation5 + $0x760] sm:$0xf]
    %v2931 = vld [vmem:[#allocation5 + $0x764] sm:$0xf]
    %v2932 = vld [vmem:[#allocation5 + $0x768] sm:$0xf]
    %v2933 = vld [vmem:[#allocation5 + $0x76c] sm:$0xf]
    %v2934 = vld [vmem:[#allocation5 + $0x770] sm:$0xf]
    %v2935 = vld [vmem:[#allocation5 + $0x774] sm:$0xf]
    %v2936 = vld [vmem:[#allocation5 + $0x778] sm:$0xf]
    %v2937 = vld [vmem:[#allocation5 + $0x77c] sm:$0xf]
    %v2938 = vld [vmem:[#allocation7 + $0x9] sm:$0x1]
    %v2939 = vperm.slane %v2938, 0
    %v3020 = vunpack.c.l.b16 %v2858
    %v3021 = vunpack.c.l.b16 %v2859
    %v3022 = vunpack.c.l.b16 %v2860
    %v3023 = vunpack.c.l.b16 %v2861
    %v3024 = vunpack.c.l.b16 %v2862
    %v3025 = vunpack.c.l.b16 %v2863
    %v3026 = vunpack.c.l.b16 %v2864
    %v3027 = vunpack.c.l.b16 %v2865
    %v3028 = vunpack.c.l.b16 %v2866
    %v3029 = vunpack.c.l.b16 %v2867
    %v3030 = vunpack.c.l.b16 %v2868
    %v3031 = vunpack.c.l.b16 %v2869
    %v3032 = vunpack.c.l.b16 %v2870
    %v3033 = vunpack.c.l.b16 %v2871
    %v3034 = vunpack.c.l.b16 %v2872
    %v3035 = vunpack.c.l.b16 %v2873
    %v3036 = vunpack.c.l.b16 %v2874
    %v3037 = vunpack.c.l.b16 %v2875
    %v3038 = vunpack.c.l.b16 %v2876
    %v3039 = vunpack.c.l.b16 %v2877
    %v3040 = vunpack.c.l.b16 %v2878
    %v3041 = vunpack.c.l.b16 %v2879
    %v3042 = vunpack.c.l.b16 %v2880
    %v3043 = vunpack.c.l.b16 %v2881
    %v3044 = vunpack.c.l.b16 %v2882
    %v3045 = vunpack.c.l.b16 %v2883
    %v3046 = vunpack.c.l.b16 %v2884
    %v3047 = vunpack.c.l.b16 %v2885
    %v3048 = vunpack.c.l.b16 %v2886
    %v3049 = vunpack.c.l.b16 %v2887
    %v3050 = vunpack.c.l.b16 %v2888
    %v3051 = vunpack.c.l.b16 %v2889
    %v3052 = vunpack.c.l.b16 %v2890
    %v3053 = vunpack.c.l.b16 %v2891
    %v3054 = vunpack.c.l.b16 %v2892
    %v3055 = vunpack.c.l.b16 %v2893
    %v3056 = vunpack.c.l.b16 %v2894
    %v3057 = vunpack.c.l.b16 %v2895
    %v3058 = vunpack.c.l.b16 %v2896
    %v3059 = vunpack.c.l.b16 %v2897
    %v3060 = vunpack.c.l.b16 %v2898
    %v3061 = vunpack.c.l.b16 %v2899
    %v3062 = vunpack.c.l.b16 %v2900
    %v3063 = vunpack.c.l.b16 %v2901
    %v3064 = vunpack.c.l.b16 %v2902
    %v3065 = vunpack.c.l.b16 %v2903
    %v3066 = vunpack.c.l.b16 %v2904
    %v3067 = vunpack.c.l.b16 %v2905
    %v3068 = vunpack.c.l.b16 %v2906
    %v3069 = vunpack.c.l.b16 %v2907
    %v3070 = vunpack.c.l.b16 %v2908
    %v3071 = vunpack.c.l.b16 %v2909
    %v3072 = vunpack.c.l.b16 %v2910
    %v3073 = vunpack.c.l.b16 %v2911
    %v3074 = vunpack.c.l.b16 %v2912
    %v3075 = vunpack.c.l.b16 %v2913
    %v3076 = vunpack.c.l.b16 %v2914
    %v3077 = vunpack.c.l.b16 %v2915
    %v3078 = vunpack.c.l.b16 %v2916
    %v3079 = vunpack.c.l.b16 %v2917
    %v3080 = vunpack.c.l.b16 %v2918
    %v3081 = vunpack.c.l.b16 %v2919
    %v3082 = vunpack.c.l.b16 %v2920
    %v3083 = vunpack.c.l.b16 %v2921
    %v3084 = vunpack.c.l.b16 %v2922
    %v3085 = vunpack.c.l.b16 %v2923
    %v3086 = vunpack.c.l.b16 %v2924
    %v3087 = vunpack.c.l.b16 %v2925
    %v3088 = vunpack.c.l.b16 %v2926
    %v3089 = vunpack.c.l.b16 %v2927
    %v3090 = vunpack.c.l.b16 %v2928
    %v3091 = vunpack.c.l.b16 %v2929
    %v3092 = vunpack.c.l.b16 %v2930
    %v3093 = vunpack.c.l.b16 %v2931
    %v3094 = vunpack.c.l.b16 %v2932
    %v3095 = vunpack.c.l.b16 %v2933
    %v3096 = vunpack.c.l.b16 %v2934
    %v3097 = vunpack.c.l.b16 %v2935
    %v3098 = vunpack.c.l.b16 %v2936
    %v3099 = vunpack.c.l.b16 %v2937
    %v3100 = vpack.c.b16 %v3021, %v3020
    %v3101 = vpack.c.b16 %v3023, %v3022
    %v3102 = vpack.c.b16 %v3025, %v3024
    %v3103 = vpack.c.b16 %v3027, %v3026
    %v3104 = vpack.c.b16 %v3029, %v3028
    %v3105 = vpack.c.b16 %v3031, %v3030
    %v3106 = vpack.c.b16 %v3033, %v3032
    %v3107 = vpack.c.b16 %v3035, %v3034
    %v3108 = vpack.c.b16 %v3037, %v3036
    %v3109 = vpack.c.b16 %v3039, %v3038
    %v3110 = vpack.c.b16 %v3041, %v3040
    %v3111 = vpack.c.b16 %v3043, %v3042
    %v3112 = vpack.c.b16 %v3045, %v3044
    %v3113 = vpack.c.b16 %v3047, %v3046
    %v3114 = vpack.c.b16 %v3049, %v3048
    %v3115 = vpack.c.b16 %v3051, %v3050
    %v3116 = vpack.c.b16 %v3053, %v3052
    %v3117 = vpack.c.b16 %v3055, %v3054
    %v3118 = vpack.c.b16 %v3057, %v3056
    %v3119 = vpack.c.b16 %v3059, %v3058
    %v3120 = vpack.c.b16 %v3061, %v3060
    %v3121 = vpack.c.b16 %v3063, %v3062
    %v3122 = vpack.c.b16 %v3065, %v3064
    %v3123 = vpack.c.b16 %v3067, %v3066
    %v3124 = vpack.c.b16 %v3069, %v3068
    %v3125 = vpack.c.b16 %v3071, %v3070
    %v3126 = vpack.c.b16 %v3073, %v3072
    %v3127 = vpack.c.b16 %v3075, %v3074
    %v3128 = vpack.c.b16 %v3077, %v3076
    %v3129 = vpack.c.b16 %v3079, %v3078
    %v3130 = vpack.c.b16 %v3081, %v3080
    %v3131 = vpack.c.b16 %v3083, %v3082
    %v3132 = vpack.c.b16 %v3085, %v3084
    %v3133 = vpack.c.b16 %v3087, %v3086
    %v3134 = vpack.c.b16 %v3089, %v3088
    %v3135 = vpack.c.b16 %v3091, %v3090
    %v3136 = vpack.c.b16 %v3093, %v3092
    %v3137 = vpack.c.b16 %v3095, %v3094
    %v3138 = vpack.c.b16 %v3097, %v3096
    %v3139 = vpack.c.b16 %v3099, %v3098
    %3180 = vmatpush.bf16.msra.mxu0 %v3107
    %3181 = vmatpush.bf16.msra.mxu0 %v3106
    %3182 = vmatpush.bf16.msra.mxu0 %v3105
    %3183 = vmatpush.bf16.msra.mxu0 %v3104
    %3184 = vmatpush.bf16.msra.mxu0 %v3103
    %3185 = vmatpush.bf16.msra.mxu0 %v3102
    %3186 = vmatpush.bf16.msra.mxu0 %v3101
    %3187 = vmatpush.bf16.msra.mxu0 %v3100
    %3188 = vmatmul.bf16.gmra.mxu0 %v2853
    %v3189 = vpop.f32.mrf.mxu0
    %v3190 = vadd.f32 %v2939, %v3189
    %v3191 = vpop.f32.mrf.mxu0
    %v3192 = vadd.f32 %v2939, %v3191
    %3193 = vdwg.mxu0
    %3194 = vmatpush.bf16.msra.mxu0 %v3115
    %3195 = vmatpush.bf16.msra.mxu0 %v3114
    %3196 = vmatpush.bf16.msra.mxu0 %v3113
    %3197 = vmatpush.bf16.msra.mxu0 %v3112
    %3198 = vmatpush.bf16.msra.mxu0 %v3111
    %3199 = vmatpush.bf16.msra.mxu0 %v3110
    %3200 = vmatpush.bf16.msra.mxu0 %v3109
    %3201 = vmatpush.bf16.msra.mxu0 %v3108
    %3202 = vmatmul.bf16.gmra.mxu0 %v2854
    %v3203 = vpop.f32.mrf.mxu0
    %v3204 = vadd.f32 %v3190, %v3203
    %v3205 = vpop.f32.mrf.mxu0
    %v3206 = vadd.f32 %v3192, %v3205
    %3207 = vdwg.mxu0
    %3208 = vmatpush.bf16.msra.mxu0 %v3123
    %3209 = vmatpush.bf16.msra.mxu0 %v3122
    %3210 = vmatpush.bf16.msra.mxu0 %v3121
    %3211 = vmatpush.bf16.msra.mxu0 %v3120
    %3212 = vmatpush.bf16.msra.mxu0 %v3119
    %3213 = vmatpush.bf16.msra.mxu0 %v3118
    %3214 = vmatpush.bf16.msra.mxu0 %v3117
    %3215 = vmatpush.bf16.msra.mxu0 %v3116
    %3216 = vmatmul.bf16.gmra.mxu0 %v2855
    %v3217 = vpop.f32.mrf.mxu0
    %v3218 = vadd.f32 %v3204, %v3217
    %v3219 = vpop.f32.mrf.mxu0
    %v3220 = vadd.f32 %v3206, %v3219
    %3221 = vdwg.mxu0
    %3222 = vmatpush.bf16.msra.mxu0 %v3131
    %3223 = vmatpush.bf16.msra.mxu0 %v3130
    %3224 = vmatpush.bf16.msra.mxu0 %v3129
    %3225 = vmatpush.bf16.msra.mxu0 %v3128
    %3226 = vmatpush.bf16.msra.mxu0 %v3127
    %3227 = vmatpush.bf16.msra.mxu0 %v3126
    %3228 = vmatpush.bf16.msra.mxu0 %v3125
    %3229 = vmatpush.bf16.msra.mxu0 %v3124
    %3230 = vmatmul.bf16.gmra.mxu0 %v2856
    %v3231 = vpop.f32.mrf.mxu0
    %v3232 = vadd.f32 %v3218, %v3231
    %v3233 = vpop.f32.mrf.mxu0
    %v3234 = vadd.f32 %v3220, %v3233
    %3235 = vdwg.mxu0
    %3236 = vmatpush.bf16.msra.mxu0 %v3139
    %3237 = vmatpush.bf16.msra.mxu0 %v3138
    %3238 = vmatpush.bf16.msra.mxu0 %v3137
    %3239 = vmatpush.bf16.msra.mxu0 %v3136
    %3240 = vmatpush.bf16.msra.mxu0 %v3135
    %3241 = vmatpush.bf16.msra.mxu0 %v3134
    %3242 = vmatpush.bf16.msra.mxu0 %v3133
    %3243 = vmatpush.bf16.msra.mxu0 %v3132
    %3244 = vmatmul.bf16.gmra.mxu0 %v2857
    %v3245 = vpop.f32.mrf.mxu0
    %v3246 = vadd.f32 %v3232, %v3245
    %v3247 = vpop.f32.mrf.mxu0
    %v3248 = vadd.f32 %v3234, %v3247
    %3249 = vdwg.mxu0
    %v3250 = vmax.f32 %v3246, 0.0
    %v3251 = vmax.f32 %v3248, 0.0
    %v3254 = vrot.slane %v3250, 6
    %v3255 = vrot.slane %v3251, 6
    %v3256 = vsel %vm2141, %v3254, %v3255
    %v3259 = vsel %vm2141, 0.0, %v3254
    %v3260 = vsel %vm2284, %v3259, 0.0
    %v3261 = vsel %vm2285, %v3256, 0.0
    %v3262 = vrot.slane %v3250, 7
    %v3263 = vrot.slane %v3251, 7
    %v3264 = vsel %vm139, %v3262, %v3263
    %v3267 = vsel %vm139, 0.0, %v3262
    %v3268 = vsel %vm2330, %v3267, 0.0
    %v3269 = vsel %vm2331, %v3264, 0.0
    %v3270 = vrot.slane %v3250, 1
    %v3271 = vrot.slane %v3251, 1
    %v3272 = vsel %vm172, %v3270, %v3271
    %v3275 = vsel %vm172, %v3271, 0.0
    %v3276 = vsel %vm2357, %v3272, 0.0
    %v3277 = vsel %vm2358, %v3275, 0.0
    %v3278 = vrot.slane %v3250, 2
    %v3279 = vrot.slane %v3251, 2
    %v3280 = vsel %vm2400, %v3278, %v3279
    %v3283 = vsel %vm2400, %v3279, 0.0
    %v3284 = vsel %vm2384, %v3280, 0.0
    %v3285 = vsel %vm2385, %v3283, 0.0
    %v3286 = vpack.c.bf16 %v3261, %v3260
    %v3287 = vpack.c.bf16 %v3269, %v3268
    %v3288 = vpack.c.bf16 %v3251, %v3250
    %v3289 = vpack.c.bf16 %v3277, %v3276
    %v3290 = vpack.c.bf16 %v3285, %v3284
    %v3291 = vld [vmem:[#allocation5 + $0x780] sm:$0xf]
    %v3292 = vld [vmem:[#allocation5 + $0x784] sm:$0xf]
    %v3293 = vld [vmem:[#allocation5 + $0x788] sm:$0xf]
    %v3294 = vld [vmem:[#allocation5 + $0x78c] sm:$0xf]
    %v3295 = vld [vmem:[#allocation5 + $0x790] sm:$0xf]
    %v3296 = vld [vmem:[#allocation5 + $0x794] sm:$0xf]
    %v3297 = vld [vmem:[#allocation5 + $0x798] sm:$0xf]
    %v3298 = vld [vmem:[#allocation5 + $0x79c] sm:$0xf]
    %v3299 = vld [vmem:[#allocation5 + $0x7a0] sm:$0xf]
    %v3300 = vld [vmem:[#allocation5 + $0x7a4] sm:$0xf]
    %v3301 = vld [vmem:[#allocation5 + $0x7a8] sm:$0xf]
    %v3302 = vld [vmem:[#allocation5 + $0x7ac] sm:$0xf]
    %v3303 = vld [vmem:[#allocation5 + $0x7b0] sm:$0xf]
    %v3304 = vld [vmem:[#allocation5 + $0x7b4] sm:$0xf]
    %v3305 = vld [vmem:[#allocation5 + $0x7b8] sm:$0xf]
    %v3306 = vld [vmem:[#allocation5 + $0x7bc] sm:$0xf]
    %v3307 = vld [vmem:[#allocation5 + $0x7c0] sm:$0xf]
    %v3308 = vld [vmem:[#allocation5 + $0x7c4] sm:$0xf]
    %v3309 = vld [vmem:[#allocation5 + $0x7c8] sm:$0xf]
    %v3310 = vld [vmem:[#allocation5 + $0x7cc] sm:$0xf]
    %v3311 = vld [vmem:[#allocation5 + $0x7d0] sm:$0xf]
    %v3312 = vld [vmem:[#allocation5 + $0x7d4] sm:$0xf]
    %v3313 = vld [vmem:[#allocation5 + $0x7d8] sm:$0xf]
    %v3314 = vld [vmem:[#allocation5 + $0x7dc] sm:$0xf]
    %v3315 = vld [vmem:[#allocation5 + $0x7e0] sm:$0xf]
    %v3316 = vld [vmem:[#allocation5 + $0x7e4] sm:$0xf]
    %v3317 = vld [vmem:[#allocation5 + $0x7e8] sm:$0xf]
    %v3318 = vld [vmem:[#allocation5 + $0x7ec] sm:$0xf]
    %v3319 = vld [vmem:[#allocation5 + $0x7f0] sm:$0xf]
    %v3320 = vld [vmem:[#allocation5 + $0x7f4] sm:$0xf]
    %v3321 = vld [vmem:[#allocation5 + $0x7f8] sm:$0xf]
    %v3322 = vld [vmem:[#allocation5 + $0x7fc] sm:$0xf]
    %v3323 = vld [vmem:[#allocation5 + $0x800] sm:$0xf]
    %v3324 = vld [vmem:[#allocation5 + $0x804] sm:$0xf]
    %v3325 = vld [vmem:[#allocation5 + $0x808] sm:$0xf]
    %v3326 = vld [vmem:[#allocation5 + $0x80c] sm:$0xf]
    %v3327 = vld [vmem:[#allocation5 + $0x810] sm:$0xf]
    %v3328 = vld [vmem:[#allocation5 + $0x814] sm:$0xf]
    %v3329 = vld [vmem:[#allocation5 + $0x818] sm:$0xf]
    %v3330 = vld [vmem:[#allocation5 + $0x81c] sm:$0xf]
    %v3331 = vld [vmem:[#allocation5 + $0x820] sm:$0xf]
    %v3332 = vld [vmem:[#allocation5 + $0x824] sm:$0xf]
    %v3333 = vld [vmem:[#allocation5 + $0x828] sm:$0xf]
    %v3334 = vld [vmem:[#allocation5 + $0x82c] sm:$0xf]
    %v3335 = vld [vmem:[#allocation5 + $0x830] sm:$0xf]
    %v3336 = vld [vmem:[#allocation5 + $0x834] sm:$0xf]
    %v3337 = vld [vmem:[#allocation5 + $0x838] sm:$0xf]
    %v3338 = vld [vmem:[#allocation5 + $0x83c] sm:$0xf]
    %v3339 = vld [vmem:[#allocation5 + $0x840] sm:$0xf]
    %v3340 = vld [vmem:[#allocation5 + $0x844] sm:$0xf]
    %v3341 = vld [vmem:[#allocation5 + $0x848] sm:$0xf]
    %v3342 = vld [vmem:[#allocation5 + $0x84c] sm:$0xf]
    %v3343 = vld [vmem:[#allocation5 + $0x850] sm:$0xf]
    %v3344 = vld [vmem:[#allocation5 + $0x854] sm:$0xf]
    %v3345 = vld [vmem:[#allocation5 + $0x858] sm:$0xf]
    %v3346 = vld [vmem:[#allocation5 + $0x85c] sm:$0xf]
    %v3347 = vld [vmem:[#allocation5 + $0x860] sm:$0xf]
    %v3348 = vld [vmem:[#allocation5 + $0x864] sm:$0xf]
    %v3349 = vld [vmem:[#allocation5 + $0x868] sm:$0xf]
    %v3350 = vld [vmem:[#allocation5 + $0x86c] sm:$0xf]
    %v3351 = vld [vmem:[#allocation5 + $0x870] sm:$0xf]
    %v3352 = vld [vmem:[#allocation5 + $0x874] sm:$0xf]
    %v3353 = vld [vmem:[#allocation5 + $0x878] sm:$0xf]
    %v3354 = vld [vmem:[#allocation5 + $0x87c] sm:$0xf]
    %v3355 = vld [vmem:[#allocation5 + $0x880] sm:$0xf]
    %v3356 = vld [vmem:[#allocation5 + $0x884] sm:$0xf]
    %v3357 = vld [vmem:[#allocation5 + $0x888] sm:$0xf]
    %v3358 = vld [vmem:[#allocation5 + $0x88c] sm:$0xf]
    %v3359 = vld [vmem:[#allocation5 + $0x890] sm:$0xf]
    %v3360 = vld [vmem:[#allocation5 + $0x894] sm:$0xf]
    %v3361 = vld [vmem:[#allocation5 + $0x898] sm:$0xf]
    %v3362 = vld [vmem:[#allocation5 + $0x89c] sm:$0xf]
    %v3363 = vld [vmem:[#allocation5 + $0x8a0] sm:$0xf]
    %v3364 = vld [vmem:[#allocation5 + $0x8a4] sm:$0xf]
    %v3365 = vld [vmem:[#allocation5 + $0x8a8] sm:$0xf]
    %v3366 = vld [vmem:[#allocation5 + $0x8ac] sm:$0xf]
    %v3367 = vld [vmem:[#allocation5 + $0x8b0] sm:$0xf]
    %v3368 = vld [vmem:[#allocation5 + $0x8b4] sm:$0xf]
    %v3369 = vld [vmem:[#allocation5 + $0x8b8] sm:$0xf]
    %v3370 = vld [vmem:[#allocation5 + $0x8bc] sm:$0xf]
    %v3371 = vld [vmem:[#allocation7 + $0xa] sm:$0x1]
    %v3372 = vperm.slane %v3371, 0
    %v3453 = vunpack.c.l.b16 %v3291
    %v3454 = vunpack.c.l.b16 %v3292
    %v3455 = vunpack.c.l.b16 %v3293
    %v3456 = vunpack.c.l.b16 %v3294
    %v3457 = vunpack.c.l.b16 %v3295
    %v3458 = vunpack.c.l.b16 %v3296
    %v3459 = vunpack.c.l.b16 %v3297
    %v3460 = vunpack.c.l.b16 %v3298
    %v3461 = vunpack.c.l.b16 %v3299
    %v3462 = vunpack.c.l.b16 %v3300
    %v3463 = vunpack.c.l.b16 %v3301
    %v3464 = vunpack.c.l.b16 %v3302
    %v3465 = vunpack.c.l.b16 %v3303
    %v3466 = vunpack.c.l.b16 %v3304
    %v3467 = vunpack.c.l.b16 %v3305
    %v3468 = vunpack.c.l.b16 %v3306
    %v3469 = vunpack.c.l.b16 %v3307
    %v3470 = vunpack.c.l.b16 %v3308
    %v3471 = vunpack.c.l.b16 %v3309
    %v3472 = vunpack.c.l.b16 %v3310
    %v3473 = vunpack.c.l.b16 %v3311
    %v3474 = vunpack.c.l.b16 %v3312
    %v3475 = vunpack.c.l.b16 %v3313
    %v3476 = vunpack.c.l.b16 %v3314
    %v3477 = vunpack.c.l.b16 %v3315
    %v3478 = vunpack.c.l.b16 %v3316
    %v3479 = vunpack.c.l.b16 %v3317
    %v3480 = vunpack.c.l.b16 %v3318
    %v3481 = vunpack.c.l.b16 %v3319
    %v3482 = vunpack.c.l.b16 %v3320
    %v3483 = vunpack.c.l.b16 %v3321
    %v3484 = vunpack.c.l.b16 %v3322
    %v3485 = vunpack.c.l.b16 %v3323
    %v3486 = vunpack.c.l.b16 %v3324
    %v3487 = vunpack.c.l.b16 %v3325
    %v3488 = vunpack.c.l.b16 %v3326
    %v3489 = vunpack.c.l.b16 %v3327
    %v3490 = vunpack.c.l.b16 %v3328
    %v3491 = vunpack.c.l.b16 %v3329
    %v3492 = vunpack.c.l.b16 %v3330
    %v3493 = vunpack.c.l.b16 %v3331
    %v3494 = vunpack.c.l.b16 %v3332
    %v3495 = vunpack.c.l.b16 %v3333
    %v3496 = vunpack.c.l.b16 %v3334
    %v3497 = vunpack.c.l.b16 %v3335
    %v3498 = vunpack.c.l.b16 %v3336
    %v3499 = vunpack.c.l.b16 %v3337
    %v3500 = vunpack.c.l.b16 %v3338
    %v3501 = vunpack.c.l.b16 %v3339
    %v3502 = vunpack.c.l.b16 %v3340
    %v3503 = vunpack.c.l.b16 %v3341
    %v3504 = vunpack.c.l.b16 %v3342
    %v3505 = vunpack.c.l.b16 %v3343
    %v3506 = vunpack.c.l.b16 %v3344
    %v3507 = vunpack.c.l.b16 %v3345
    %v3508 = vunpack.c.l.b16 %v3346
    %v3509 = vunpack.c.l.b16 %v3347
    %v3510 = vunpack.c.l.b16 %v3348
    %v3511 = vunpack.c.l.b16 %v3349
    %v3512 = vunpack.c.l.b16 %v3350
    %v3513 = vunpack.c.l.b16 %v3351
    %v3514 = vunpack.c.l.b16 %v3352
    %v3515 = vunpack.c.l.b16 %v3353
    %v3516 = vunpack.c.l.b16 %v3354
    %v3517 = vunpack.c.l.b16 %v3355
    %v3518 = vunpack.c.l.b16 %v3356
    %v3519 = vunpack.c.l.b16 %v3357
    %v3520 = vunpack.c.l.b16 %v3358
    %v3521 = vunpack.c.l.b16 %v3359
    %v3522 = vunpack.c.l.b16 %v3360
    %v3523 = vunpack.c.l.b16 %v3361
    %v3524 = vunpack.c.l.b16 %v3362
    %v3525 = vunpack.c.l.b16 %v3363
    %v3526 = vunpack.c.l.b16 %v3364
    %v3527 = vunpack.c.l.b16 %v3365
    %v3528 = vunpack.c.l.b16 %v3366
    %v3529 = vunpack.c.l.b16 %v3367
    %v3530 = vunpack.c.l.b16 %v3368
    %v3531 = vunpack.c.l.b16 %v3369
    %v3532 = vunpack.c.l.b16 %v3370
    %v3533 = vpack.c.b16 %v3454, %v3453
    %v3534 = vpack.c.b16 %v3456, %v3455
    %v3535 = vpack.c.b16 %v3458, %v3457
    %v3536 = vpack.c.b16 %v3460, %v3459
    %v3537 = vpack.c.b16 %v3462, %v3461
    %v3538 = vpack.c.b16 %v3464, %v3463
    %v3539 = vpack.c.b16 %v3466, %v3465
    %v3540 = vpack.c.b16 %v3468, %v3467
    %v3541 = vpack.c.b16 %v3470, %v3469
    %v3542 = vpack.c.b16 %v3472, %v3471
    %v3543 = vpack.c.b16 %v3474, %v3473
    %v3544 = vpack.c.b16 %v3476, %v3475
    %v3545 = vpack.c.b16 %v3478, %v3477
    %v3546 = vpack.c.b16 %v3480, %v3479
    %v3547 = vpack.c.b16 %v3482, %v3481
    %v3548 = vpack.c.b16 %v3484, %v3483
    %v3549 = vpack.c.b16 %v3486, %v3485
    %v3550 = vpack.c.b16 %v3488, %v3487
    %v3551 = vpack.c.b16 %v3490, %v3489
    %v3552 = vpack.c.b16 %v3492, %v3491
    %v3553 = vpack.c.b16 %v3494, %v3493
    %v3554 = vpack.c.b16 %v3496, %v3495
    %v3555 = vpack.c.b16 %v3498, %v3497
    %v3556 = vpack.c.b16 %v3500, %v3499
    %v3557 = vpack.c.b16 %v3502, %v3501
    %v3558 = vpack.c.b16 %v3504, %v3503
    %v3559 = vpack.c.b16 %v3506, %v3505
    %v3560 = vpack.c.b16 %v3508, %v3507
    %v3561 = vpack.c.b16 %v3510, %v3509
    %v3562 = vpack.c.b16 %v3512, %v3511
    %v3563 = vpack.c.b16 %v3514, %v3513
    %v3564 = vpack.c.b16 %v3516, %v3515
    %v3565 = vpack.c.b16 %v3518, %v3517
    %v3566 = vpack.c.b16 %v3520, %v3519
    %v3567 = vpack.c.b16 %v3522, %v3521
    %v3568 = vpack.c.b16 %v3524, %v3523
    %v3569 = vpack.c.b16 %v3526, %v3525
    %v3570 = vpack.c.b16 %v3528, %v3527
    %v3571 = vpack.c.b16 %v3530, %v3529
    %v3572 = vpack.c.b16 %v3532, %v3531
    %3613 = vmatpush.bf16.msra.mxu0 %v3540
    %3614 = vmatpush.bf16.msra.mxu0 %v3539
    %3615 = vmatpush.bf16.msra.mxu0 %v3538
    %3616 = vmatpush.bf16.msra.mxu0 %v3537
    %3617 = vmatpush.bf16.msra.mxu0 %v3536
    %3618 = vmatpush.bf16.msra.mxu0 %v3535
    %3619 = vmatpush.bf16.msra.mxu0 %v3534
    %3620 = vmatpush.bf16.msra.mxu0 %v3533
    %3621 = vmatmul.bf16.gmra.mxu0 %v3286
    %v3622 = vpop.f32.mrf.mxu0
    %v3623 = vadd.f32 %v3372, %v3622
    %v3624 = vpop.f32.mrf.mxu0
    %v3625 = vadd.f32 %v3372, %v3624
    %3626 = vdwg.mxu0
    %3627 = vmatpush.bf16.msra.mxu0 %v3548
    %3628 = vmatpush.bf16.msra.mxu0 %v3547
    %3629 = vmatpush.bf16.msra.mxu0 %v3546
    %3630 = vmatpush.bf16.msra.mxu0 %v3545
    %3631 = vmatpush.bf16.msra.mxu0 %v3544
    %3632 = vmatpush.bf16.msra.mxu0 %v3543
    %3633 = vmatpush.bf16.msra.mxu0 %v3542
    %3634 = vmatpush.bf16.msra.mxu0 %v3541
    %3635 = vmatmul.bf16.gmra.mxu0 %v3287
    %v3636 = vpop.f32.mrf.mxu0
    %v3637 = vadd.f32 %v3623, %v3636
    %v3638 = vpop.f32.mrf.mxu0
    %v3639 = vadd.f32 %v3625, %v3638
    %3640 = vdwg.mxu0
    %3641 = vmatpush.bf16.msra.mxu0 %v3556
    %3642 = vmatpush.bf16.msra.mxu0 %v3555
    %3643 = vmatpush.bf16.msra.mxu0 %v3554
    %3644 = vmatpush.bf16.msra.mxu0 %v3553
    %3645 = vmatpush.bf16.msra.mxu0 %v3552
    %3646 = vmatpush.bf16.msra.mxu0 %v3551
    %3647 = vmatpush.bf16.msra.mxu0 %v3550
    %3648 = vmatpush.bf16.msra.mxu0 %v3549
    %3649 = vmatmul.bf16.gmra.mxu0 %v3288
    %v3650 = vpop.f32.mrf.mxu0
    %v3651 = vadd.f32 %v3637, %v3650
    %v3652 = vpop.f32.mrf.mxu0
    %v3653 = vadd.f32 %v3639, %v3652
    %3654 = vdwg.mxu0
    %3655 = vmatpush.bf16.msra.mxu0 %v3564
    %3656 = vmatpush.bf16.msra.mxu0 %v3563
    %3657 = vmatpush.bf16.msra.mxu0 %v3562
    %3658 = vmatpush.bf16.msra.mxu0 %v3561
    %3659 = vmatpush.bf16.msra.mxu0 %v3560
    %3660 = vmatpush.bf16.msra.mxu0 %v3559
    %3661 = vmatpush.bf16.msra.mxu0 %v3558
    %3662 = vmatpush.bf16.msra.mxu0 %v3557
    %3663 = vmatmul.bf16.gmra.mxu0 %v3289
    %v3664 = vpop.f32.mrf.mxu0
    %v3665 = vadd.f32 %v3651, %v3664
    %v3666 = vpop.f32.mrf.mxu0
    %v3667 = vadd.f32 %v3653, %v3666
    %3668 = vdwg.mxu0
    %3669 = vmatpush.bf16.msra.mxu0 %v3572
    %3670 = vmatpush.bf16.msra.mxu0 %v3571
    %3671 = vmatpush.bf16.msra.mxu0 %v3570
    %3672 = vmatpush.bf16.msra.mxu0 %v3569
    %3673 = vmatpush.bf16.msra.mxu0 %v3568
    %3674 = vmatpush.bf16.msra.mxu0 %v3567
    %3675 = vmatpush.bf16.msra.mxu0 %v3566
    %3676 = vmatpush.bf16.msra.mxu0 %v3565
    %3677 = vmatmul.bf16.gmra.mxu0 %v3290
    %v3678 = vpop.f32.mrf.mxu0
    %v3679 = vadd.f32 %v3665, %v3678
    %v3680 = vpop.f32.mrf.mxu0
    %v3681 = vadd.f32 %v3667, %v3680
    %3682 = vdwg.mxu0
    %v3683 = vmax.f32 %v3679, 0.0
    %v3684 = vmax.f32 %v3681, 0.0
    %v3685 = vadd.f32 %v3683, %v2410
    %v3686 = vadd.f32 %v3684, %v2417
    %v3689 = vrot.slane %v3685, 6
    %v3690 = vrot.slane %v3686, 6
    %v3691 = vsel %vm2141, %v3689, %v3690
    %v3694 = vsel %vm2141, 0.0, %v3689
    %v3695 = vsel %vm2284, %v3694, 0.0
    %v3696 = vsel %vm2285, %v3691, 0.0
    %v3697 = vrot.slane %v3685, 7
    %v3698 = vrot.slane %v3686, 7
    %v3699 = vsel %vm139, %v3697, %v3698
    %v3702 = vsel %vm139, 0.0, %v3697
    %v3703 = vsel %vm2330, %v3702, 0.0
    %v3704 = vsel %vm2331, %v3699, 0.0
    %v3705 = vrot.slane %v3685, 1
    %v3706 = vrot.slane %v3686, 1
    %v3707 = vsel %vm172, %v3705, %v3706
    %v3710 = vsel %vm172, %v3706, 0.0
    %v3711 = vsel %vm2357, %v3707, 0.0
    %v3712 = vsel %vm2358, %v3710, 0.0
    %v3713 = vrot.slane %v3685, 2
    %v3714 = vrot.slane %v3686, 2
    %v3715 = vsel %vm2400, %v3713, %v3714
    %v3718 = vsel %vm2400, %v3714, 0.0
    %v3719 = vsel %vm2384, %v3715, 0.0
    %v3720 = vsel %vm2385, %v3718, 0.0
    %v3721 = vpack.c.bf16 %v3696, %v3695
    %v3722 = vpack.c.bf16 %v3704, %v3703
    %v3723 = vpack.c.bf16 %v3686, %v3685
    %v3724 = vpack.c.bf16 %v3712, %v3711
    %v3725 = vpack.c.bf16 %v3720, %v3719
    %v3726 = vld [vmem:[#allocation5 + $0x8c0] sm:$0xf]
    %v3727 = vld [vmem:[#allocation5 + $0x8c4] sm:$0xf]
    %v3728 = vld [vmem:[#allocation5 + $0x8c8] sm:$0xf]
    %v3729 = vld [vmem:[#allocation5 + $0x8cc] sm:$0xf]
    %v3730 = vld [vmem:[#allocation5 + $0x8d0] sm:$0xf]
    %v3731 = vld [vmem:[#allocation5 + $0x8d4] sm:$0xf]
    %v3732 = vld [vmem:[#allocation5 + $0x8d8] sm:$0xf]
    %v3733 = vld [vmem:[#allocation5 + $0x8dc] sm:$0xf]
    %v3734 = vld [vmem:[#allocation5 + $0x8e0] sm:$0xf]
    %v3735 = vld [vmem:[#allocation5 + $0x8e4] sm:$0xf]
    %v3736 = vld [vmem:[#allocation5 + $0x8e8] sm:$0xf]
    %v3737 = vld [vmem:[#allocation5 + $0x8ec] sm:$0xf]
    %v3738 = vld [vmem:[#allocation5 + $0x8f0] sm:$0xf]
    %v3739 = vld [vmem:[#allocation5 + $0x8f4] sm:$0xf]
    %v3740 = vld [vmem:[#allocation5 + $0x8f8] sm:$0xf]
    %v3741 = vld [vmem:[#allocation5 + $0x8fc] sm:$0xf]
    %v3742 = vld [vmem:[#allocation5 + $0x900] sm:$0xf]
    %v3743 = vld [vmem:[#allocation5 + $0x904] sm:$0xf]
    %v3744 = vld [vmem:[#allocation5 + $0x908] sm:$0xf]
    %v3745 = vld [vmem:[#allocation5 + $0x90c] sm:$0xf]
    %v3746 = vld [vmem:[#allocation5 + $0x910] sm:$0xf]
    %v3747 = vld [vmem:[#allocation5 + $0x914] sm:$0xf]
    %v3748 = vld [vmem:[#allocation5 + $0x918] sm:$0xf]
    %v3749 = vld [vmem:[#allocation5 + $0x91c] sm:$0xf]
    %v3750 = vld [vmem:[#allocation5 + $0x920] sm:$0xf]
    %v3751 = vld [vmem:[#allocation5 + $0x924] sm:$0xf]
    %v3752 = vld [vmem:[#allocation5 + $0x928] sm:$0xf]
    %v3753 = vld [vmem:[#allocation5 + $0x92c] sm:$0xf]
    %v3754 = vld [vmem:[#allocation5 + $0x930] sm:$0xf]
    %v3755 = vld [vmem:[#allocation5 + $0x934] sm:$0xf]
    %v3756 = vld [vmem:[#allocation5 + $0x938] sm:$0xf]
    %v3757 = vld [vmem:[#allocation5 + $0x93c] sm:$0xf]
    %v3758 = vld [vmem:[#allocation5 + $0x940] sm:$0xf]
    %v3759 = vld [vmem:[#allocation5 + $0x944] sm:$0xf]
    %v3760 = vld [vmem:[#allocation5 + $0x948] sm:$0xf]
    %v3761 = vld [vmem:[#allocation5 + $0x94c] sm:$0xf]
    %v3762 = vld [vmem:[#allocation5 + $0x950] sm:$0xf]
    %v3763 = vld [vmem:[#allocation5 + $0x954] sm:$0xf]
    %v3764 = vld [vmem:[#allocation5 + $0x958] sm:$0xf]
    %v3765 = vld [vmem:[#allocation5 + $0x95c] sm:$0xf]
    %v3766 = vld [vmem:[#allocation5 + $0x960] sm:$0xf]
    %v3767 = vld [vmem:[#allocation5 + $0x964] sm:$0xf]
    %v3768 = vld [vmem:[#allocation5 + $0x968] sm:$0xf]
    %v3769 = vld [vmem:[#allocation5 + $0x96c] sm:$0xf]
    %v3770 = vld [vmem:[#allocation5 + $0x970] sm:$0xf]
    %v3771 = vld [vmem:[#allocation5 + $0x974] sm:$0xf]
    %v3772 = vld [vmem:[#allocation5 + $0x978] sm:$0xf]
    %v3773 = vld [vmem:[#allocation5 + $0x97c] sm:$0xf]
    %v3774 = vld [vmem:[#allocation5 + $0x980] sm:$0xf]
    %v3775 = vld [vmem:[#allocation5 + $0x984] sm:$0xf]
    %v3776 = vld [vmem:[#allocation5 + $0x988] sm:$0xf]
    %v3777 = vld [vmem:[#allocation5 + $0x98c] sm:$0xf]
    %v3778 = vld [vmem:[#allocation5 + $0x990] sm:$0xf]
    %v3779 = vld [vmem:[#allocation5 + $0x994] sm:$0xf]
    %v3780 = vld [vmem:[#allocation5 + $0x998] sm:$0xf]
    %v3781 = vld [vmem:[#allocation5 + $0x99c] sm:$0xf]
    %v3782 = vld [vmem:[#allocation5 + $0x9a0] sm:$0xf]
    %v3783 = vld [vmem:[#allocation5 + $0x9a4] sm:$0xf]
    %v3784 = vld [vmem:[#allocation5 + $0x9a8] sm:$0xf]
    %v3785 = vld [vmem:[#allocation5 + $0x9ac] sm:$0xf]
    %v3786 = vld [vmem:[#allocation5 + $0x9b0] sm:$0xf]
    %v3787 = vld [vmem:[#allocation5 + $0x9b4] sm:$0xf]
    %v3788 = vld [vmem:[#allocation5 + $0x9b8] sm:$0xf]
    %v3789 = vld [vmem:[#allocation5 + $0x9bc] sm:$0xf]
    %v3790 = vld [vmem:[#allocation5 + $0x9c0] sm:$0xf]
    %v3791 = vld [vmem:[#allocation5 + $0x9c4] sm:$0xf]
    %v3792 = vld [vmem:[#allocation5 + $0x9c8] sm:$0xf]
    %v3793 = vld [vmem:[#allocation5 + $0x9cc] sm:$0xf]
    %v3794 = vld [vmem:[#allocation5 + $0x9d0] sm:$0xf]
    %v3795 = vld [vmem:[#allocation5 + $0x9d4] sm:$0xf]
    %v3796 = vld [vmem:[#allocation5 + $0x9d8] sm:$0xf]
    %v3797 = vld [vmem:[#allocation5 + $0x9dc] sm:$0xf]
    %v3798 = vld [vmem:[#allocation5 + $0x9e0] sm:$0xf]
    %v3799 = vld [vmem:[#allocation5 + $0x9e4] sm:$0xf]
    %v3800 = vld [vmem:[#allocation5 + $0x9e8] sm:$0xf]
    %v3801 = vld [vmem:[#allocation5 + $0x9ec] sm:$0xf]
    %v3802 = vld [vmem:[#allocation5 + $0x9f0] sm:$0xf]
    %v3803 = vld [vmem:[#allocation5 + $0x9f4] sm:$0xf]
    %v3804 = vld [vmem:[#allocation5 + $0x9f8] sm:$0xf]
    %v3805 = vld [vmem:[#allocation5 + $0x9fc] sm:$0xf]
    %v3806 = vld [vmem:[#allocation7 + $0xb] sm:$0x1]
    %v3807 = vperm.slane %v3806, 0
    %v3888 = vunpack.c.l.b16 %v3726
    %v3889 = vunpack.c.l.b16 %v3727
    %v3890 = vunpack.c.l.b16 %v3728
    %v3891 = vunpack.c.l.b16 %v3729
    %v3892 = vunpack.c.l.b16 %v3730
    %v3893 = vunpack.c.l.b16 %v3731
    %v3894 = vunpack.c.l.b16 %v3732
    %v3895 = vunpack.c.l.b16 %v3733
    %v3896 = vunpack.c.l.b16 %v3734
    %v3897 = vunpack.c.l.b16 %v3735
    %v3898 = vunpack.c.l.b16 %v3736
    %v3899 = vunpack.c.l.b16 %v3737
    %v3900 = vunpack.c.l.b16 %v3738
    %v3901 = vunpack.c.l.b16 %v3739
    %v3902 = vunpack.c.l.b16 %v3740
    %v3903 = vunpack.c.l.b16 %v3741
    %v3904 = vunpack.c.l.b16 %v3742
    %v3905 = vunpack.c.l.b16 %v3743
    %v3906 = vunpack.c.l.b16 %v3744
    %v3907 = vunpack.c.l.b16 %v3745
    %v3908 = vunpack.c.l.b16 %v3746
    %v3909 = vunpack.c.l.b16 %v3747
    %v3910 = vunpack.c.l.b16 %v3748
    %v3911 = vunpack.c.l.b16 %v3749
    %v3912 = vunpack.c.l.b16 %v3750
    %v3913 = vunpack.c.l.b16 %v3751
    %v3914 = vunpack.c.l.b16 %v3752
    %v3915 = vunpack.c.l.b16 %v3753
    %v3916 = vunpack.c.l.b16 %v3754
    %v3917 = vunpack.c.l.b16 %v3755
    %v3918 = vunpack.c.l.b16 %v3756
    %v3919 = vunpack.c.l.b16 %v3757
    %v3920 = vunpack.c.l.b16 %v3758
    %v3921 = vunpack.c.l.b16 %v3759
    %v3922 = vunpack.c.l.b16 %v3760
    %v3923 = vunpack.c.l.b16 %v3761
    %v3924 = vunpack.c.l.b16 %v3762
    %v3925 = vunpack.c.l.b16 %v3763
    %v3926 = vunpack.c.l.b16 %v3764
    %v3927 = vunpack.c.l.b16 %v3765
    %v3928 = vunpack.c.l.b16 %v3766
    %v3929 = vunpack.c.l.b16 %v3767
    %v3930 = vunpack.c.l.b16 %v3768
    %v3931 = vunpack.c.l.b16 %v3769
    %v3932 = vunpack.c.l.b16 %v3770
    %v3933 = vunpack.c.l.b16 %v3771
    %v3934 = vunpack.c.l.b16 %v3772
    %v3935 = vunpack.c.l.b16 %v3773
    %v3936 = vunpack.c.l.b16 %v3774
    %v3937 = vunpack.c.l.b16 %v3775
    %v3938 = vunpack.c.l.b16 %v3776
    %v3939 = vunpack.c.l.b16 %v3777
    %v3940 = vunpack.c.l.b16 %v3778
    %v3941 = vunpack.c.l.b16 %v3779
    %v3942 = vunpack.c.l.b16 %v3780
    %v3943 = vunpack.c.l.b16 %v3781
    %v3944 = vunpack.c.l.b16 %v3782
    %v3945 = vunpack.c.l.b16 %v3783
    %v3946 = vunpack.c.l.b16 %v3784
    %v3947 = vunpack.c.l.b16 %v3785
    %v3948 = vunpack.c.l.b16 %v3786
    %v3949 = vunpack.c.l.b16 %v3787
    %v3950 = vunpack.c.l.b16 %v3788
    %v3951 = vunpack.c.l.b16 %v3789
    %v3952 = vunpack.c.l.b16 %v3790
    %v3953 = vunpack.c.l.b16 %v3791
    %v3954 = vunpack.c.l.b16 %v3792
    %v3955 = vunpack.c.l.b16 %v3793
    %v3956 = vunpack.c.l.b16 %v3794
    %v3957 = vunpack.c.l.b16 %v3795
    %v3958 = vunpack.c.l.b16 %v3796
    %v3959 = vunpack.c.l.b16 %v3797
    %v3960 = vunpack.c.l.b16 %v3798
    %v3961 = vunpack.c.l.b16 %v3799
    %v3962 = vunpack.c.l.b16 %v3800
    %v3963 = vunpack.c.l.b16 %v3801
    %v3964 = vunpack.c.l.b16 %v3802
    %v3965 = vunpack.c.l.b16 %v3803
    %v3966 = vunpack.c.l.b16 %v3804
    %v3967 = vunpack.c.l.b16 %v3805
    %v3968 = vpack.c.b16 %v3889, %v3888
    %v3969 = vpack.c.b16 %v3891, %v3890
    %v3970 = vpack.c.b16 %v3893, %v3892
    %v3971 = vpack.c.b16 %v3895, %v3894
    %v3972 = vpack.c.b16 %v3897, %v3896
    %v3973 = vpack.c.b16 %v3899, %v3898
    %v3974 = vpack.c.b16 %v3901, %v3900
    %v3975 = vpack.c.b16 %v3903, %v3902
    %v3976 = vpack.c.b16 %v3905, %v3904
    %v3977 = vpack.c.b16 %v3907, %v3906
    %v3978 = vpack.c.b16 %v3909, %v3908
    %v3979 = vpack.c.b16 %v3911, %v3910
    %v3980 = vpack.c.b16 %v3913, %v3912
    %v3981 = vpack.c.b16 %v3915, %v3914
    %v3982 = vpack.c.b16 %v3917, %v3916
    %v3983 = vpack.c.b16 %v3919, %v3918
    %v3984 = vpack.c.b16 %v3921, %v3920
    %v3985 = vpack.c.b16 %v3923, %v3922
    %v3986 = vpack.c.b16 %v3925, %v3924
    %v3987 = vpack.c.b16 %v3927, %v3926
    %v3988 = vpack.c.b16 %v3929, %v3928
    %v3989 = vpack.c.b16 %v3931, %v3930
    %v3990 = vpack.c.b16 %v3933, %v3932
    %v3991 = vpack.c.b16 %v3935, %v3934
    %v3992 = vpack.c.b16 %v3937, %v3936
    %v3993 = vpack.c.b16 %v3939, %v3938
    %v3994 = vpack.c.b16 %v3941, %v3940
    %v3995 = vpack.c.b16 %v3943, %v3942
    %v3996 = vpack.c.b16 %v3945, %v3944
    %v3997 = vpack.c.b16 %v3947, %v3946
    %v3998 = vpack.c.b16 %v3949, %v3948
    %v3999 = vpack.c.b16 %v3951, %v3950
    %v4000 = vpack.c.b16 %v3953, %v3952
    %v4001 = vpack.c.b16 %v3955, %v3954
    %v4002 = vpack.c.b16 %v3957, %v3956
    %v4003 = vpack.c.b16 %v3959, %v3958
    %v4004 = vpack.c.b16 %v3961, %v3960
    %v4005 = vpack.c.b16 %v3963, %v3962
    %v4006 = vpack.c.b16 %v3965, %v3964
    %v4007 = vpack.c.b16 %v3967, %v3966
    %4048 = vmatpush.bf16.msra.mxu0 %v3975
    %4049 = vmatpush.bf16.msra.mxu0 %v3974
    %4050 = vmatpush.bf16.msra.mxu0 %v3973
    %4051 = vmatpush.bf16.msra.mxu0 %v3972
    %4052 = vmatpush.bf16.msra.mxu0 %v3971
    %4053 = vmatpush.bf16.msra.mxu0 %v3970
    %4054 = vmatpush.bf16.msra.mxu0 %v3969
    %4055 = vmatpush.bf16.msra.mxu0 %v3968
    %4056 = vmatmul.bf16.gmra.mxu0 %v3721
    %v4057 = vpop.f32.mrf.mxu0
    %v4058 = vadd.f32 %v3807, %v4057
    %v4059 = vpop.f32.mrf.mxu0
    %v4060 = vadd.f32 %v3807, %v4059
    %4061 = vdwg.mxu0
    %4062 = vmatpush.bf16.msra.mxu0 %v3983
    %4063 = vmatpush.bf16.msra.mxu0 %v3982
    %4064 = vmatpush.bf16.msra.mxu0 %v3981
    %4065 = vmatpush.bf16.msra.mxu0 %v3980
    %4066 = vmatpush.bf16.msra.mxu0 %v3979
    %4067 = vmatpush.bf16.msra.mxu0 %v3978
    %4068 = vmatpush.bf16.msra.mxu0 %v3977
    %4069 = vmatpush.bf16.msra.mxu0 %v3976
    %4070 = vmatmul.bf16.gmra.mxu0 %v3722
    %v4071 = vpop.f32.mrf.mxu0
    %v4072 = vadd.f32 %v4058, %v4071
    %v4073 = vpop.f32.mrf.mxu0
    %v4074 = vadd.f32 %v4060, %v4073
    %4075 = vdwg.mxu0
    %4076 = vmatpush.bf16.msra.mxu0 %v3991
    %4077 = vmatpush.bf16.msra.mxu0 %v3990
    %4078 = vmatpush.bf16.msra.mxu0 %v3989
    %4079 = vmatpush.bf16.msra.mxu0 %v3988
    %4080 = vmatpush.bf16.msra.mxu0 %v3987
    %4081 = vmatpush.bf16.msra.mxu0 %v3986
    %4082 = vmatpush.bf16.msra.mxu0 %v3985
    %4083 = vmatpush.bf16.msra.mxu0 %v3984
    %4084 = vmatmul.bf16.gmra.mxu0 %v3723
    %v4085 = vpop.f32.mrf.mxu0
    %v4086 = vadd.f32 %v4072, %v4085
    %v4087 = vpop.f32.mrf.mxu0
    %v4088 = vadd.f32 %v4074, %v4087
    %4089 = vdwg.mxu0
    %4090 = vmatpush.bf16.msra.mxu0 %v3999
    %4091 = vmatpush.bf16.msra.mxu0 %v3998
    %4092 = vmatpush.bf16.msra.mxu0 %v3997
    %4093 = vmatpush.bf16.msra.mxu0 %v3996
    %4094 = vmatpush.bf16.msra.mxu0 %v3995
    %4095 = vmatpush.bf16.msra.mxu0 %v3994
    %4096 = vmatpush.bf16.msra.mxu0 %v3993
    %4097 = vmatpush.bf16.msra.mxu0 %v3992
    %4098 = vmatmul.bf16.gmra.mxu0 %v3724
    %v4099 = vpop.f32.mrf.mxu0
    %v4100 = vadd.f32 %v4086, %v4099
    %v4101 = vpop.f32.mrf.mxu0
    %v4102 = vadd.f32 %v4088, %v4101
    %4103 = vdwg.mxu0
    %4104 = vmatpush.bf16.msra.mxu0 %v4007
    %4105 = vmatpush.bf16.msra.mxu0 %v4006
    %4106 = vmatpush.bf16.msra.mxu0 %v4005
    %4107 = vmatpush.bf16.msra.mxu0 %v4004
    %4108 = vmatpush.bf16.msra.mxu0 %v4003
    %4109 = vmatpush.bf16.msra.mxu0 %v4002
    %4110 = vmatpush.bf16.msra.mxu0 %v4001
    %4111 = vmatpush.bf16.msra.mxu0 %v4000
    %4112 = vmatmul.bf16.gmra.mxu0 %v3725
    %v4113 = vpop.f32.mrf.mxu0
    %v4114 = vadd.f32 %v4100, %v4113
    %v4115 = vpop.f32.mrf.mxu0
    %v4116 = vadd.f32 %v4102, %v4115
    %4117 = vdwg.mxu0
    %v4118 = vmax.f32 %v4114, 0.0
    %v4119 = vmax.f32 %v4116, 0.0
    %v4122 = vrot.slane %v4118, 6
    %v4123 = vrot.slane %v4119, 6
    %v4124 = vsel %vm2141, %v4122, %v4123
    %v4127 = vsel %vm2141, 0.0, %v4122
    %v4128 = vsel %vm2284, %v4127, 0.0
    %v4129 = vsel %vm2285, %v4124, 0.0
    %v4130 = vrot.slane %v4118, 7
    %v4131 = vrot.slane %v4119, 7
    %v4132 = vsel %vm139, %v4130, %v4131
    %v4135 = vsel %vm139, 0.0, %v4130
    %v4136 = vsel %vm2330, %v4135, 0.0
    %v4137 = vsel %vm2331, %v4132, 0.0
    %v4138 = vrot.slane %v4118, 1
    %v4139 = vrot.slane %v4119, 1
    %v4140 = vsel %vm172, %v4138, %v4139
    %v4143 = vsel %vm172, %v4139, 0.0
    %v4144 = vsel %vm2357, %v4140, 0.0
    %v4145 = vsel %vm2358, %v4143, 0.0
    %v4146 = vrot.slane %v4118, 2
    %v4147 = vrot.slane %v4119, 2
    %v4148 = vsel %vm2400, %v4146, %v4147
    %v4151 = vsel %vm2400, %v4147, 0.0
    %v4152 = vsel %vm2384, %v4148, 0.0
    %v4153 = vsel %vm2385, %v4151, 0.0
    %v4154 = vpack.c.bf16 %v4129, %v4128
    %v4155 = vpack.c.bf16 %v4137, %v4136
    %v4156 = vpack.c.bf16 %v4119, %v4118
    %v4157 = vpack.c.bf16 %v4145, %v4144
    %v4158 = vpack.c.bf16 %v4153, %v4152
    %v4159 = vld [vmem:[#allocation5 + $0xa00] sm:$0xf]
    %v4160 = vld [vmem:[#allocation5 + $0xa04] sm:$0xf]
    %v4161 = vld [vmem:[#allocation5 + $0xa08] sm:$0xf]
    %v4162 = vld [vmem:[#allocation5 + $0xa0c] sm:$0xf]
    %v4163 = vld [vmem:[#allocation5 + $0xa10] sm:$0xf]
    %v4164 = vld [vmem:[#allocation5 + $0xa14] sm:$0xf]
    %v4165 = vld [vmem:[#allocation5 + $0xa18] sm:$0xf]
    %v4166 = vld [vmem:[#allocation5 + $0xa1c] sm:$0xf]
    %v4167 = vld [vmem:[#allocation5 + $0xa20] sm:$0xf]
    %v4168 = vld [vmem:[#allocation5 + $0xa24] sm:$0xf]
    %v4169 = vld [vmem:[#allocation5 + $0xa28] sm:$0xf]
    %v4170 = vld [vmem:[#allocation5 + $0xa2c] sm:$0xf]
    %v4171 = vld [vmem:[#allocation5 + $0xa30] sm:$0xf]
    %v4172 = vld [vmem:[#allocation5 + $0xa34] sm:$0xf]
    %v4173 = vld [vmem:[#allocation5 + $0xa38] sm:$0xf]
    %v4174 = vld [vmem:[#allocation5 + $0xa3c] sm:$0xf]
    %v4175 = vld [vmem:[#allocation5 + $0xa40] sm:$0xf]
    %v4176 = vld [vmem:[#allocation5 + $0xa44] sm:$0xf]
    %v4177 = vld [vmem:[#allocation5 + $0xa48] sm:$0xf]
    %v4178 = vld [vmem:[#allocation5 + $0xa4c] sm:$0xf]
    %v4179 = vld [vmem:[#allocation5 + $0xa50] sm:$0xf]
    %v4180 = vld [vmem:[#allocation5 + $0xa54] sm:$0xf]
    %v4181 = vld [vmem:[#allocation5 + $0xa58] sm:$0xf]
    %v4182 = vld [vmem:[#allocation5 + $0xa5c] sm:$0xf]
    %v4183 = vld [vmem:[#allocation5 + $0xa60] sm:$0xf]
    %v4184 = vld [vmem:[#allocation5 + $0xa64] sm:$0xf]
    %v4185 = vld [vmem:[#allocation5 + $0xa68] sm:$0xf]
    %v4186 = vld [vmem:[#allocation5 + $0xa6c] sm:$0xf]
    %v4187 = vld [vmem:[#allocation5 + $0xa70] sm:$0xf]
    %v4188 = vld [vmem:[#allocation5 + $0xa74] sm:$0xf]
    %v4189 = vld [vmem:[#allocation5 + $0xa78] sm:$0xf]
    %v4190 = vld [vmem:[#allocation5 + $0xa7c] sm:$0xf]
    %v4191 = vld [vmem:[#allocation5 + $0xa80] sm:$0xf]
    %v4192 = vld [vmem:[#allocation5 + $0xa84] sm:$0xf]
    %v4193 = vld [vmem:[#allocation5 + $0xa88] sm:$0xf]
    %v4194 = vld [vmem:[#allocation5 + $0xa8c] sm:$0xf]
    %v4195 = vld [vmem:[#allocation5 + $0xa90] sm:$0xf]
    %v4196 = vld [vmem:[#allocation5 + $0xa94] sm:$0xf]
    %v4197 = vld [vmem:[#allocation5 + $0xa98] sm:$0xf]
    %v4198 = vld [vmem:[#allocation5 + $0xa9c] sm:$0xf]
    %v4199 = vld [vmem:[#allocation5 + $0xaa0] sm:$0xf]
    %v4200 = vld [vmem:[#allocation5 + $0xaa4] sm:$0xf]
    %v4201 = vld [vmem:[#allocation5 + $0xaa8] sm:$0xf]
    %v4202 = vld [vmem:[#allocation5 + $0xaac] sm:$0xf]
    %v4203 = vld [vmem:[#allocation5 + $0xab0] sm:$0xf]
    %v4204 = vld [vmem:[#allocation5 + $0xab4] sm:$0xf]
    %v4205 = vld [vmem:[#allocation5 + $0xab8] sm:$0xf]
    %v4206 = vld [vmem:[#allocation5 + $0xabc] sm:$0xf]
    %v4207 = vld [vmem:[#allocation5 + $0xac0] sm:$0xf]
    %v4208 = vld [vmem:[#allocation5 + $0xac4] sm:$0xf]
    %v4209 = vld [vmem:[#allocation5 + $0xac8] sm:$0xf]
    %v4210 = vld [vmem:[#allocation5 + $0xacc] sm:$0xf]
    %v4211 = vld [vmem:[#allocation5 + $0xad0] sm:$0xf]
    %v4212 = vld [vmem:[#allocation5 + $0xad4] sm:$0xf]
    %v4213 = vld [vmem:[#allocation5 + $0xad8] sm:$0xf]
    %v4214 = vld [vmem:[#allocation5 + $0xadc] sm:$0xf]
    %v4215 = vld [vmem:[#allocation5 + $0xae0] sm:$0xf]
    %v4216 = vld [vmem:[#allocation5 + $0xae4] sm:$0xf]
    %v4217 = vld [vmem:[#allocation5 + $0xae8] sm:$0xf]
    %v4218 = vld [vmem:[#allocation5 + $0xaec] sm:$0xf]
    %v4219 = vld [vmem:[#allocation5 + $0xaf0] sm:$0xf]
    %v4220 = vld [vmem:[#allocation5 + $0xaf4] sm:$0xf]
    %v4221 = vld [vmem:[#allocation5 + $0xaf8] sm:$0xf]
    %v4222 = vld [vmem:[#allocation5 + $0xafc] sm:$0xf]
    %v4223 = vld [vmem:[#allocation5 + $0xb00] sm:$0xf]
    %v4224 = vld [vmem:[#allocation5 + $0xb04] sm:$0xf]
    %v4225 = vld [vmem:[#allocation5 + $0xb08] sm:$0xf]
    %v4226 = vld [vmem:[#allocation5 + $0xb0c] sm:$0xf]
    %v4227 = vld [vmem:[#allocation5 + $0xb10] sm:$0xf]
    %v4228 = vld [vmem:[#allocation5 + $0xb14] sm:$0xf]
    %v4229 = vld [vmem:[#allocation5 + $0xb18] sm:$0xf]
    %v4230 = vld [vmem:[#allocation5 + $0xb1c] sm:$0xf]
    %v4231 = vld [vmem:[#allocation5 + $0xb20] sm:$0xf]
    %v4232 = vld [vmem:[#allocation5 + $0xb24] sm:$0xf]
    %v4233 = vld [vmem:[#allocation5 + $0xb28] sm:$0xf]
    %v4234 = vld [vmem:[#allocation5 + $0xb2c] sm:$0xf]
    %v4235 = vld [vmem:[#allocation5 + $0xb30] sm:$0xf]
    %v4236 = vld [vmem:[#allocation5 + $0xb34] sm:$0xf]
    %v4237 = vld [vmem:[#allocation5 + $0xb38] sm:$0xf]
    %v4238 = vld [vmem:[#allocation5 + $0xb3c] sm:$0xf]
    %v4239 = vld [vmem:[#allocation7 + $0xc] sm:$0x1]
    %v4240 = vperm.slane %v4239, 0
    %v4321 = vunpack.c.l.b16 %v4159
    %v4322 = vunpack.c.l.b16 %v4160
    %v4323 = vunpack.c.l.b16 %v4161
    %v4324 = vunpack.c.l.b16 %v4162
    %v4325 = vunpack.c.l.b16 %v4163
    %v4326 = vunpack.c.l.b16 %v4164
    %v4327 = vunpack.c.l.b16 %v4165
    %v4328 = vunpack.c.l.b16 %v4166
    %v4329 = vunpack.c.l.b16 %v4167
    %v4330 = vunpack.c.l.b16 %v4168
    %v4331 = vunpack.c.l.b16 %v4169
    %v4332 = vunpack.c.l.b16 %v4170
    %v4333 = vunpack.c.l.b16 %v4171
    %v4334 = vunpack.c.l.b16 %v4172
    %v4335 = vunpack.c.l.b16 %v4173
    %v4336 = vunpack.c.l.b16 %v4174
    %v4337 = vunpack.c.l.b16 %v4175
    %v4338 = vunpack.c.l.b16 %v4176
    %v4339 = vunpack.c.l.b16 %v4177
    %v4340 = vunpack.c.l.b16 %v4178
    %v4341 = vunpack.c.l.b16 %v4179
    %v4342 = vunpack.c.l.b16 %v4180
    %v4343 = vunpack.c.l.b16 %v4181
    %v4344 = vunpack.c.l.b16 %v4182
    %v4345 = vunpack.c.l.b16 %v4183
    %v4346 = vunpack.c.l.b16 %v4184
    %v4347 = vunpack.c.l.b16 %v4185
    %v4348 = vunpack.c.l.b16 %v4186
    %v4349 = vunpack.c.l.b16 %v4187
    %v4350 = vunpack.c.l.b16 %v4188
    %v4351 = vunpack.c.l.b16 %v4189
    %v4352 = vunpack.c.l.b16 %v4190
    %v4353 = vunpack.c.l.b16 %v4191
    %v4354 = vunpack.c.l.b16 %v4192
    %v4355 = vunpack.c.l.b16 %v4193
    %v4356 = vunpack.c.l.b16 %v4194
    %v4357 = vunpack.c.l.b16 %v4195
    %v4358 = vunpack.c.l.b16 %v4196
    %v4359 = vunpack.c.l.b16 %v4197
    %v4360 = vunpack.c.l.b16 %v4198
    %v4361 = vunpack.c.l.b16 %v4199
    %v4362 = vunpack.c.l.b16 %v4200
    %v4363 = vunpack.c.l.b16 %v4201
    %v4364 = vunpack.c.l.b16 %v4202
    %v4365 = vunpack.c.l.b16 %v4203
    %v4366 = vunpack.c.l.b16 %v4204
    %v4367 = vunpack.c.l.b16 %v4205
    %v4368 = vunpack.c.l.b16 %v4206
    %v4369 = vunpack.c.l.b16 %v4207
    %v4370 = vunpack.c.l.b16 %v4208
    %v4371 = vunpack.c.l.b16 %v4209
    %v4372 = vunpack.c.l.b16 %v4210
    %v4373 = vunpack.c.l.b16 %v4211
    %v4374 = vunpack.c.l.b16 %v4212
    %v4375 = vunpack.c.l.b16 %v4213
    %v4376 = vunpack.c.l.b16 %v4214
    %v4377 = vunpack.c.l.b16 %v4215
    %v4378 = vunpack.c.l.b16 %v4216
    %v4379 = vunpack.c.l.b16 %v4217
    %v4380 = vunpack.c.l.b16 %v4218
    %v4381 = vunpack.c.l.b16 %v4219
    %v4382 = vunpack.c.l.b16 %v4220
    %v4383 = vunpack.c.l.b16 %v4221
    %v4384 = vunpack.c.l.b16 %v4222
    %v4385 = vunpack.c.l.b16 %v4223
    %v4386 = vunpack.c.l.b16 %v4224
    %v4387 = vunpack.c.l.b16 %v4225
    %v4388 = vunpack.c.l.b16 %v4226
    %v4389 = vunpack.c.l.b16 %v4227
    %v4390 = vunpack.c.l.b16 %v4228
    %v4391 = vunpack.c.l.b16 %v4229
    %v4392 = vunpack.c.l.b16 %v4230
    %v4393 = vunpack.c.l.b16 %v4231
    %v4394 = vunpack.c.l.b16 %v4232
    %v4395 = vunpack.c.l.b16 %v4233
    %v4396 = vunpack.c.l.b16 %v4234
    %v4397 = vunpack.c.l.b16 %v4235
    %v4398 = vunpack.c.l.b16 %v4236
    %v4399 = vunpack.c.l.b16 %v4237
    %v4400 = vunpack.c.l.b16 %v4238
    %v4401 = vpack.c.b16 %v4322, %v4321
    %v4402 = vpack.c.b16 %v4324, %v4323
    %v4403 = vpack.c.b16 %v4326, %v4325
    %v4404 = vpack.c.b16 %v4328, %v4327
    %v4405 = vpack.c.b16 %v4330, %v4329
    %v4406 = vpack.c.b16 %v4332, %v4331
    %v4407 = vpack.c.b16 %v4334, %v4333
    %v4408 = vpack.c.b16 %v4336, %v4335
    %v4409 = vpack.c.b16 %v4338, %v4337
    %v4410 = vpack.c.b16 %v4340, %v4339
    %v4411 = vpack.c.b16 %v4342, %v4341
    %v4412 = vpack.c.b16 %v4344, %v4343
    %v4413 = vpack.c.b16 %v4346, %v4345
    %v4414 = vpack.c.b16 %v4348, %v4347
    %v4415 = vpack.c.b16 %v4350, %v4349
    %v4416 = vpack.c.b16 %v4352, %v4351
    %v4417 = vpack.c.b16 %v4354, %v4353
    %v4418 = vpack.c.b16 %v4356, %v4355
    %v4419 = vpack.c.b16 %v4358, %v4357
    %v4420 = vpack.c.b16 %v4360, %v4359
    %v4421 = vpack.c.b16 %v4362, %v4361
    %v4422 = vpack.c.b16 %v4364, %v4363
    %v4423 = vpack.c.b16 %v4366, %v4365
    %v4424 = vpack.c.b16 %v4368, %v4367
    %v4425 = vpack.c.b16 %v4370, %v4369
    %v4426 = vpack.c.b16 %v4372, %v4371
    %v4427 = vpack.c.b16 %v4374, %v4373
    %v4428 = vpack.c.b16 %v4376, %v4375
    %v4429 = vpack.c.b16 %v4378, %v4377
    %v4430 = vpack.c.b16 %v4380, %v4379
    %v4431 = vpack.c.b16 %v4382, %v4381
    %v4432 = vpack.c.b16 %v4384, %v4383
    %v4433 = vpack.c.b16 %v4386, %v4385
    %v4434 = vpack.c.b16 %v4388, %v4387
    %v4435 = vpack.c.b16 %v4390, %v4389
    %v4436 = vpack.c.b16 %v4392, %v4391
    %v4437 = vpack.c.b16 %v4394, %v4393
    %v4438 = vpack.c.b16 %v4396, %v4395
    %v4439 = vpack.c.b16 %v4398, %v4397
    %v4440 = vpack.c.b16 %v4400, %v4399
    %4481 = vmatpush.bf16.msra.mxu0 %v4408
    %4482 = vmatpush.bf16.msra.mxu0 %v4407
    %4483 = vmatpush.bf16.msra.mxu0 %v4406
    %4484 = vmatpush.bf16.msra.mxu0 %v4405
    %4485 = vmatpush.bf16.msra.mxu0 %v4404
    %4486 = vmatpush.bf16.msra.mxu0 %v4403
    %4487 = vmatpush.bf16.msra.mxu0 %v4402
    %4488 = vmatpush.bf16.msra.mxu0 %v4401
    %4489 = vmatmul.bf16.gmra.mxu0 %v4154
    %v4490 = vpop.f32.mrf.mxu0
    %v4491 = vadd.f32 %v4240, %v4490
    %v4492 = vpop.f32.mrf.mxu0
    %v4493 = vadd.f32 %v4240, %v4492
    %4494 = vdwg.mxu0
    %4495 = vmatpush.bf16.msra.mxu0 %v4416
    %4496 = vmatpush.bf16.msra.mxu0 %v4415
    %4497 = vmatpush.bf16.msra.mxu0 %v4414
    %4498 = vmatpush.bf16.msra.mxu0 %v4413
    %4499 = vmatpush.bf16.msra.mxu0 %v4412
    %4500 = vmatpush.bf16.msra.mxu0 %v4411
    %4501 = vmatpush.bf16.msra.mxu0 %v4410
    %4502 = vmatpush.bf16.msra.mxu0 %v4409
    %4503 = vmatmul.bf16.gmra.mxu0 %v4155
    %v4504 = vpop.f32.mrf.mxu0
    %v4505 = vadd.f32 %v4491, %v4504
    %v4506 = vpop.f32.mrf.mxu0
    %v4507 = vadd.f32 %v4493, %v4506
    %4508 = vdwg.mxu0
    %4509 = vmatpush.bf16.msra.mxu0 %v4424
    %4510 = vmatpush.bf16.msra.mxu0 %v4423
    %4511 = vmatpush.bf16.msra.mxu0 %v4422
    %4512 = vmatpush.bf16.msra.mxu0 %v4421
    %4513 = vmatpush.bf16.msra.mxu0 %v4420
    %4514 = vmatpush.bf16.msra.mxu0 %v4419
    %4515 = vmatpush.bf16.msra.mxu0 %v4418
    %4516 = vmatpush.bf16.msra.mxu0 %v4417
    %4517 = vmatmul.bf16.gmra.mxu0 %v4156
    %v4518 = vpop.f32.mrf.mxu0
    %v4519 = vadd.f32 %v4505, %v4518
    %v4520 = vpop.f32.mrf.mxu0
    %v4521 = vadd.f32 %v4507, %v4520
    %4522 = vdwg.mxu0
    %4523 = vmatpush.bf16.msra.mxu0 %v4432
    %4524 = vmatpush.bf16.msra.mxu0 %v4431
    %4525 = vmatpush.bf16.msra.mxu0 %v4430
    %4526 = vmatpush.bf16.msra.mxu0 %v4429
    %4527 = vmatpush.bf16.msra.mxu0 %v4428
    %4528 = vmatpush.bf16.msra.mxu0 %v4427
    %4529 = vmatpush.bf16.msra.mxu0 %v4426
    %4530 = vmatpush.bf16.msra.mxu0 %v4425
    %4531 = vmatmul.bf16.gmra.mxu0 %v4157
    %v4532 = vpop.f32.mrf.mxu0
    %v4533 = vadd.f32 %v4519, %v4532
    %v4534 = vpop.f32.mrf.mxu0
    %v4535 = vadd.f32 %v4521, %v4534
    %4536 = vdwg.mxu0
    %4537 = vmatpush.bf16.msra.mxu0 %v4440
    %4538 = vmatpush.bf16.msra.mxu0 %v4439
    %4539 = vmatpush.bf16.msra.mxu0 %v4438
    %4540 = vmatpush.bf16.msra.mxu0 %v4437
    %4541 = vmatpush.bf16.msra.mxu0 %v4436
    %4542 = vmatpush.bf16.msra.mxu0 %v4435
    %4543 = vmatpush.bf16.msra.mxu0 %v4434
    %4544 = vmatpush.bf16.msra.mxu0 %v4433
    %4545 = vmatmul.bf16.gmra.mxu0 %v4158
    %v4546 = vpop.f32.mrf.mxu0
    %v4547 = vadd.f32 %v4533, %v4546
    %v4548 = vpop.f32.mrf.mxu0
    %v4549 = vadd.f32 %v4535, %v4548
    %4550 = vdwg.mxu0
    %v4551 = vmax.f32 %v4547, 0.0
    %v4552 = vmax.f32 %v4549, 0.0
    %v4555 = vrot.slane %v4551, 6
    %v4556 = vrot.slane %v4552, 6
    %v4557 = vsel %vm2141, %v4555, %v4556
    %v4560 = vsel %vm2141, 0.0, %v4555
    %v4561 = vsel %vm2284, %v4560, 0.0
    %v4562 = vsel %vm2285, %v4557, 0.0
    %v4563 = vrot.slane %v4551, 7
    %v4564 = vrot.slane %v4552, 7
    %v4565 = vsel %vm139, %v4563, %v4564
    %v4568 = vsel %vm139, 0.0, %v4563
    %v4569 = vsel %vm2330, %v4568, 0.0
    %v4570 = vsel %vm2331, %v4565, 0.0
    %v4571 = vrot.slane %v4551, 1
    %v4572 = vrot.slane %v4552, 1
    %v4573 = vsel %vm172, %v4571, %v4572
    %v4576 = vsel %vm172, %v4572, 0.0
    %v4577 = vsel %vm2357, %v4573, 0.0
    %v4578 = vsel %vm2358, %v4576, 0.0
    %v4579 = vrot.slane %v4551, 2
    %v4580 = vrot.slane %v4552, 2
    %v4581 = vsel %vm2400, %v4579, %v4580
    %v4584 = vsel %vm2400, %v4580, 0.0
    %v4585 = vsel %vm2384, %v4581, 0.0
    %v4586 = vsel %vm2385, %v4584, 0.0
    %v4587 = vpack.c.bf16 %v4562, %v4561
    %v4588 = vpack.c.bf16 %v4570, %v4569
    %v4589 = vpack.c.bf16 %v4552, %v4551
    %v4590 = vpack.c.bf16 %v4578, %v4577
    %v4591 = vpack.c.bf16 %v4586, %v4585
    %v4592 = vld [vmem:[#allocation5 + $0xb40] sm:$0xf]
    %v4593 = vld [vmem:[#allocation5 + $0xb44] sm:$0xf]
    %v4594 = vld [vmem:[#allocation5 + $0xb48] sm:$0xf]
    %v4595 = vld [vmem:[#allocation5 + $0xb4c] sm:$0xf]
    %v4596 = vld [vmem:[#allocation5 + $0xb50] sm:$0xf]
    %v4597 = vld [vmem:[#allocation5 + $0xb54] sm:$0xf]
    %v4598 = vld [vmem:[#allocation5 + $0xb58] sm:$0xf]
    %v4599 = vld [vmem:[#allocation5 + $0xb5c] sm:$0xf]
    %v4600 = vld [vmem:[#allocation5 + $0xb60] sm:$0xf]
    %v4601 = vld [vmem:[#allocation5 + $0xb64] sm:$0xf]
    %v4602 = vld [vmem:[#allocation5 + $0xb68] sm:$0xf]
    %v4603 = vld [vmem:[#allocation5 + $0xb6c] sm:$0xf]
    %v4604 = vld [vmem:[#allocation5 + $0xb70] sm:$0xf]
    %v4605 = vld [vmem:[#allocation5 + $0xb74] sm:$0xf]
    %v4606 = vld [vmem:[#allocation5 + $0xb78] sm:$0xf]
    %v4607 = vld [vmem:[#allocation5 + $0xb7c] sm:$0xf]
    %v4608 = vld [vmem:[#allocation5 + $0xb80] sm:$0xf]
    %v4609 = vld [vmem:[#allocation5 + $0xb84] sm:$0xf]
    %v4610 = vld [vmem:[#allocation5 + $0xb88] sm:$0xf]
    %v4611 = vld [vmem:[#allocation5 + $0xb8c] sm:$0xf]
    %v4612 = vld [vmem:[#allocation5 + $0xb90] sm:$0xf]
    %v4613 = vld [vmem:[#allocation5 + $0xb94] sm:$0xf]
    %v4614 = vld [vmem:[#allocation5 + $0xb98] sm:$0xf]
    %v4615 = vld [vmem:[#allocation5 + $0xb9c] sm:$0xf]
    %v4616 = vld [vmem:[#allocation5 + $0xba0] sm:$0xf]
    %v4617 = vld [vmem:[#allocation5 + $0xba4] sm:$0xf]
    %v4618 = vld [vmem:[#allocation5 + $0xba8] sm:$0xf]
    %v4619 = vld [vmem:[#allocation5 + $0xbac] sm:$0xf]
    %v4620 = vld [vmem:[#allocation5 + $0xbb0] sm:$0xf]
    %v4621 = vld [vmem:[#allocation5 + $0xbb4] sm:$0xf]
    %v4622 = vld [vmem:[#allocation5 + $0xbb8] sm:$0xf]
    %v4623 = vld [vmem:[#allocation5 + $0xbbc] sm:$0xf]
    %v4624 = vld [vmem:[#allocation5 + $0xbc0] sm:$0xf]
    %v4625 = vld [vmem:[#allocation5 + $0xbc4] sm:$0xf]
    %v4626 = vld [vmem:[#allocation5 + $0xbc8] sm:$0xf]
    %v4627 = vld [vmem:[#allocation5 + $0xbcc] sm:$0xf]
    %v4628 = vld [vmem:[#allocation5 + $0xbd0] sm:$0xf]
    %v4629 = vld [vmem:[#allocation5 + $0xbd4] sm:$0xf]
    %v4630 = vld [vmem:[#allocation5 + $0xbd8] sm:$0xf]
    %v4631 = vld [vmem:[#allocation5 + $0xbdc] sm:$0xf]
    %v4632 = vld [vmem:[#allocation5 + $0xbe0] sm:$0xf]
    %v4633 = vld [vmem:[#allocation5 + $0xbe4] sm:$0xf]
    %v4634 = vld [vmem:[#allocation5 + $0xbe8] sm:$0xf]
    %v4635 = vld [vmem:[#allocation5 + $0xbec] sm:$0xf]
    %v4636 = vld [vmem:[#allocation5 + $0xbf0] sm:$0xf]
    %v4637 = vld [vmem:[#allocation5 + $0xbf4] sm:$0xf]
    %v4638 = vld [vmem:[#allocation5 + $0xbf8] sm:$0xf]
    %v4639 = vld [vmem:[#allocation5 + $0xbfc] sm:$0xf]
    %v4640 = vld [vmem:[#allocation5 + $0xc00] sm:$0xf]
    %v4641 = vld [vmem:[#allocation5 + $0xc04] sm:$0xf]
    %v4642 = vld [vmem:[#allocation5 + $0xc08] sm:$0xf]
    %v4643 = vld [vmem:[#allocation5 + $0xc0c] sm:$0xf]
    %v4644 = vld [vmem:[#allocation5 + $0xc10] sm:$0xf]
    %v4645 = vld [vmem:[#allocation5 + $0xc14] sm:$0xf]
    %v4646 = vld [vmem:[#allocation5 + $0xc18] sm:$0xf]
    %v4647 = vld [vmem:[#allocation5 + $0xc1c] sm:$0xf]
    %v4648 = vld [vmem:[#allocation5 + $0xc20] sm:$0xf]
    %v4649 = vld [vmem:[#allocation5 + $0xc24] sm:$0xf]
    %v4650 = vld [vmem:[#allocation5 + $0xc28] sm:$0xf]
    %v4651 = vld [vmem:[#allocation5 + $0xc2c] sm:$0xf]
    %v4652 = vld [vmem:[#allocation5 + $0xc30] sm:$0xf]
    %v4653 = vld [vmem:[#allocation5 + $0xc34] sm:$0xf]
    %v4654 = vld [vmem:[#allocation5 + $0xc38] sm:$0xf]
    %v4655 = vld [vmem:[#allocation5 + $0xc3c] sm:$0xf]
    %v4656 = vld [vmem:[#allocation5 + $0xc40] sm:$0xf]
    %v4657 = vld [vmem:[#allocation5 + $0xc44] sm:$0xf]
    %v4658 = vld [vmem:[#allocation5 + $0xc48] sm:$0xf]
    %v4659 = vld [vmem:[#allocation5 + $0xc4c] sm:$0xf]
    %v4660 = vld [vmem:[#allocation5 + $0xc50] sm:$0xf]
    %v4661 = vld [vmem:[#allocation5 + $0xc54] sm:$0xf]
    %v4662 = vld [vmem:[#allocation5 + $0xc58] sm:$0xf]
    %v4663 = vld [vmem:[#allocation5 + $0xc5c] sm:$0xf]
    %v4664 = vld [vmem:[#allocation5 + $0xc60] sm:$0xf]
    %v4665 = vld [vmem:[#allocation5 + $0xc64] sm:$0xf]
    %v4666 = vld [vmem:[#allocation5 + $0xc68] sm:$0xf]
    %v4667 = vld [vmem:[#allocation5 + $0xc6c] sm:$0xf]
    %v4668 = vld [vmem:[#allocation5 + $0xc70] sm:$0xf]
    %v4669 = vld [vmem:[#allocation5 + $0xc74] sm:$0xf]
    %v4670 = vld [vmem:[#allocation5 + $0xc78] sm:$0xf]
    %v4671 = vld [vmem:[#allocation5 + $0xc7c] sm:$0xf]
    %v4672 = vld [vmem:[#allocation7 + $0xd] sm:$0x1]
    %v4673 = vperm.slane %v4672, 0
    %v4754 = vunpack.c.l.b16 %v4592
    %v4755 = vunpack.c.l.b16 %v4593
    %v4756 = vunpack.c.l.b16 %v4594
    %v4757 = vunpack.c.l.b16 %v4595
    %v4758 = vunpack.c.l.b16 %v4596
    %v4759 = vunpack.c.l.b16 %v4597
    %v4760 = vunpack.c.l.b16 %v4598
    %v4761 = vunpack.c.l.b16 %v4599
    %v4762 = vunpack.c.l.b16 %v4600
    %v4763 = vunpack.c.l.b16 %v4601
    %v4764 = vunpack.c.l.b16 %v4602
    %v4765 = vunpack.c.l.b16 %v4603
    %v4766 = vunpack.c.l.b16 %v4604
    %v4767 = vunpack.c.l.b16 %v4605
    %v4768 = vunpack.c.l.b16 %v4606
    %v4769 = vunpack.c.l.b16 %v4607
    %v4770 = vunpack.c.l.b16 %v4608
    %v4771 = vunpack.c.l.b16 %v4609
    %v4772 = vunpack.c.l.b16 %v4610
    %v4773 = vunpack.c.l.b16 %v4611
    %v4774 = vunpack.c.l.b16 %v4612
    %v4775 = vunpack.c.l.b16 %v4613
    %v4776 = vunpack.c.l.b16 %v4614
    %v4777 = vunpack.c.l.b16 %v4615
    %v4778 = vunpack.c.l.b16 %v4616
    %v4779 = vunpack.c.l.b16 %v4617
    %v4780 = vunpack.c.l.b16 %v4618
    %v4781 = vunpack.c.l.b16 %v4619
    %v4782 = vunpack.c.l.b16 %v4620
    %v4783 = vunpack.c.l.b16 %v4621
    %v4784 = vunpack.c.l.b16 %v4622
    %v4785 = vunpack.c.l.b16 %v4623
    %v4786 = vunpack.c.l.b16 %v4624
    %v4787 = vunpack.c.l.b16 %v4625
    %v4788 = vunpack.c.l.b16 %v4626
    %v4789 = vunpack.c.l.b16 %v4627
    %v4790 = vunpack.c.l.b16 %v4628
    %v4791 = vunpack.c.l.b16 %v4629
    %v4792 = vunpack.c.l.b16 %v4630
    %v4793 = vunpack.c.l.b16 %v4631
    %v4794 = vunpack.c.l.b16 %v4632
    %v4795 = vunpack.c.l.b16 %v4633
    %v4796 = vunpack.c.l.b16 %v4634
    %v4797 = vunpack.c.l.b16 %v4635
    %v4798 = vunpack.c.l.b16 %v4636
    %v4799 = vunpack.c.l.b16 %v4637
    %v4800 = vunpack.c.l.b16 %v4638
    %v4801 = vunpack.c.l.b16 %v4639
    %v4802 = vunpack.c.l.b16 %v4640
    %v4803 = vunpack.c.l.b16 %v4641
    %v4804 = vunpack.c.l.b16 %v4642
    %v4805 = vunpack.c.l.b16 %v4643
    %v4806 = vunpack.c.l.b16 %v4644
    %v4807 = vunpack.c.l.b16 %v4645
    %v4808 = vunpack.c.l.b16 %v4646
    %v4809 = vunpack.c.l.b16 %v4647
    %v4810 = vunpack.c.l.b16 %v4648
    %v4811 = vunpack.c.l.b16 %v4649
    %v4812 = vunpack.c.l.b16 %v4650
    %v4813 = vunpack.c.l.b16 %v4651
    %v4814 = vunpack.c.l.b16 %v4652
    %v4815 = vunpack.c.l.b16 %v4653
    %v4816 = vunpack.c.l.b16 %v4654
    %v4817 = vunpack.c.l.b16 %v4655
    %v4818 = vunpack.c.l.b16 %v4656
    %v4819 = vunpack.c.l.b16 %v4657
    %v4820 = vunpack.c.l.b16 %v4658
    %v4821 = vunpack.c.l.b16 %v4659
    %v4822 = vunpack.c.l.b16 %v4660
    %v4823 = vunpack.c.l.b16 %v4661
    %v4824 = vunpack.c.l.b16 %v4662
    %v4825 = vunpack.c.l.b16 %v4663
    %v4826 = vunpack.c.l.b16 %v4664
    %v4827 = vunpack.c.l.b16 %v4665
    %v4828 = vunpack.c.l.b16 %v4666
    %v4829 = vunpack.c.l.b16 %v4667
    %v4830 = vunpack.c.l.b16 %v4668
    %v4831 = vunpack.c.l.b16 %v4669
    %v4832 = vunpack.c.l.b16 %v4670
    %v4833 = vunpack.c.l.b16 %v4671
    %v4834 = vpack.c.b16 %v4755, %v4754
    %v4835 = vpack.c.b16 %v4757, %v4756
    %v4836 = vpack.c.b16 %v4759, %v4758
    %v4837 = vpack.c.b16 %v4761, %v4760
    %v4838 = vpack.c.b16 %v4763, %v4762
    %v4839 = vpack.c.b16 %v4765, %v4764
    %v4840 = vpack.c.b16 %v4767, %v4766
    %v4841 = vpack.c.b16 %v4769, %v4768
    %v4842 = vpack.c.b16 %v4771, %v4770
    %v4843 = vpack.c.b16 %v4773, %v4772
    %v4844 = vpack.c.b16 %v4775, %v4774
    %v4845 = vpack.c.b16 %v4777, %v4776
    %v4846 = vpack.c.b16 %v4779, %v4778
    %v4847 = vpack.c.b16 %v4781, %v4780
    %v4848 = vpack.c.b16 %v4783, %v4782
    %v4849 = vpack.c.b16 %v4785, %v4784
    %v4850 = vpack.c.b16 %v4787, %v4786
    %v4851 = vpack.c.b16 %v4789, %v4788
    %v4852 = vpack.c.b16 %v4791, %v4790
    %v4853 = vpack.c.b16 %v4793, %v4792
    %v4854 = vpack.c.b16 %v4795, %v4794
    %v4855 = vpack.c.b16 %v4797, %v4796
    %v4856 = vpack.c.b16 %v4799, %v4798
    %v4857 = vpack.c.b16 %v4801, %v4800
    %v4858 = vpack.c.b16 %v4803, %v4802
    %v4859 = vpack.c.b16 %v4805, %v4804
    %v4860 = vpack.c.b16 %v4807, %v4806
    %v4861 = vpack.c.b16 %v4809, %v4808
    %v4862 = vpack.c.b16 %v4811, %v4810
    %v4863 = vpack.c.b16 %v4813, %v4812
    %v4864 = vpack.c.b16 %v4815, %v4814
    %v4865 = vpack.c.b16 %v4817, %v4816
    %v4866 = vpack.c.b16 %v4819, %v4818
    %v4867 = vpack.c.b16 %v4821, %v4820
    %v4868 = vpack.c.b16 %v4823, %v4822
    %v4869 = vpack.c.b16 %v4825, %v4824
    %v4870 = vpack.c.b16 %v4827, %v4826
    %v4871 = vpack.c.b16 %v4829, %v4828
    %v4872 = vpack.c.b16 %v4831, %v4830
    %v4873 = vpack.c.b16 %v4833, %v4832
    %4914 = vmatpush.bf16.msra.mxu0 %v4841
    %4915 = vmatpush.bf16.msra.mxu0 %v4840
    %4916 = vmatpush.bf16.msra.mxu0 %v4839
    %4917 = vmatpush.bf16.msra.mxu0 %v4838
    %4918 = vmatpush.bf16.msra.mxu0 %v4837
    %4919 = vmatpush.bf16.msra.mxu0 %v4836
    %4920 = vmatpush.bf16.msra.mxu0 %v4835
    %4921 = vmatpush.bf16.msra.mxu0 %v4834
    %4922 = vmatmul.bf16.gmra.mxu0 %v4587
    %v4923 = vpop.f32.mrf.mxu0
    %v4924 = vadd.f32 %v4673, %v4923
    %v4925 = vpop.f32.mrf.mxu0
    %v4926 = vadd.f32 %v4673, %v4925
    %4927 = vdwg.mxu0
    %4928 = vmatpush.bf16.msra.mxu0 %v4849
    %4929 = vmatpush.bf16.msra.mxu0 %v4848
    %4930 = vmatpush.bf16.msra.mxu0 %v4847
    %4931 = vmatpush.bf16.msra.mxu0 %v4846
    %4932 = vmatpush.bf16.msra.mxu0 %v4845
    %4933 = vmatpush.bf16.msra.mxu0 %v4844
    %4934 = vmatpush.bf16.msra.mxu0 %v4843
    %4935 = vmatpush.bf16.msra.mxu0 %v4842
    %4936 = vmatmul.bf16.gmra.mxu0 %v4588
    %v4937 = vpop.f32.mrf.mxu0
    %v4938 = vadd.f32 %v4924, %v4937
    %v4939 = vpop.f32.mrf.mxu0
    %v4940 = vadd.f32 %v4926, %v4939
    %4941 = vdwg.mxu0
    %4942 = vmatpush.bf16.msra.mxu0 %v4857
    %4943 = vmatpush.bf16.msra.mxu0 %v4856
    %4944 = vmatpush.bf16.msra.mxu0 %v4855
    %4945 = vmatpush.bf16.msra.mxu0 %v4854
    %4946 = vmatpush.bf16.msra.mxu0 %v4853
    %4947 = vmatpush.bf16.msra.mxu0 %v4852
    %4948 = vmatpush.bf16.msra.mxu0 %v4851
    %4949 = vmatpush.bf16.msra.mxu0 %v4850
    %4950 = vmatmul.bf16.gmra.mxu0 %v4589
    %v4951 = vpop.f32.mrf.mxu0
    %v4952 = vadd.f32 %v4938, %v4951
    %v4953 = vpop.f32.mrf.mxu0
    %v4954 = vadd.f32 %v4940, %v4953
    %4955 = vdwg.mxu0
    %4956 = vmatpush.bf16.msra.mxu0 %v4865
    %4957 = vmatpush.bf16.msra.mxu0 %v4864
    %4958 = vmatpush.bf16.msra.mxu0 %v4863
    %4959 = vmatpush.bf16.msra.mxu0 %v4862
    %4960 = vmatpush.bf16.msra.mxu0 %v4861
    %4961 = vmatpush.bf16.msra.mxu0 %v4860
    %4962 = vmatpush.bf16.msra.mxu0 %v4859
    %4963 = vmatpush.bf16.msra.mxu0 %v4858
    %4964 = vmatmul.bf16.gmra.mxu0 %v4590
    %v4965 = vpop.f32.mrf.mxu0
    %v4966 = vadd.f32 %v4952, %v4965
    %v4967 = vpop.f32.mrf.mxu0
    %v4968 = vadd.f32 %v4954, %v4967
    %4969 = vdwg.mxu0
    %4970 = vmatpush.bf16.msra.mxu0 %v4873
    %4971 = vmatpush.bf16.msra.mxu0 %v4872
    %4972 = vmatpush.bf16.msra.mxu0 %v4871
    %4973 = vmatpush.bf16.msra.mxu0 %v4870
    %4974 = vmatpush.bf16.msra.mxu0 %v4869
    %4975 = vmatpush.bf16.msra.mxu0 %v4868
    %4976 = vmatpush.bf16.msra.mxu0 %v4867
    %4977 = vmatpush.bf16.msra.mxu0 %v4866
    %4978 = vmatmul.bf16.gmra.mxu0 %v4591
    %v4979 = vpop.f32.mrf.mxu0
    %v4980 = vadd.f32 %v4966, %v4979
    %v4981 = vpop.f32.mrf.mxu0
    %v4982 = vadd.f32 %v4968, %v4981
    %4983 = vdwg.mxu0
    %v4984 = vmax.f32 %v4980, 0.0
    %v4985 = vmax.f32 %v4982, 0.0
    %v4986 = vadd.f32 %v4984, %v3685
    %v4987 = vadd.f32 %v4985, %v3686
    %v4990 = vrot.slane %v4986, 2
    %v4991 = vrot.slane %v4986, 4
    %v4992 = vrot.slane %v4986, 6
    %v4993 = vrot.slane %v4987, 2
    %v4994 = vrot.slane %v4987, 4
    %v4995 = vrot.slane %v4987, 6
    %v5002 = vsel %vm2141, %v4986, -inf
    %v5003 = vrot.slane %v5002, 4
    %v5004 = vmax.f32 %v5002, %v5003
    %v5005 = vrot.slane %v5004, 2
    %v5006 = vmax.f32 %v5004, %v5005
    %v5007 = vrot.slane %v5006, 1
    %v5008 = vmax.f32 %v5006, %v5007
    %v5009 = vsel %vm2141, %v4990, -inf
    %v5010 = vrot.slane %v5009, 4
    %v5011 = vmax.f32 %v5009, %v5010
    %v5012 = vrot.slane %v5011, 2
    %v5013 = vmax.f32 %v5011, %v5012
    %v5014 = vrot.slane %v5013, 1
    %v5015 = vmax.f32 %v5013, %v5014
    %v5016 = vsel %vm2141, %v4991, -inf
    %v5017 = vrot.slane %v5016, 4
    %v5018 = vmax.f32 %v5016, %v5017
    %v5019 = vrot.slane %v5018, 2
    %v5020 = vmax.f32 %v5018, %v5019
    %v5021 = vrot.slane %v5020, 1
    %v5022 = vmax.f32 %v5020, %v5021
    %v5023 = vsel %vm2141, %v4992, -inf
    %v5024 = vrot.slane %v5023, 4
    %v5025 = vmax.f32 %v5023, %v5024
    %v5026 = vrot.slane %v5025, 2
    %v5027 = vmax.f32 %v5025, %v5026
    %v5028 = vrot.slane %v5027, 1
    %v5029 = vmax.f32 %v5027, %v5028
    %v5030 = vsel %vm2141, %v4987, -inf
    %v5031 = vrot.slane %v5030, 4
    %v5032 = vmax.f32 %v5030, %v5031
    %v5033 = vrot.slane %v5032, 2
    %v5034 = vmax.f32 %v5032, %v5033
    %v5035 = vrot.slane %v5034, 1
    %v5036 = vmax.f32 %v5034, %v5035
    %v5037 = vsel %vm2141, %v4993, -inf
    %v5038 = vrot.slane %v5037, 4
    %v5039 = vmax.f32 %v5037, %v5038
    %v5040 = vrot.slane %v5039, 2
    %v5041 = vmax.f32 %v5039, %v5040
    %v5042 = vrot.slane %v5041, 1
    %v5043 = vmax.f32 %v5041, %v5042
    %v5044 = vsel %vm2141, %v4994, -inf
    %v5045 = vrot.slane %v5044, 4
    %v5046 = vmax.f32 %v5044, %v5045
    %v5047 = vrot.slane %v5046, 2
    %v5048 = vmax.f32 %v5046, %v5047
    %v5049 = vrot.slane %v5048, 1
    %v5050 = vmax.f32 %v5048, %v5049
    %v5051 = vsel %vm2141, %v4995, -inf
    %v5052 = vrot.slane %v5051, 4
    %v5053 = vmax.f32 %v5051, %v5052
    %v5054 = vrot.slane %v5053, 2
    %v5055 = vmax.f32 %v5053, %v5054
    %v5056 = vrot.slane %v5055, 1
    %v5057 = vmax.f32 %v5055, %v5056
    %v5060 = vsel %vm2310, %v5036, %v5008
    %v5064 = vsel %vm2310, %v5043, %v5015
    %v5068 = vsel %vm2310, %v5050, %v5022
    %v5072 = vsel %vm2310, %v5057, %v5029
    %v5074 = vpack.c.bf16 %v5060, %v5060
    %v5075 = vpack.c.bf16 %v5064, %v5064
    %v5076 = vpack.c.bf16 %v5068, %v5068
    %v5077 = vpack.c.bf16 %v5072, %v5072
    %v5078 = vld [vmem:[#allocation5 + $0xc80] sm:$0xf]
    %v5079 = vld [vmem:[#allocation5 + $0xc84] sm:$0xf]
    %v5080 = vld [vmem:[#allocation5 + $0xc88] sm:$0xf]
    %v5081 = vld [vmem:[#allocation5 + $0xc8c] sm:$0xf]
    %v5082 = vld [vmem:[#allocation5 + $0xc90] sm:$0xf]
    %v5083 = vld [vmem:[#allocation5 + $0xc94] sm:$0xf]
    %v5084 = vld [vmem:[#allocation5 + $0xc98] sm:$0xf]
    %v5085 = vld [vmem:[#allocation5 + $0xc9c] sm:$0xf]
    %v5086 = vld [vmem:[#allocation5 + $0xca0] sm:$0xf]
    %v5087 = vld [vmem:[#allocation5 + $0xca4] sm:$0xf]
    %v5088 = vld [vmem:[#allocation5 + $0xca8] sm:$0xf]
    %v5089 = vld [vmem:[#allocation5 + $0xcac] sm:$0xf]
    %v5090 = vld [vmem:[#allocation5 + $0xcb0] sm:$0xf]
    %v5091 = vld [vmem:[#allocation5 + $0xcb4] sm:$0xf]
    %v5092 = vld [vmem:[#allocation5 + $0xcb8] sm:$0xf]
    %v5093 = vld [vmem:[#allocation5 + $0xcbc] sm:$0xf]
    %v5094 = vld [vmem:[#allocation5 + $0xcc0] sm:$0xf]
    %v5095 = vld [vmem:[#allocation5 + $0xcc4] sm:$0xf]
    %v5096 = vld [vmem:[#allocation5 + $0xcc8] sm:$0xf]
    %v5097 = vld [vmem:[#allocation5 + $0xccc] sm:$0xf]
    %v5098 = vld [vmem:[#allocation5 + $0xcd0] sm:$0xf]
    %v5099 = vld [vmem:[#allocation5 + $0xcd4] sm:$0xf]
    %v5100 = vld [vmem:[#allocation5 + $0xcd8] sm:$0xf]
    %v5101 = vld [vmem:[#allocation5 + $0xcdc] sm:$0xf]
    %v5102 = vld [vmem:[#allocation5 + $0xce0] sm:$0xf]
    %v5103 = vld [vmem:[#allocation5 + $0xce4] sm:$0xf]
    %v5104 = vld [vmem:[#allocation5 + $0xce8] sm:$0xf]
    %v5105 = vld [vmem:[#allocation5 + $0xcec] sm:$0xf]
    %v5106 = vld [vmem:[#allocation5 + $0xcf0] sm:$0xf]
    %v5107 = vld [vmem:[#allocation5 + $0xcf4] sm:$0xf]
    %v5108 = vld [vmem:[#allocation5 + $0xcf8] sm:$0xf]
    %v5109 = vld [vmem:[#allocation5 + $0xcfc] sm:$0xf]
    %v5110 = vld [vmem:[#allocation5 + $0xd00] sm:$0xf]
    %v5111 = vld [vmem:[#allocation5 + $0xd04] sm:$0xf]
    %v5112 = vld [vmem:[#allocation5 + $0xd08] sm:$0xf]
    %v5113 = vld [vmem:[#allocation5 + $0xd0c] sm:$0xf]
    %v5114 = vld [vmem:[#allocation5 + $0xd10] sm:$0xf]
    %v5115 = vld [vmem:[#allocation5 + $0xd14] sm:$0xf]
    %v5116 = vld [vmem:[#allocation5 + $0xd18] sm:$0xf]
    %v5117 = vld [vmem:[#allocation5 + $0xd1c] sm:$0xf]
    %v5118 = vld [vmem:[#allocation5 + $0xd20] sm:$0xf]
    %v5119 = vld [vmem:[#allocation5 + $0xd24] sm:$0xf]
    %v5120 = vld [vmem:[#allocation5 + $0xd28] sm:$0xf]
    %v5121 = vld [vmem:[#allocation5 + $0xd2c] sm:$0xf]
    %v5122 = vld [vmem:[#allocation5 + $0xd30] sm:$0xf]
    %v5123 = vld [vmem:[#allocation5 + $0xd34] sm:$0xf]
    %v5124 = vld [vmem:[#allocation5 + $0xd38] sm:$0xf]
    %v5125 = vld [vmem:[#allocation5 + $0xd3c] sm:$0xf]
    %v5126 = vld [vmem:[#allocation5 + $0xd40] sm:$0xf]
    %v5127 = vld [vmem:[#allocation5 + $0xd44] sm:$0xf]
    %v5128 = vld [vmem:[#allocation5 + $0xd48] sm:$0xf]
    %v5129 = vld [vmem:[#allocation5 + $0xd4c] sm:$0xf]
    %v5130 = vld [vmem:[#allocation5 + $0xd50] sm:$0xf]
    %v5131 = vld [vmem:[#allocation5 + $0xd54] sm:$0xf]
    %v5132 = vld [vmem:[#allocation5 + $0xd58] sm:$0xf]
    %v5133 = vld [vmem:[#allocation5 + $0xd5c] sm:$0xf]
    %v5134 = vld [vmem:[#allocation5 + $0xd60] sm:$0xf]
    %v5135 = vld [vmem:[#allocation5 + $0xd64] sm:$0xf]
    %v5136 = vld [vmem:[#allocation5 + $0xd68] sm:$0xf]
    %v5137 = vld [vmem:[#allocation5 + $0xd6c] sm:$0xf]
    %v5138 = vld [vmem:[#allocation5 + $0xd70] sm:$0xf]
    %v5139 = vld [vmem:[#allocation5 + $0xd74] sm:$0xf]
    %v5140 = vld [vmem:[#allocation5 + $0xd78] sm:$0xf]
    %v5141 = vld [vmem:[#allocation5 + $0xd7c] sm:$0xf]
    %v5142 = vld [vmem:[#allocation7 + $0xe] sm:$0x1]
    %v5143 = vperm.slane %v5142, 0
    %v5208 = vunpack.c.l.b16 %v5078
    %v5209 = vunpack.c.l.b16 %v5079
    %v5210 = vunpack.c.l.b16 %v5080
    %v5211 = vunpack.c.l.b16 %v5081
    %v5212 = vunpack.c.l.b16 %v5082
    %v5213 = vunpack.c.l.b16 %v5083
    %v5214 = vunpack.c.l.b16 %v5084
    %v5215 = vunpack.c.l.b16 %v5085
    %v5216 = vunpack.c.l.b16 %v5086
    %v5217 = vunpack.c.l.b16 %v5087
    %v5218 = vunpack.c.l.b16 %v5088
    %v5219 = vunpack.c.l.b16 %v5089
    %v5220 = vunpack.c.l.b16 %v5090
    %v5221 = vunpack.c.l.b16 %v5091
    %v5222 = vunpack.c.l.b16 %v5092
    %v5223 = vunpack.c.l.b16 %v5093
    %v5224 = vunpack.c.l.b16 %v5094
    %v5225 = vunpack.c.l.b16 %v5095
    %v5226 = vunpack.c.l.b16 %v5096
    %v5227 = vunpack.c.l.b16 %v5097
    %v5228 = vunpack.c.l.b16 %v5098
    %v5229 = vunpack.c.l.b16 %v5099
    %v5230 = vunpack.c.l.b16 %v5100
    %v5231 = vunpack.c.l.b16 %v5101
    %v5232 = vunpack.c.l.b16 %v5102
    %v5233 = vunpack.c.l.b16 %v5103
    %v5234 = vunpack.c.l.b16 %v5104
    %v5235 = vunpack.c.l.b16 %v5105
    %v5236 = vunpack.c.l.b16 %v5106
    %v5237 = vunpack.c.l.b16 %v5107
    %v5238 = vunpack.c.l.b16 %v5108
    %v5239 = vunpack.c.l.b16 %v5109
    %v5240 = vunpack.c.l.b16 %v5110
    %v5241 = vunpack.c.l.b16 %v5111
    %v5242 = vunpack.c.l.b16 %v5112
    %v5243 = vunpack.c.l.b16 %v5113
    %v5244 = vunpack.c.l.b16 %v5114
    %v5245 = vunpack.c.l.b16 %v5115
    %v5246 = vunpack.c.l.b16 %v5116
    %v5247 = vunpack.c.l.b16 %v5117
    %v5248 = vunpack.c.l.b16 %v5118
    %v5249 = vunpack.c.l.b16 %v5119
    %v5250 = vunpack.c.l.b16 %v5120
    %v5251 = vunpack.c.l.b16 %v5121
    %v5252 = vunpack.c.l.b16 %v5122
    %v5253 = vunpack.c.l.b16 %v5123
    %v5254 = vunpack.c.l.b16 %v5124
    %v5255 = vunpack.c.l.b16 %v5125
    %v5256 = vunpack.c.l.b16 %v5126
    %v5257 = vunpack.c.l.b16 %v5127
    %v5258 = vunpack.c.l.b16 %v5128
    %v5259 = vunpack.c.l.b16 %v5129
    %v5260 = vunpack.c.l.b16 %v5130
    %v5261 = vunpack.c.l.b16 %v5131
    %v5262 = vunpack.c.l.b16 %v5132
    %v5263 = vunpack.c.l.b16 %v5133
    %v5264 = vunpack.c.l.b16 %v5134
    %v5265 = vunpack.c.l.b16 %v5135
    %v5266 = vunpack.c.l.b16 %v5136
    %v5267 = vunpack.c.l.b16 %v5137
    %v5268 = vunpack.c.l.b16 %v5138
    %v5269 = vunpack.c.l.b16 %v5139
    %v5270 = vunpack.c.l.b16 %v5140
    %v5271 = vunpack.c.l.b16 %v5141
    %v5272 = vpack.c.b16 %v5209, %v5208
    %v5273 = vpack.c.b16 %v5211, %v5210
    %v5274 = vpack.c.b16 %v5213, %v5212
    %v5275 = vpack.c.b16 %v5215, %v5214
    %v5276 = vpack.c.b16 %v5217, %v5216
    %v5277 = vpack.c.b16 %v5219, %v5218
    %v5278 = vpack.c.b16 %v5221, %v5220
    %v5279 = vpack.c.b16 %v5223, %v5222
    %v5280 = vpack.c.b16 %v5225, %v5224
    %v5281 = vpack.c.b16 %v5227, %v5226
    %v5282 = vpack.c.b16 %v5229, %v5228
    %v5283 = vpack.c.b16 %v5231, %v5230
    %v5284 = vpack.c.b16 %v5233, %v5232
    %v5285 = vpack.c.b16 %v5235, %v5234
    %v5286 = vpack.c.b16 %v5237, %v5236
    %v5287 = vpack.c.b16 %v5239, %v5238
    %v5288 = vpack.c.b16 %v5241, %v5240
    %v5289 = vpack.c.b16 %v5243, %v5242
    %v5290 = vpack.c.b16 %v5245, %v5244
    %v5291 = vpack.c.b16 %v5247, %v5246
    %v5292 = vpack.c.b16 %v5249, %v5248
    %v5293 = vpack.c.b16 %v5251, %v5250
    %v5294 = vpack.c.b16 %v5253, %v5252
    %v5295 = vpack.c.b16 %v5255, %v5254
    %v5296 = vpack.c.b16 %v5257, %v5256
    %v5297 = vpack.c.b16 %v5259, %v5258
    %v5298 = vpack.c.b16 %v5261, %v5260
    %v5299 = vpack.c.b16 %v5263, %v5262
    %v5300 = vpack.c.b16 %v5265, %v5264
    %v5301 = vpack.c.b16 %v5267, %v5266
    %v5302 = vpack.c.b16 %v5269, %v5268
    %v5303 = vpack.c.b16 %v5271, %v5270
    %5336 = vmatpush.bf16.msra.mxu0 %v5279
    %5337 = vmatpush.bf16.msra.mxu0 %v5278
    %5338 = vmatpush.bf16.msra.mxu0 %v5277
    %5339 = vmatpush.bf16.msra.mxu0 %v5276
    %5340 = vmatpush.bf16.msra.mxu0 %v5275
    %5341 = vmatpush.bf16.msra.mxu0 %v5274
    %5342 = vmatpush.bf16.msra.mxu0 %v5273
    %5343 = vmatpush.bf16.msra.mxu0 %v5272
    %5344 = vmatmul.bf16.gmra.mxu0 %v5074
    %v5345 = vpop.f32.mrf.mxu0
    %v5346 = vadd.f32 %v5143, %v5345
    %v5347 = vpop.f32.mrf.mxu0
    %5348 = vdwg.mxu0
    %5349 = vmatpush.bf16.msra.mxu0 %v5287
    %5350 = vmatpush.bf16.msra.mxu0 %v5286
    %5351 = vmatpush.bf16.msra.mxu0 %v5285
    %5352 = vmatpush.bf16.msra.mxu0 %v5284
    %5353 = vmatpush.bf16.msra.mxu0 %v5283
    %5354 = vmatpush.bf16.msra.mxu0 %v5282
    %5355 = vmatpush.bf16.msra.mxu0 %v5281
    %5356 = vmatpush.bf16.msra.mxu0 %v5280
    %5357 = vmatmul.bf16.gmra.mxu0 %v5075
    %v5358 = vpop.f32.mrf.mxu0
    %v5359 = vadd.f32 %v5346, %v5358
    %v5360 = vpop.f32.mrf.mxu0
    %5361 = vdwg.mxu0
    %5362 = vmatpush.bf16.msra.mxu0 %v5295
    %5363 = vmatpush.bf16.msra.mxu0 %v5294
    %5364 = vmatpush.bf16.msra.mxu0 %v5293
    %5365 = vmatpush.bf16.msra.mxu0 %v5292
    %5366 = vmatpush.bf16.msra.mxu0 %v5291
    %5367 = vmatpush.bf16.msra.mxu0 %v5290
    %5368 = vmatpush.bf16.msra.mxu0 %v5289
    %5369 = vmatpush.bf16.msra.mxu0 %v5288
    %5370 = vmatmul.bf16.gmra.mxu0 %v5076
    %v5371 = vpop.f32.mrf.mxu0
    %v5372 = vadd.f32 %v5359, %v5371
    %v5373 = vpop.f32.mrf.mxu0
    %5374 = vdwg.mxu0
    %5375 = vmatpush.bf16.msra.mxu0 %v5303
    %5376 = vmatpush.bf16.msra.mxu0 %v5302
    %5377 = vmatpush.bf16.msra.mxu0 %v5301
    %5378 = vmatpush.bf16.msra.mxu0 %v5300
    %5379 = vmatpush.bf16.msra.mxu0 %v5299
    %5380 = vmatpush.bf16.msra.mxu0 %v5298
    %5381 = vmatpush.bf16.msra.mxu0 %v5297
    %5382 = vmatpush.bf16.msra.mxu0 %v5296
    %5383 = vmatmul.bf16.gmra.mxu0 %v5077
    %v5384 = vpop.f32.mrf.mxu0
    %v5385 = vadd.f32 %v5372, %v5384
    %v5386 = vpop.f32.mrf.mxu0
    %5387 = vdwg.mxu0
    %v5388 = vmax.f32 %v5385, 0.0
    %v5389 = vpack.c.bf16 %v5388, %v5388
    %v5390 = vld [vmem:[#allocation5 + $0xd80] sm:$0xf]
    %v5391 = vld [vmem:[#allocation5 + $0xd84] sm:$0xf]
    %v5392 = vld [vmem:[#allocation5 + $0xd88] sm:$0xf]
    %v5393 = vld [vmem:[#allocation5 + $0xd8c] sm:$0xf]
    %v5394 = vld [vmem:[#allocation5 + $0xd90] sm:$0xf]
    %v5395 = vld [vmem:[#allocation5 + $0xd94] sm:$0xf]
    %v5396 = vld [vmem:[#allocation5 + $0xd98] sm:$0xf]
    %v5397 = vld [vmem:[#allocation5 + $0xd9c] sm:$0xf]
    %v5398 = vld [vmem:[#allocation5 + $0xda0] sm:$0xf]
    %v5399 = vld [vmem:[#allocation5 + $0xda4] sm:$0xf]
    %v5400 = vld [vmem:[#allocation5 + $0xda8] sm:$0xf]
    %v5401 = vld [vmem:[#allocation5 + $0xdac] sm:$0xf]
    %v5402 = vld [vmem:[#allocation5 + $0xdb0] sm:$0xf]
    %v5403 = vld [vmem:[#allocation5 + $0xdb4] sm:$0xf]
    %v5404 = vld [vmem:[#allocation5 + $0xdb8] sm:$0xf]
    %v5405 = vld [vmem:[#allocation5 + $0xdbc] sm:$0xf]
    %v5406 = vld [vmem:[#allocation7 + $0xf] sm:$0x1]
    %v5407 = vperm.slane %v5406, 0
    %v5424 = vunpack.c.l.b16 %v5390
    %v5425 = vunpack.c.l.b16 %v5391
    %v5426 = vunpack.c.l.b16 %v5392
    %v5427 = vunpack.c.l.b16 %v5393
    %v5428 = vunpack.c.l.b16 %v5394
    %v5429 = vunpack.c.l.b16 %v5395
    %v5430 = vunpack.c.l.b16 %v5396
    %v5431 = vunpack.c.l.b16 %v5397
    %v5432 = vunpack.c.l.b16 %v5398
    %v5433 = vunpack.c.l.b16 %v5399
    %v5434 = vunpack.c.l.b16 %v5400
    %v5435 = vunpack.c.l.b16 %v5401
    %v5436 = vunpack.c.l.b16 %v5402
    %v5437 = vunpack.c.l.b16 %v5403
    %v5438 = vunpack.c.l.b16 %v5404
    %v5439 = vunpack.c.l.b16 %v5405
    %v5440 = vpack.c.b16 %v5425, %v5424
    %v5441 = vpack.c.b16 %v5427, %v5426
    %v5442 = vpack.c.b16 %v5429, %v5428
    %v5443 = vpack.c.b16 %v5431, %v5430
    %v5444 = vpack.c.b16 %v5433, %v5432
    %v5445 = vpack.c.b16 %v5435, %v5434
    %v5446 = vpack.c.b16 %v5437, %v5436
    %v5447 = vpack.c.b16 %v5439, %v5438
    %5456 = vmatpush.bf16.msra.mxu0 %v5447
    %5457 = vmatpush.bf16.msra.mxu0 %v5446
    %5458 = vmatpush.bf16.msra.mxu0 %v5445
    %5459 = vmatpush.bf16.msra.mxu0 %v5444
    %5460 = vmatpush.bf16.msra.mxu0 %v5443
    %5461 = vmatpush.bf16.msra.mxu0 %v5442
    %5462 = vmatpush.bf16.msra.mxu0 %v5441
    %5463 = vmatpush.bf16.msra.mxu0 %v5440
    %5464 = vmatmul.bf16.gmra.mxu0 %v5389
    %v5465 = vpop.f32.mrf.mxu0
    %v5466 = vadd.f32 %v5407, %v5465
    %v5467 = vpop.f32.mrf.mxu0
    %5468 = vdwg.mxu0
    %v5469 = vmax.f32 %v5466, 0.0
    %v5470 = vpack.c.bf16 %v5469, %v5469
    %v5471 = vld [vmem:[#allocation5 + $0xdc0] sm:$0xf]
    %v5472 = vld [vmem:[#allocation5 + $0xdc4] sm:$0xf]
    %v5473 = vld [vmem:[#allocation5 + $0xdc8] sm:$0xf]
    %v5474 = vld [vmem:[#allocation5 + $0xdcc] sm:$0xf]
    %v5475 = vld [vmem:[#allocation5 + $0xdd0] sm:$0xf]
    %v5476 = vld [vmem:[#allocation5 + $0xdd4] sm:$0xf]
    %v5477 = vld [vmem:[#allocation5 + $0xdd8] sm:$0xf]
    %v5478 = vld [vmem:[#allocation5 + $0xddc] sm:$0xf]
    %v5479 = vld [vmem:[#allocation5 + $0xde0] sm:$0xf]
    %v5480 = vld [vmem:[#allocation5 + $0xde4] sm:$0xf]
    %v5481 = vld [vmem:[#allocation5 + $0xde8] sm:$0xf]
    %v5482 = vld [vmem:[#allocation5 + $0xdec] sm:$0xf]
    %v5483 = vld [vmem:[#allocation5 + $0xdf0] sm:$0xf]
    %v5484 = vld [vmem:[#allocation5 + $0xdf4] sm:$0xf]
    %v5485 = vld [vmem:[#allocation5 + $0xdf8] sm:$0xf]
    %v5486 = vld [vmem:[#allocation5 + $0xdfc] sm:$0xf]
    %v5487 = vld [vmem:[#allocation7 + $0x10] sm:$0x1]
    %v5488 = vperm.slane %v5487, 0
    %v5505 = vunpack.c.l.b16 %v5471
    %v5506 = vunpack.c.l.b16 %v5472
    %v5507 = vunpack.c.l.b16 %v5473
    %v5508 = vunpack.c.l.b16 %v5474
    %v5509 = vunpack.c.l.b16 %v5475
    %v5510 = vunpack.c.l.b16 %v5476
    %v5511 = vunpack.c.l.b16 %v5477
    %v5512 = vunpack.c.l.b16 %v5478
    %v5513 = vunpack.c.l.b16 %v5479
    %v5514 = vunpack.c.l.b16 %v5480
    %v5515 = vunpack.c.l.b16 %v5481
    %v5516 = vunpack.c.l.b16 %v5482
    %v5517 = vunpack.c.l.b16 %v5483
    %v5518 = vunpack.c.l.b16 %v5484
    %v5519 = vunpack.c.l.b16 %v5485
    %v5520 = vunpack.c.l.b16 %v5486
    %v5521 = vpack.c.b16 %v5506, %v5505
    %v5522 = vpack.c.b16 %v5508, %v5507
    %v5523 = vpack.c.b16 %v5510, %v5509
    %v5524 = vpack.c.b16 %v5512, %v5511
    %v5525 = vpack.c.b16 %v5514, %v5513
    %v5526 = vpack.c.b16 %v5516, %v5515
    %v5527 = vpack.c.b16 %v5518, %v5517
    %v5528 = vpack.c.b16 %v5520, %v5519
    %5537 = vmatpush.bf16.msra.mxu0 %v5528
    %5538 = vmatpush.bf16.msra.mxu0 %v5527
    %5539 = vmatpush.bf16.msra.mxu0 %v5526
    %5540 = vmatpush.bf16.msra.mxu0 %v5525
    %5541 = vmatpush.bf16.msra.mxu0 %v5524
    %5542 = vmatpush.bf16.msra.mxu0 %v5523
    %5543 = vmatpush.bf16.msra.mxu0 %v5522
    %5544 = vmatpush.bf16.msra.mxu0 %v5521
    %5545 = vmatmul.bf16.gmra.mxu0 %v5470
    %v5546 = vpop.f32.mrf.mxu0
    %v5547 = vadd.f32 %v5488, %v5546
    %v5548 = vpop.f32.mrf.mxu0
    %5549 = vdwg.mxu0
    %v5550 = vmax.f32 %v5547, 0.0
    %5551 = vst [vmem:[#allocation8] sm:$0x3] %v5550
    // Predicated region
    $region26: #{tpu_custom_call.1} parent=1 // pred_check
      _
    $region27: #{tpu_custom_call.1} parent=1 // pred_check_branch
      %5553 = sbr.rel (0) target = $region29
    $region28: #{tpu_custom_call.1} parent=1 // pred_region
      %5555 = vsyncadd [#allocation4], 0
      %s5557 = sshll.u32 [#allocation8], 4
      %s5558 = int_to_ptr.vmem [resolvable:$true] %s5557
      %s5559 = sshll.u32 %s3, 4
      %s5560 = int_to_ptr.hbm [resolvable:$true] %s5559
      %5562 = dma.vmem_to_hbm [thread:$0]  %s5558, 32, %s5560, [#allocation4]
    $region29: #{tpu_custom_call.1} parent=1 // pred_fallthru
      _
    // Predicated region
    $region30: #{tpu_custom_call.1} parent=1 // pred_check
      _
    $region31: #{tpu_custom_call.1} parent=1 // pred_check_branch
      %5564 = sbr.rel (0) target = $region33
    $region32: #{tpu_custom_call.1} parent=1 // pred_region
      %5566 = dma.done [#allocation4], 32
    $region33: #{tpu_custom_call.1} parent=1 // pred_fallthru
      _
    %5567 = vsyncpa [#allocation3], 1
    %5568 = vsyncpa [#allocation6], 1
    %5569 = vsyncpa [#allocation4], 1

</llo_original>
